<compile_context>
chip_gen: v5e
topology: v5e:2x2
jax: 0.10.0
libtpu: 0.0.40
codegen_flags: <defaults>
</compile_context>

<pallas_src>
import functools

import jax
import jax.numpy as jnp
from jax.experimental import pallas as pl
from jax.experimental.pallas import tpu as pltpu


def _round_up(x, m):
    return ((x + m - 1) // m) * m


def _pick_tm(B, tm):
    """Batch tile: multiple of 16 when possible, >=2 grid steps when B allows,
    never larger than the (8-rounded) batch, capped at `tm`."""
    half = _round_up(-(-B // 2), 16)          # ceil(B/2) rounded to 16
    return max(8, min(tm, half, _round_up(B, 8)))


def _neumf_kernel(x_ref, y_ref,
                  w1_ref, b1_ref,
                  w2_ref, b2_ref,
                  w3n_ref, wny_ref, bt_ref,
                  o_ref):
    # fc1: bf16 MXU operands, f32 accumulation; the f32->bf16 cast of the input
    # tile is VPU work hidden under the MXU.
    x = x_ref[...].astype(jnp.bfloat16)
    h = jnp.dot(x, w1_ref[...], preferred_element_type=jnp.float32)
    h = jnp.maximum(h + b1_ref[...], 0.0).astype(jnp.bfloat16)
    # fc2 + ReLU; keep the result in f32 for the final reductions.
    h = jnp.dot(h, w2_ref[...], preferred_element_type=jnp.float32)
    h = jnp.maximum(h + b2_ref[...], 0.0)
    # Folded fc3 + NeuMF head (exact algebra, done in f32):
    #   out = y @ Wn[:400] + h2 @ (W3 @ Wn[400:]) + (bn + b3 @ Wn[400:])
    # Both N=1 projections are VPU multiplies + XLU lane reductions; an
    # (M,K)x(K,1) MXU matmul would waste the 256-wide MXU.
    y_proj = jnp.sum(y_ref[...] * wny_ref[...], axis=-1, keepdims=True)
    h_proj = jnp.sum(h * w3n_ref[...], axis=-1, keepdims=True)
    o_ref[...] = jnp.maximum(y_proj + h_proj + bt_ref[0, 0], 0.0)


def prepare_params(params):
    """One-time prep: bf16 MXU weights, f32 biases, fc3/NeuMF fold, SMEM scalar."""
    w1, b1, w2, b2, w3, b3, wn, bn = params
    wn_y = wn[:400, :]                     # (400, 1) multiplies y
    wn_h = wn[400:, :]                     # (400, 1) multiplies the MLP output
    w3n = (w3 @ wn_h).reshape(1, 1024)     # fc3 folded into a single 1024-row
    b_total = (bn + b3 @ wn_h).reshape(1, 1)
    return (
        w1.astype(jnp.bfloat16), b1.reshape(1, -1).astype(jnp.float32),
        w2.astype(jnp.bfloat16), b2.reshape(1, -1).astype(jnp.float32),
        w3n.astype(jnp.float32),
        wn_y.reshape(1, 400).astype(jnp.float32),
        b_total.astype(jnp.float32),
    )


@functools.partial(jax.jit, static_argnames=("tm",))
def all_neumf_input_forward(x, y, prepared, *, tm=512):
    """x: [B, ...] flattening to 800 features; y: [B, 400] -> out [B, 1] (f32)."""
    B = x.shape[0]
    x2 = x.reshape(B, -1).astype(jnp.float32)
    y2 = y.astype(jnp.float32)
    assert x2.shape[1] == 800 and y2.shape[1] == 400

    TM = _pick_tm(B, tm)
    grid = (pl.cdiv(B, TM),)

    w1, b1, w2, b2, w3n, wny, bt = prepared

    const = lambda i: (0, 0)          # weights/biases resident across all steps
    batch = lambda i: (i, 0)          # activations tiled along batch

    mxu_flops = 2 * (800 * 1024 + 1024 * 1024)
    vpu_flops = 2 * (400 + 1024) + 8
    weight_bytes = (2 * (800 * 1024 + 1024 * 1024)
                    + 4 * (1024 + 1024 + 1024 + 400 + 1))
    cost = pl.CostEstimate(
        flops=(mxu_flops + vpu_flops) * B,
        transcendentals=0,
        bytes_accessed=weight_bytes + 4 * B * (800 + 400 + 1),
    )

    out = pl.pallas_call(
        _neumf_kernel,
        out_shape=jax.ShapeDtypeStruct((B, 1), jnp.float32),
        grid=grid,
        in_specs=[
            pl.BlockSpec((TM, 800), batch),            # x tile (f32, cast in-kernel)
            pl.BlockSpec((TM, 400), batch),            # y tile (f32)
            pl.BlockSpec((800, 1024), const),          # w1 (bf16)
            pl.BlockSpec((1, 1024), const),            # b1 (f32)
            pl.BlockSpec((1024, 1024), const),         # w2 (bf16)
            pl.BlockSpec((1, 1024), const),            # b2 (f32)
            pl.BlockSpec((1, 1024), const),            # w3n = W3 @ Wn[400:] (f32)
            pl.BlockSpec((1, 400), const),             # wn_y = Wn[:400] (f32)
            pl.BlockSpec(memory_space=pltpu.MemorySpace.SMEM),  # b_total scalar
        ],
        out_specs=pl.BlockSpec((TM, 1), batch),
        compiler_params=pltpu.CompilerParams(
            dimension_semantics=("parallel",),
            vmem_limit_bytes=32 << 20,
        ),
        cost_estimate=cost,
    )(x2, y2, w1, b1, w2, b2, w3n, wny, bt)
    return out


def init_params(key):
    """Deterministic init matching the PyTorch module's shapes.

    Weights stored as [in, out] (transposed vs. torch's [out, in]); biases as
    [1, out] for clean lane-wise broadcast inside the kernel.
    """
    ks = jax.random.split(key, 8)

    def lin(kw, kb, fan_in, fan_out):
        bound = 1.0 / jnp.sqrt(fan_in)
        w = jax.random.uniform(kw, (fan_in, fan_out), jnp.float32, -bound, bound)
        b = jax.random.uniform(kb, (1, fan_out), jnp.float32, -bound, bound)
        return w, b

    w1, b1 = lin(ks[0], ks[1], 800, 1024)
    w2, b2 = lin(ks[2], ks[3], 1024, 1024)
    w3, b3 = lin(ks[4], ks[5], 1024, 400)
    wn, bn = lin(ks[6], ks[7], 800, 1)
    return (w1, b1, w2, b2, w3, b3, wn, bn)


if __name__ == "__main__":
    key = jax.random.PRNGKey(0)
    kp, kx, ky = jax.random.split(key, 3)

    params = init_params(kp)
    prepared = prepare_params(params)   # one-time: bf16 casts + fc3/NeuMF fold

    B = 8
    # x can be any [B, ...] that flattens to 800 features (mirrors x.flatten(1))
    x = jax.random.normal(kx, (B, 8, 100), jnp.float32)
    y = jax.random.normal(ky, (B, 400), jnp.float32)

    out = all_neumf_input_forward(x, y, prepared)
    out = jax.block_until_ready(out)

    # Pure-JAX f32 reference of the original module's math (kernel uses bf16 MXU
    # operands for fc1/fc2 with f32 accumulation -> loosened tolerance).
    w1, b1, w2, b2, w3, b3, wn, bn = params
    xf = x.reshape(B, -1)
    h = jnp.maximum(xf @ w1 + b1, 0.0)
    h = jnp.maximum(h @ w2 + b2, 0.0)
    h = h @ w3 + b3
    ref = jnp.maximum(jnp.concatenate([y, h], axis=1) @ wn + bn, 0.0)
    assert out.shape == (B, 1)
    assert jnp.allclose(out, ref, atol=5e-2, rtol=5e-2), (out, ref)

    print("KERNEL_OK")
</pallas_src>

<mosaic_0001>
module attributes {stable_mosaic.version = 11 : i64} {
  func.func @_neumf_kernel(%arg0: i32, %arg1: memref<8x800xf32, #tpu.memory_space<vmem>>, %arg2: memref<8x400xf32, #tpu.memory_space<vmem>>, %arg3: memref<800x1024xbf16, #tpu.memory_space<vmem>>, %arg4: memref<1x1024xf32, #tpu.memory_space<vmem>>, %arg5: memref<1024x1024xbf16, #tpu.memory_space<vmem>>, %arg6: memref<1x1024xf32, #tpu.memory_space<vmem>>, %arg7: memref<1x1024xf32, #tpu.memory_space<vmem>>, %arg8: memref<1x400xf32, #tpu.memory_space<vmem>>, %arg9: memref<1x1xf32, #tpu.memory_space<smem>>, %arg10: memref<8x1xf32, #tpu.memory_space<vmem>>) attributes {dimension_semantics = [#tpu.dimension_semantics<parallel>], iteration_bounds = array<i64: 1>, scalar_prefetch = 0 : i64, scratch_operands = 0 : i64, tpu.core_type = #tpu.core_type<tc>, window_params = [{transform_indices = @transform_0, window_bounds = array<i64: 8, 800>}, {transform_indices = @transform_1, window_bounds = array<i64: 8, 400>}, {pipeline_mode = #tpu.pipeline_mode<synchronous>, transform_indices = @transform_2, window_bounds = array<i64: 800, 1024>}, {pipeline_mode = #tpu.pipeline_mode<synchronous>, transform_indices = @transform_3, window_bounds = array<i64: 1, 1024>}, {pipeline_mode = #tpu.pipeline_mode<synchronous>, transform_indices = @transform_4, window_bounds = array<i64: 1024, 1024>}, {pipeline_mode = #tpu.pipeline_mode<synchronous>, transform_indices = @transform_5, window_bounds = array<i64: 1, 1024>}, {pipeline_mode = #tpu.pipeline_mode<synchronous>, transform_indices = @transform_6, window_bounds = array<i64: 1, 1024>}, {pipeline_mode = #tpu.pipeline_mode<synchronous>, transform_indices = @transform_7, window_bounds = array<i64: 1, 400>}, {transform_indices = @transform_8, window_bounds = array<i64: 1, 1>}, {transform_indices = @transform_9, window_bounds = array<i64: 8, 1>}]} {
    %c0 = arith.constant 0 : index
    %c0_0 = arith.constant 0 : index
    %0 = vector.load %arg1[%c0, %c0_0] : memref<8x800xf32, #tpu.memory_space<vmem>>, vector<8x800xf32>
    %1 = arith.truncf %0 : vector<8x800xf32> to vector<8x800xbf16>
    %c0_1 = arith.constant 0 : index
    %c0_2 = arith.constant 0 : index
    %2 = vector.load %arg3[%c0_1, %c0_2] : memref<800x1024xbf16, #tpu.memory_space<vmem>>, vector<800x1024xbf16>
    %cst = arith.constant dense<0.000000e+00> : vector<8x1024xf32>
    %3 = tpu.matmul %1, %2, %cst {dimension_numbers = #tpu.dot_dimension_numbers<[1], [0], [0], [1], [0, 0, 1, 1], [], []>} : vector<8x800xbf16>, vector<800x1024xbf16>, vector<8x1024xf32> -> vector<8x1024xf32>
    %c0_3 = arith.constant 0 : index
    %c0_4 = arith.constant 0 : index
    %4 = vector.load %arg4[%c0_3, %c0_4] : memref<1x1024xf32, #tpu.memory_space<vmem>>, vector<1x1024xf32>
    %5 = vector.broadcast %4 : vector<1x1024xf32> to vector<8x1024xf32>
    %6 = arith.addf %3, %5 : vector<8x1024xf32>
    %cst_5 = arith.constant 0.000000e+00 : f32
    %7 = vector.broadcast %cst_5 : f32 to vector<8x1024xf32>
    %8 = arith.maximumf %6, %7 : vector<8x1024xf32>
    %9 = arith.truncf %8 : vector<8x1024xf32> to vector<8x1024xbf16>
    %c0_6 = arith.constant 0 : index
    %c0_7 = arith.constant 0 : index
    %10 = vector.load %arg5[%c0_6, %c0_7] : memref<1024x1024xbf16, #tpu.memory_space<vmem>>, vector<1024x1024xbf16>
    %cst_8 = arith.constant dense<0.000000e+00> : vector<8x1024xf32>
    %11 = tpu.matmul %9, %10, %cst_8 {dimension_numbers = #tpu.dot_dimension_numbers<[1], [0], [0], [1], [0, 0, 1, 1], [], []>} : vector<8x1024xbf16>, vector<1024x1024xbf16>, vector<8x1024xf32> -> vector<8x1024xf32>
    %c0_9 = arith.constant 0 : index
    %c0_10 = arith.constant 0 : index
    %12 = vector.load %arg6[%c0_9, %c0_10] : memref<1x1024xf32, #tpu.memory_space<vmem>>, vector<1x1024xf32>
    %13 = vector.broadcast %12 : vector<1x1024xf32> to vector<8x1024xf32>
    %14 = arith.addf %11, %13 : vector<8x1024xf32>
    %cst_11 = arith.constant 0.000000e+00 : f32
    %15 = vector.broadcast %cst_11 : f32 to vector<8x1024xf32>
    %16 = arith.maximumf %14, %15 : vector<8x1024xf32>
    %c0_12 = arith.constant 0 : index
    %c0_13 = arith.constant 0 : index
    %17 = vector.load %arg2[%c0_12, %c0_13] : memref<8x400xf32, #tpu.memory_space<vmem>>, vector<8x400xf32>
    %c0_14 = arith.constant 0 : index
    %c0_15 = arith.constant 0 : index
    %18 = vector.load %arg8[%c0_14, %c0_15] : memref<1x400xf32, #tpu.memory_space<vmem>>, vector<1x400xf32>
    %19 = vector.broadcast %18 : vector<1x400xf32> to vector<8x400xf32>
    %20 = arith.mulf %17, %19 : vector<8x400xf32>
    %cst_16 = arith.constant dense<0.000000e+00> : vector<8xf32>
    %21 = vector.multi_reduction <add>, %20, %cst_16 [1] : vector<8x400xf32> to vector<8xf32>
    %22 = vector.shape_cast %21 : vector<8xf32> to vector<8x1xf32>
    %c0_17 = arith.constant 0 : index
    %c0_18 = arith.constant 0 : index
    %23 = vector.load %arg7[%c0_17, %c0_18] : memref<1x1024xf32, #tpu.memory_space<vmem>>, vector<1x1024xf32>
    %24 = vector.broadcast %23 : vector<1x1024xf32> to vector<8x1024xf32>
    %25 = arith.mulf %16, %24 : vector<8x1024xf32>
    %cst_19 = arith.constant dense<0.000000e+00> : vector<8xf32>
    %26 = vector.multi_reduction <add>, %25, %cst_19 [1] : vector<8x1024xf32> to vector<8xf32>
    %27 = vector.shape_cast %26 : vector<8xf32> to vector<8x1xf32>
    %28 = arith.addf %22, %27 : vector<8x1xf32>
    %c0_20 = arith.constant 0 : index
    %c0_21 = arith.constant 0 : index
    %29 = memref.load %arg9[%c0_20, %c0_21] : memref<1x1xf32, #tpu.memory_space<smem>>
    %30 = vector.broadcast %29 : f32 to vector<8x1xf32>
    %31 = arith.addf %28, %30 : vector<8x1xf32>
    %cst_22 = arith.constant 0.000000e+00 : f32
    %32 = vector.broadcast %cst_22 : f32 to vector<8x1xf32>
    %33 = arith.maximumf %31, %32 : vector<8x1xf32>
    %c0_23 = arith.constant 0 : index
    %c0_24 = arith.constant 0 : index
    %34 = vector.load %arg10[%c0_23, %c0_24] : memref<8x1xf32, #tpu.memory_space<vmem>>, vector<8x1xf32>
    tpu.vector_store %arg10[%c0_23, %c0_24], %33 {strides = array<i32>} : memref<8x1xf32, #tpu.memory_space<vmem>>, vector<8x1xf32>,
    return
  }
  func.func @transform_0(%arg0: i32) -> (i32, i32) {
    %c0_i32 = arith.constant 0 : i32
    %c0_i32_0 = arith.constant 0 : i32
    return %arg0, %c0_i32 : i32, i32
  }
  func.func @transform_1(%arg0: i32) -> (i32, i32) {
    %c0_i32 = arith.constant 0 : i32
    %c0_i32_0 = arith.constant 0 : i32
    return %arg0, %c0_i32 : i32, i32
  }
  func.func @transform_2(%arg0: i32) -> (i32, i32) {
    %c0_i32 = arith.constant 0 : i32
    %c0_i32_0 = arith.constant 0 : i32
    %c0_i32_1 = arith.constant 0 : i32
    return %c0_i32, %c0_i32_0 : i32, i32
  }
  func.func @transform_3(%arg0: i32) -> (i32, i32) {
    %c0_i32 = arith.constant 0 : i32
    %c0_i32_0 = arith.constant 0 : i32
    %c0_i32_1 = arith.constant 0 : i32
    return %c0_i32, %c0_i32_0 : i32, i32
  }
  func.func @transform_4(%arg0: i32) -> (i32, i32) {
    %c0_i32 = arith.constant 0 : i32
    %c0_i32_0 = arith.constant 0 : i32
    %c0_i32_1 = arith.constant 0 : i32
    return %c0_i32, %c0_i32_0 : i32, i32
  }
  func.func @transform_5(%arg0: i32) -> (i32, i32) {
    %c0_i32 = arith.constant 0 : i32
    %c0_i32_0 = arith.constant 0 : i32
    %c0_i32_1 = arith.constant 0 : i32
    return %c0_i32, %c0_i32_0 : i32, i32
  }
  func.func @transform_6(%arg0: i32) -> (i32, i32) {
    %c0_i32 = arith.constant 0 : i32
    %c0_i32_0 = arith.constant 0 : i32
    %c0_i32_1 = arith.constant 0 : i32
    return %c0_i32, %c0_i32_0 : i32, i32
  }
  func.func @transform_7(%arg0: i32) -> (i32, i32) {
    %c0_i32 = arith.constant 0 : i32
    %c0_i32_0 = arith.constant 0 : i32
    %c0_i32_1 = arith.constant 0 : i32
    return %c0_i32, %c0_i32_0 : i32, i32
  }
  func.func @transform_8(%arg0: i32) -> (i32, i32) {
    %c0_i32 = arith.constant 0 : i32
    %c0_i32_0 = arith.constant 0 : i32
    %c0_i32_1 = arith.constant 0 : i32
    return %c0_i32, %c0_i32_0 : i32, i32
  }
  func.func @transform_9(%arg0: i32) -> (i32, i32) {
    %c0_i32 = arith.constant 0 : i32
    %c0_i32_0 = arith.constant 0 : i32
    return %arg0, %c0_i32 : i32, i32
  }
}

</mosaic_0001>

<llo_original>
// kernel: all_neumf_input_forward.1
$region0: #{all_neumf_input_forward.1}
  #allocation0 [shape = 'u32[]', space=smem, size = 0x4, offset = 0x4, fixed_abs, tag = 'smem constant byte address 0x4 - core index']
  #allocation1 [shape = 'u32[72,128]{1,0:T(1,128)}', space=vmem, size = 0x9000, scoped, tag = 'internal scratch']
  #allocation2 [shape = 'f32[1,1]{1,0:T(1,128)S(6)}', space=smem, size = 0x200, scoped, tag = 'scoped memory for all_neumf_input_forward.1']
  %s0 = inlined_call_operand.vmem [shape: f32[8,800], index: 0, kind: input, shape index: {}]
  %s1 = inlined_call_operand.hbm [shape: f32[8,400], index: 1, kind: input, shape index: {}]
  %s2 = inlined_call_operand.hbm [shape: bf16[800,1024], index: 2, kind: input, shape index: {}]
  %s3 = inlined_call_operand.hbm [shape: f32[1,1024], index: 3, kind: input, shape index: {}]
  %s4 = inlined_call_operand.hbm [shape: bf16[1024,1024], index: 4, kind: input, shape index: {}]
  %s5 = inlined_call_operand.hbm [shape: f32[1,1024], index: 5, kind: input, shape index: {}]
  %s6 = inlined_call_operand.hbm [shape: f32[1,1024], index: 6, kind: input, shape index: {}]
  %s7 = inlined_call_operand.hbm [shape: f32[1,400], index: 7, kind: input, shape index: {}]
  %s8 = inlined_call_operand.<no memory space> [shape: f32[1,1], index: 8, kind: input, shape index: {}]
  %s9 = inlined_call_operand.vmem [shape: f32[8,1], index: 9, kind: output, shape index: {}]
  %s10 = sld [smem:[#allocation0]]
  $region74: #{all_neumf_input_forward.1} parent=0
    _
  %s12 = ssub.s32 1, %s10
  %s13 = scalar_select 0, %s12, %s10
  %14 = sst [smem:[#allocation2]] %s8
  $region1: #{all_neumf_input_forward.1} parent=0
    #allocation3 [shape = 'u8[16384]{0}', space=vmem, size = 0x4000, scoped, tag = 'input window, operand 1, single buffered']
    #allocation4 [shape = 's32[1]{0}', space=sflag, size = 0x4, scoped, tag = 'scoped memory for all_neumf_input_forward.1']
    #allocation5 [shape = 'u8[1638400]{0}', space=vmem, size = 0x190000, scoped, tag = 'input window, operand 2, single buffered']
    #allocation6 [shape = 's32[1]{0}', space=sflag, size = 0x4, scoped, tag = 'scoped memory for all_neumf_input_forward.1']
    #allocation7 [shape = 'u8[4096]{0}', space=vmem, size = 0x1000, scoped, tag = 'input window, operand 3, single buffered']
    #allocation8 [shape = 'u8[2097152]{0}', space=vmem, size = 0x200000, scoped, tag = 'input window, operand 4, single buffered']
    #allocation9 [shape = 's32[1]{0}', space=sflag, size = 0x4, scoped, tag = 'scoped memory for all_neumf_input_forward.1']
    #allocation10 [shape = 'u8[4096]{0}', space=vmem, size = 0x1000, scoped, tag = 'input window, operand 5, single buffered']
    #allocation11 [shape = 'u8[4096]{0}', space=vmem, size = 0x1000, scoped, tag = 'input window, operand 6, single buffered']
    #allocation12 [shape = 's32[1]{0}', space=sflag, size = 0x4, scoped, tag = 'scoped memory for all_neumf_input_forward.1']
    #allocation13 [shape = 'u8[2048]{0}', space=vmem, size = 0x800, scoped, tag = 'input window, operand 7, single buffered']
    %15 = vsyncpa [#allocation4], 0
    %16 = vsyncpa [#allocation6], 0
    %17 = vsyncpa [#allocation9], 0
    %18 = vsyncpa [#allocation12], 0
    // Predicated region
    $region2: #{all_neumf_input_forward.1} parent=1 // pred_check
      _
    $region3: #{all_neumf_input_forward.1} parent=1 // pred_check_branch
      %20 = sbr.rel (0) target = $region5
    $region4: #{all_neumf_input_forward.1} parent=1 // pred_region
      _
    $region5: #{all_neumf_input_forward.1} parent=1 // pred_fallthru
      _
    // Predicated region
    $region6: #{all_neumf_input_forward.1} parent=1 // pred_check
      _
    $region7: #{all_neumf_input_forward.1} parent=1 // pred_check_branch
      %22 = sbr.rel (0) target = $region9
    $region8: #{all_neumf_input_forward.1} parent=1 // pred_region
      %24 = vsyncadd [#allocation4], 0
      %s26 = sshll.u32 %s1, 4
      %s27 = int_to_ptr.hbm [resolvable:$true] %s26
      %s28 = sshll.u32 [#allocation3], 4
      %s29 = int_to_ptr.vmem [resolvable:$true] %s28
      %31 = dma.hbm_to_vmem [thread:$0]  %s27, 512, %s29, [#allocation4]
    $region9: #{all_neumf_input_forward.1} parent=1 // pred_fallthru
      _
    // Predicated region
    $region10: #{all_neumf_input_forward.1} parent=1 // pred_check
      _
    $region11: #{all_neumf_input_forward.1} parent=1 // pred_check_branch
      %33 = sbr.rel (0) target = $region13
    $region12: #{all_neumf_input_forward.1} parent=1 // pred_region
      %35 = vsyncadd [#allocation6], 0
      %s36 = sshll.u32 %s2, 4
      %s37 = int_to_ptr.hbm [resolvable:$true] %s36
      %s38 = sshll.u32 [#allocation5], 4
      %s39 = int_to_ptr.vmem [resolvable:$true] %s38
      %44 = dma.hbm_to_vmem [thread:$0]  %s37, 51200, %s39, [#allocation6], 512, 512, 32
    $region13: #{all_neumf_input_forward.1} parent=1 // pred_fallthru
      _
    // Predicated region
    $region14: #{all_neumf_input_forward.1} parent=1 // pred_check
      _
    $region15: #{all_neumf_input_forward.1} parent=1 // pred_check_branch
      %46 = sbr.rel (0) target = $region17
    $region16: #{all_neumf_input_forward.1} parent=1 // pred_region
      %48 = vsyncadd [#allocation6], 0
      %s50 = sshll.u32 %s3, 4
      %s51 = int_to_ptr.hbm [resolvable:$true] %s50
      %s52 = sshll.u32 [#allocation7], 4
      %s53 = int_to_ptr.vmem [resolvable:$true] %s52
      %55 = dma.hbm_to_vmem [thread:$0]  %s51, 128, %s53, [#allocation6]
    $region17: #{all_neumf_input_forward.1} parent=1 // pred_fallthru
      _
    // Predicated region
    $region18: #{all_neumf_input_forward.1} parent=1 // pred_check
      _
    $region19: #{all_neumf_input_forward.1} parent=1 // pred_check_branch
      %57 = sbr.rel (0) target = $region21
    $region20: #{all_neumf_input_forward.1} parent=1 // pred_region
      %59 = vsyncadd [#allocation9], 0
      %s60 = sshll.u32 %s4, 4
      %s61 = int_to_ptr.hbm [resolvable:$true] %s60
      %s62 = sshll.u32 [#allocation8], 4
      %s63 = int_to_ptr.vmem [resolvable:$true] %s62
      %68 = dma.hbm_to_vmem [thread:$0]  %s61, 65536, %s63, [#allocation9], 512, 512, 32
    $region21: #{all_neumf_input_forward.1} parent=1 // pred_fallthru
      _
    // Predicated region
    $region22: #{all_neumf_input_forward.1} parent=1 // pred_check
      _
    $region23: #{all_neumf_input_forward.1} parent=1 // pred_check_branch
      %70 = sbr.rel (0) target = $region25
    $region24: #{all_neumf_input_forward.1} parent=1 // pred_region
      %72 = vsyncadd [#allocation9], 0
      %s74 = sshll.u32 %s5, 4
      %s75 = int_to_ptr.hbm [resolvable:$true] %s74
      %s76 = sshll.u32 [#allocation10], 4
      %s77 = int_to_ptr.vmem [resolvable:$true] %s76
      %79 = dma.hbm_to_vmem [thread:$0]  %s75, 128, %s77, [#allocation9]
    $region25: #{all_neumf_input_forward.1} parent=1 // pred_fallthru
      _
    // Predicated region
    $region26: #{all_neumf_input_forward.1} parent=1 // pred_check
      _
    $region27: #{all_neumf_input_forward.1} parent=1 // pred_check_branch
      %81 = sbr.rel (0) target = $region29
    $region28: #{all_neumf_input_forward.1} parent=1 // pred_region
      %83 = vsyncadd [#allocation12], 0
      %s85 = sshll.u32 %s6, 4
      %s86 = int_to_ptr.hbm [resolvable:$true] %s85
      %s87 = sshll.u32 [#allocation11], 4
      %s88 = int_to_ptr.vmem [resolvable:$true] %s87
      %90 = dma.hbm_to_vmem [thread:$0]  %s86, 128, %s88, [#allocation12]
    $region29: #{all_neumf_input_forward.1} parent=1 // pred_fallthru
      _
    // Predicated region
    $region30: #{all_neumf_input_forward.1} parent=1 // pred_check
      _
    $region31: #{all_neumf_input_forward.1} parent=1 // pred_check_branch
      %92 = sbr.rel (0) target = $region33
    $region32: #{all_neumf_input_forward.1} parent=1 // pred_region
      %94 = vsyncadd [#allocation12], 0
      %s96 = sshll.u32 %s7, 4
      %s97 = int_to_ptr.hbm [resolvable:$true] %s96
      %s98 = sshll.u32 [#allocation13], 4
      %s99 = int_to_ptr.vmem [resolvable:$true] %s98
      %101 = dma.hbm_to_vmem [thread:$0]  %s97, 64, %s99, [#allocation12]
    $region33: #{all_neumf_input_forward.1} parent=1 // pred_fallthru
      _
    // Predicated region
    $region34: #{all_neumf_input_forward.1} parent=1 // pred_check
      _
    $region35: #{all_neumf_input_forward.1} parent=1 // pred_check_branch
      %103 = sbr.rel (0) target = $region37
    $region36: #{all_neumf_input_forward.1} parent=1 // pred_region
      _
    $region37: #{all_neumf_input_forward.1} parent=1 // pred_fallthru
      _
    // Predicated region
    $region38: #{all_neumf_input_forward.1} parent=1 // pred_check
      _
    $region39: #{all_neumf_input_forward.1} parent=1 // pred_check_branch
      %105 = sbr.rel (0) target = $region41
    $region40: #{all_neumf_input_forward.1} parent=1 // pred_region
      %107 = dma.done [#allocation4], 512
    $region41: #{all_neumf_input_forward.1} parent=1 // pred_fallthru
      _
    // Predicated region
    $region42: #{all_neumf_input_forward.1} parent=1 // pred_check
      _
    $region43: #{all_neumf_input_forward.1} parent=1 // pred_check_branch
      %109 = sbr.rel (0) target = $region45
    $region44: #{all_neumf_input_forward.1} parent=1 // pred_region
      %111 = dma.done [#allocation6], 51200
    $region45: #{all_neumf_input_forward.1} parent=1 // pred_fallthru
      _
    // Predicated region
    $region46: #{all_neumf_input_forward.1} parent=1 // pred_check
      _
    $region47: #{all_neumf_input_forward.1} parent=1 // pred_check_branch
      %113 = sbr.rel (0) target = $region49
    $region48: #{all_neumf_input_forward.1} parent=1 // pred_region
      %115 = dma.done [#allocation6], 128
    $region49: #{all_neumf_input_forward.1} parent=1 // pred_fallthru
      _
    // Predicated region
    $region50: #{all_neumf_input_forward.1} parent=1 // pred_check
      _
    $region51: #{all_neumf_input_forward.1} parent=1 // pred_check_branch
      %117 = sbr.rel (0) target = $region53
    $region52: #{all_neumf_input_forward.1} parent=1 // pred_region
      %119 = dma.done [#allocation9], 65536
    $region53: #{all_neumf_input_forward.1} parent=1 // pred_fallthru
      _
    // Predicated region
    $region54: #{all_neumf_input_forward.1} parent=1 // pred_check
      _
    $region55: #{all_neumf_input_forward.1} parent=1 // pred_check_branch
      %121 = sbr.rel (0) target = $region57
    $region56: #{all_neumf_input_forward.1} parent=1 // pred_region
      %123 = dma.done [#allocation9], 128
    $region57: #{all_neumf_input_forward.1} parent=1 // pred_fallthru
      _
    // Predicated region
    $region58: #{all_neumf_input_forward.1} parent=1 // pred_check
      _
    $region59: #{all_neumf_input_forward.1} parent=1 // pred_check_branch
      %125 = sbr.rel (0) target = $region61
    $region60: #{all_neumf_input_forward.1} parent=1 // pred_region
      %127 = dma.done [#allocation12], 128
    $region61: #{all_neumf_input_forward.1} parent=1 // pred_fallthru
      _
    // Predicated region
    $region62: #{all_neumf_input_forward.1} parent=1 // pred_check
      _
    $region63: #{all_neumf_input_forward.1} parent=1 // pred_check_branch
      %129 = sbr.rel (0) target = $region65
    $region64: #{all_neumf_input_forward.1} parent=1 // pred_region
      %131 = dma.done [#allocation12], 64
    $region65: #{all_neumf_input_forward.1} parent=1 // pred_fallthru
      _
    %v133 = vld [vmem:[%s0] sm:$0xff]
    %v134 = vld [vmem:[%s0 + $0x8] sm:$0xff]
    %v135 = vld [vmem:[%s0 + $0x10] sm:$0xff]
    %v136 = vld [vmem:[%s0 + $0x18] sm:$0xff]
    %v137 = vld [vmem:[%s0 + $0x20] sm:$0xff]
    %v138 = vld [vmem:[%s0 + $0x28] sm:$0xff]
    %v139 = vld [vmem:[%s0 + $0x30] sm:$0xff]
    %v140 = vpack.c.bf16 %v133, %v133
    %v141 = vpack.c.bf16 %v134, %v134
    %v142 = vpack.c.bf16 %v135, %v135
    %v143 = vpack.c.bf16 %v136, %v136
    %v144 = vpack.c.bf16 %v137, %v137
    %v145 = vpack.c.bf16 %v138, %v138
    %v146 = vpack.c.bf16 %v139, %v139
    %v147 = vld [vmem:[#allocation5] sm:$0xff]
    %v148 = vld [vmem:[#allocation5 + $0x8] sm:$0xff]
    %v149 = vld [vmem:[#allocation5 + $0x10] sm:$0xff]
    %v150 = vld [vmem:[#allocation5 + $0x18] sm:$0xff]
    %v151 = vld [vmem:[#allocation5 + $0x20] sm:$0xff]
    %v152 = vld [vmem:[#allocation5 + $0x28] sm:$0xff]
    %v153 = vld [vmem:[#allocation5 + $0x30] sm:$0xff]
    %v154 = vld [vmem:[#allocation5 + $0x38] sm:$0xff]
    %v155 = vld [vmem:[#allocation5 + $0x40] sm:$0xff]
    %v156 = vld [vmem:[#allocation5 + $0x48] sm:$0xff]
    %v157 = vld [vmem:[#allocation5 + $0x50] sm:$0xff]
    %v158 = vld [vmem:[#allocation5 + $0x58] sm:$0xff]
    %v159 = vld [vmem:[#allocation5 + $0x60] sm:$0xff]
    %v160 = vld [vmem:[#allocation5 + $0x68] sm:$0xff]
    %v161 = vld [vmem:[#allocation5 + $0x70] sm:$0xff]
    %v162 = vld [vmem:[#allocation5 + $0x78] sm:$0xff]
    %v163 = vld [vmem:[#allocation5 + $0x80] sm:$0xff]
    %v164 = vld [vmem:[#allocation5 + $0x88] sm:$0xff]
    %v165 = vld [vmem:[#allocation5 + $0x90] sm:$0xff]
    %v166 = vld [vmem:[#allocation5 + $0x98] sm:$0xff]
    %v167 = vld [vmem:[#allocation5 + $0xa0] sm:$0xff]
    %v168 = vld [vmem:[#allocation5 + $0xa8] sm:$0xff]
    %v169 = vld [vmem:[#allocation5 + $0xb0] sm:$0xff]
    %v170 = vld [vmem:[#allocation5 + $0xb8] sm:$0xff]
    %v171 = vld [vmem:[#allocation5 + $0xc0] sm:$0xff]
    %v172 = vld [vmem:[#allocation5 + $0xc8] sm:$0xff]
    %v173 = vld [vmem:[#allocation5 + $0xd0] sm:$0xff]
    %v174 = vld [vmem:[#allocation5 + $0xd8] sm:$0xff]
    %v175 = vld [vmem:[#allocation5 + $0xe0] sm:$0xff]
    %v176 = vld [vmem:[#allocation5 + $0xe8] sm:$0xff]
    %v177 = vld [vmem:[#allocation5 + $0xf0] sm:$0xff]
    %v178 = vld [vmem:[#allocation5 + $0xf8] sm:$0xff]
    %v179 = vld [vmem:[#allocation5 + $0x100] sm:$0xff]
    %v180 = vld [vmem:[#allocation5 + $0x108] sm:$0xff]
    %v181 = vld [vmem:[#allocation5 + $0x110] sm:$0xff]
    %v182 = vld [vmem:[#allocation5 + $0x118] sm:$0xff]
    %v183 = vld [vmem:[#allocation5 + $0x120] sm:$0xff]
    %v184 = vld [vmem:[#allocation5 + $0x128] sm:$0xff]
    %v185 = vld [vmem:[#allocation5 + $0x130] sm:$0xff]
    %v186 = vld [vmem:[#allocation5 + $0x138] sm:$0xff]
    %v187 = vld [vmem:[#allocation5 + $0x140] sm:$0xff]
    %v188 = vld [vmem:[#allocation5 + $0x148] sm:$0xff]
    %v189 = vld [vmem:[#allocation5 + $0x150] sm:$0xff]
    %v190 = vld [vmem:[#allocation5 + $0x158] sm:$0xff]
    %v191 = vld [vmem:[#allocation5 + $0x160] sm:$0xff]
    %v192 = vld [vmem:[#allocation5 + $0x168] sm:$0xff]
    %v193 = vld [vmem:[#allocation5 + $0x170] sm:$0xff]
    %v194 = vld [vmem:[#allocation5 + $0x178] sm:$0xff]
    %v195 = vld [vmem:[#allocation5 + $0x180] sm:$0xff]
    %v196 = vld [vmem:[#allocation5 + $0x188] sm:$0xff]
    %v197 = vld [vmem:[#allocation5 + $0x190] sm:$0xff]
    %v198 = vld [vmem:[#allocation5 + $0x198] sm:$0xff]
    %v199 = vld [vmem:[#allocation5 + $0x1a0] sm:$0xff]
    %v200 = vld [vmem:[#allocation5 + $0x1a8] sm:$0xff]
    %v201 = vld [vmem:[#allocation5 + $0x1b0] sm:$0xff]
    %v202 = vld [vmem:[#allocation5 + $0x1b8] sm:$0xff]
    %v203 = vld [vmem:[#allocation5 + $0x1c0] sm:$0xff]
    %v204 = vld [vmem:[#allocation5 + $0x1c8] sm:$0xff]
    %v205 = vld [vmem:[#allocation5 + $0x1d0] sm:$0xff]
    %v206 = vld [vmem:[#allocation5 + $0x1d8] sm:$0xff]
    %v207 = vld [vmem:[#allocation5 + $0x1e0] sm:$0xff]
    %v208 = vld [vmem:[#allocation5 + $0x1e8] sm:$0xff]
    %v209 = vld [vmem:[#allocation5 + $0x1f0] sm:$0xff]
    %v210 = vld [vmem:[#allocation5 + $0x1f8] sm:$0xff]
    %v211 = vld [vmem:[#allocation5 + $0x200] sm:$0xff]
    %v212 = vld [vmem:[#allocation5 + $0x208] sm:$0xff]
    %v213 = vld [vmem:[#allocation5 + $0x210] sm:$0xff]
    %v214 = vld [vmem:[#allocation5 + $0x218] sm:$0xff]
    %v215 = vld [vmem:[#allocation5 + $0x220] sm:$0xff]
    %v216 = vld [vmem:[#allocation5 + $0x228] sm:$0xff]
    %v217 = vld [vmem:[#allocation5 + $0x230] sm:$0xff]
    %v218 = vld [vmem:[#allocation5 + $0x238] sm:$0xff]
    %v219 = vld [vmem:[#allocation5 + $0x240] sm:$0xff]
    %v220 = vld [vmem:[#allocation5 + $0x248] sm:$0xff]
    %v221 = vld [vmem:[#allocation5 + $0x250] sm:$0xff]
    %v222 = vld [vmem:[#allocation5 + $0x258] sm:$0xff]
    %v223 = vld [vmem:[#allocation5 + $0x260] sm:$0xff]
    %v224 = vld [vmem:[#allocation5 + $0x268] sm:$0xff]
    %v225 = vld [vmem:[#allocation5 + $0x270] sm:$0xff]
    %v226 = vld [vmem:[#allocation5 + $0x278] sm:$0xff]
    %v227 = vld [vmem:[#allocation5 + $0x280] sm:$0xff]
    %v228 = vld [vmem:[#allocation5 + $0x288] sm:$0xff]
    %v229 = vld [vmem:[#allocation5 + $0x290] sm:$0xff]
    %v230 = vld [vmem:[#allocation5 + $0x298] sm:$0xff]
    %v231 = vld [vmem:[#allocation5 + $0x2a0] sm:$0xff]
    %v232 = vld [vmem:[#allocation5 + $0x2a8] sm:$0xff]
    %v233 = vld [vmem:[#allocation5 + $0x2b0] sm:$0xff]
    %v234 = vld [vmem:[#allocation5 + $0x2b8] sm:$0xff]
    %v235 = vld [vmem:[#allocation5 + $0x2c0] sm:$0xff]
    %v236 = vld [vmem:[#allocation5 + $0x2c8] sm:$0xff]
    %v237 = vld [vmem:[#allocation5 + $0x2d0] sm:$0xff]
    %v238 = vld [vmem:[#allocation5 + $0x2d8] sm:$0xff]
    %v239 = vld [vmem:[#allocation5 + $0x2e0] sm:$0xff]
    %v240 = vld [vmem:[#allocation5 + $0x2e8] sm:$0xff]
    %v241 = vld [vmem:[#allocation5 + $0x2f0] sm:$0xff]
    %v242 = vld [vmem:[#allocation5 + $0x2f8] sm:$0xff]
    %v243 = vld [vmem:[#allocation5 + $0x300] sm:$0xff]
    %v244 = vld [vmem:[#allocation5 + $0x308] sm:$0xff]
    %v245 = vld [vmem:[#allocation5 + $0x310] sm:$0xff]
    %v246 = vld [vmem:[#allocation5 + $0x318] sm:$0xff]
    %v247 = vld [vmem:[#allocation5 + $0x320] sm:$0xff]
    %v248 = vld [vmem:[#allocation5 + $0x328] sm:$0xff]
    %v249 = vld [vmem:[#allocation5 + $0x330] sm:$0xff]
    %v250 = vld [vmem:[#allocation5 + $0x338] sm:$0xff]
    %v251 = vld [vmem:[#allocation5 + $0x340] sm:$0xff]
    %v252 = vld [vmem:[#allocation5 + $0x348] sm:$0xff]
    %v253 = vld [vmem:[#allocation5 + $0x350] sm:$0xff]
    %v254 = vld [vmem:[#allocation5 + $0x358] sm:$0xff]
    %v255 = vld [vmem:[#allocation5 + $0x360] sm:$0xff]
    %v256 = vld [vmem:[#allocation5 + $0x368] sm:$0xff]
    %v257 = vld [vmem:[#allocation5 + $0x370] sm:$0xff]
    %v258 = vld [vmem:[#allocation5 + $0x378] sm:$0xff]
    %v259 = vld [vmem:[#allocation5 + $0x380] sm:$0xff]
    %v260 = vld [vmem:[#allocation5 + $0x388] sm:$0xff]
    %v261 = vld [vmem:[#allocation5 + $0x390] sm:$0xff]
    %v262 = vld [vmem:[#allocation5 + $0x398] sm:$0xff]
    %v263 = vld [vmem:[#allocation5 + $0x3a0] sm:$0xff]
    %v264 = vld [vmem:[#allocation5 + $0x3a8] sm:$0xff]
    %v265 = vld [vmem:[#allocation5 + $0x3b0] sm:$0xff]
    %v266 = vld [vmem:[#allocation5 + $0x3b8] sm:$0xff]
    %v267 = vld [vmem:[#allocation5 + $0x3c0] sm:$0xff]
    %v268 = vld [vmem:[#allocation5 + $0x3c8] sm:$0xff]
    %v269 = vld [vmem:[#allocation5 + $0x3d0] sm:$0xff]
    %v270 = vld [vmem:[#allocation5 + $0x3d8] sm:$0xff]
    %v271 = vld [vmem:[#allocation5 + $0x3e0] sm:$0xff]
    %v272 = vld [vmem:[#allocation5 + $0x3e8] sm:$0xff]
    %v273 = vld [vmem:[#allocation5 + $0x3f0] sm:$0xff]
    %v274 = vld [vmem:[#allocation5 + $0x3f8] sm:$0xff]
    %v275 = vld [vmem:[#allocation5 + $0x400] sm:$0xff]
    %v276 = vld [vmem:[#allocation5 + $0x408] sm:$0xff]
    %v277 = vld [vmem:[#allocation5 + $0x410] sm:$0xff]
    %v278 = vld [vmem:[#allocation5 + $0x418] sm:$0xff]
    %v279 = vld [vmem:[#allocation5 + $0x420] sm:$0xff]
    %v280 = vld [vmem:[#allocation5 + $0x428] sm:$0xff]
    %v281 = vld [vmem:[#allocation5 + $0x430] sm:$0xff]
    %v282 = vld [vmem:[#allocation5 + $0x438] sm:$0xff]
    %v283 = vld [vmem:[#allocation5 + $0x440] sm:$0xff]
    %v284 = vld [vmem:[#allocation5 + $0x448] sm:$0xff]
    %v285 = vld [vmem:[#allocation5 + $0x450] sm:$0xff]
    %v286 = vld [vmem:[#allocation5 + $0x458] sm:$0xff]
    %v287 = vld [vmem:[#allocation5 + $0x460] sm:$0xff]
    %v288 = vld [vmem:[#allocation5 + $0x468] sm:$0xff]
    %v289 = vld [vmem:[#allocation5 + $0x470] sm:$0xff]
    %v290 = vld [vmem:[#allocation5 + $0x478] sm:$0xff]
    %v291 = vld [vmem:[#allocation5 + $0x480] sm:$0xff]
    %v292 = vld [vmem:[#allocation5 + $0x488] sm:$0xff]
    %v293 = vld [vmem:[#allocation5 + $0x490] sm:$0xff]
    %v294 = vld [vmem:[#allocation5 + $0x498] sm:$0xff]
    %v295 = vld [vmem:[#allocation5 + $0x4a0] sm:$0xff]
    %v296 = vld [vmem:[#allocation5 + $0x4a8] sm:$0xff]
    %v297 = vld [vmem:[#allocation5 + $0x4b0] sm:$0xff]
    %v298 = vld [vmem:[#allocation5 + $0x4b8] sm:$0xff]
    %v299 = vld [vmem:[#allocation5 + $0x4c0] sm:$0xff]
    %v300 = vld [vmem:[#allocation5 + $0x4c8] sm:$0xff]
    %v301 = vld [vmem:[#allocation5 + $0x4d0] sm:$0xff]
    %v302 = vld [vmem:[#allocation5 + $0x4d8] sm:$0xff]
    %v303 = vld [vmem:[#allocation5 + $0x4e0] sm:$0xff]
    %v304 = vld [vmem:[#allocation5 + $0x4e8] sm:$0xff]
    %v305 = vld [vmem:[#allocation5 + $0x4f0] sm:$0xff]
    %v306 = vld [vmem:[#allocation5 + $0x4f8] sm:$0xff]
    %v307 = vld [vmem:[#allocation5 + $0x500] sm:$0xff]
    %v308 = vld [vmem:[#allocation5 + $0x508] sm:$0xff]
    %v309 = vld [vmem:[#allocation5 + $0x510] sm:$0xff]
    %v310 = vld [vmem:[#allocation5 + $0x518] sm:$0xff]
    %v311 = vld [vmem:[#allocation5 + $0x520] sm:$0xff]
    %v312 = vld [vmem:[#allocation5 + $0x528] sm:$0xff]
    %v313 = vld [vmem:[#allocation5 + $0x530] sm:$0xff]
    %v314 = vld [vmem:[#allocation5 + $0x538] sm:$0xff]
    %v315 = vld [vmem:[#allocation5 + $0x540] sm:$0xff]
    %v316 = vld [vmem:[#allocation5 + $0x548] sm:$0xff]
    %v317 = vld [vmem:[#allocation5 + $0x550] sm:$0xff]
    %v318 = vld [vmem:[#allocation5 + $0x558] sm:$0xff]
    %v319 = vld [vmem:[#allocation5 + $0x560] sm:$0xff]
    %v320 = vld [vmem:[#allocation5 + $0x568] sm:$0xff]
    %v321 = vld [vmem:[#allocation5 + $0x570] sm:$0xff]
    %v322 = vld [vmem:[#allocation5 + $0x578] sm:$0xff]
    %v323 = vld [vmem:[#allocation5 + $0x580] sm:$0xff]
    %v324 = vld [vmem:[#allocation5 + $0x588] sm:$0xff]
    %v325 = vld [vmem:[#allocation5 + $0x590] sm:$0xff]
    %v326 = vld [vmem:[#allocation5 + $0x598] sm:$0xff]
    %v327 = vld [vmem:[#allocation5 + $0x5a0] sm:$0xff]
    %v328 = vld [vmem:[#allocation5 + $0x5a8] sm:$0xff]
    %v329 = vld [vmem:[#allocation5 + $0x5b0] sm:$0xff]
    %v330 = vld [vmem:[#allocation5 + $0x5b8] sm:$0xff]
    %v331 = vld [vmem:[#allocation5 + $0x5c0] sm:$0xff]
    %v332 = vld [vmem:[#allocation5 + $0x5c8] sm:$0xff]
    %v333 = vld [vmem:[#allocation5 + $0x5d0] sm:$0xff]
    %v334 = vld [vmem:[#allocation5 + $0x5d8] sm:$0xff]
    %v335 = vld [vmem:[#allocation5 + $0x5e0] sm:$0xff]
    %v336 = vld [vmem:[#allocation5 + $0x5e8] sm:$0xff]
    %v337 = vld [vmem:[#allocation5 + $0x5f0] sm:$0xff]
    %v338 = vld [vmem:[#allocation5 + $0x5f8] sm:$0xff]
    %v339 = vld [vmem:[#allocation5 + $0x600] sm:$0xff]
    %v340 = vld [vmem:[#allocation5 + $0x608] sm:$0xff]
    %v341 = vld [vmem:[#allocation5 + $0x610] sm:$0xff]
    %v342 = vld [vmem:[#allocation5 + $0x618] sm:$0xff]
    %v343 = vld [vmem:[#allocation5 + $0x620] sm:$0xff]
    %v344 = vld [vmem:[#allocation5 + $0x628] sm:$0xff]
    %v345 = vld [vmem:[#allocation5 + $0x630] sm:$0xff]
    %v346 = vld [vmem:[#allocation5 + $0x638] sm:$0xff]
    %v347 = vld [vmem:[#allocation5 + $0x640] sm:$0xff]
    %v348 = vld [vmem:[#allocation5 + $0x648] sm:$0xff]
    %v349 = vld [vmem:[#allocation5 + $0x650] sm:$0xff]
    %v350 = vld [vmem:[#allocation5 + $0x658] sm:$0xff]
    %v351 = vld [vmem:[#allocation5 + $0x660] sm:$0xff]
    %v352 = vld [vmem:[#allocation5 + $0x668] sm:$0xff]
    %v353 = vld [vmem:[#allocation5 + $0x670] sm:$0xff]
    %v354 = vld [vmem:[#allocation5 + $0x678] sm:$0xff]
    %v355 = vld [vmem:[#allocation5 + $0x680] sm:$0xff]
    %v356 = vld [vmem:[#allocation5 + $0x688] sm:$0xff]
    %v357 = vld [vmem:[#allocation5 + $0x690] sm:$0xff]
    %v358 = vld [vmem:[#allocation5 + $0x698] sm:$0xff]
    %v359 = vld [vmem:[#allocation5 + $0x6a0] sm:$0xff]
    %v360 = vld [vmem:[#allocation5 + $0x6a8] sm:$0xff]
    %v361 = vld [vmem:[#allocation5 + $0x6b0] sm:$0xff]
    %v362 = vld [vmem:[#allocation5 + $0x6b8] sm:$0xff]
    %v363 = vld [vmem:[#allocation5 + $0x6c0] sm:$0xff]
    %v364 = vld [vmem:[#allocation5 + $0x6c8] sm:$0xff]
    %v365 = vld [vmem:[#allocation5 + $0x6d0] sm:$0xff]
    %v366 = vld [vmem:[#allocation5 + $0x6d8] sm:$0xff]
    %v367 = vld [vmem:[#allocation5 + $0x6e0] sm:$0xff]
    %v368 = vld [vmem:[#allocation5 + $0x6e8] sm:$0xff]
    %v369 = vld [vmem:[#allocation5 + $0x6f0] sm:$0xff]
    %v370 = vld [vmem:[#allocation5 + $0x6f8] sm:$0xff]
    %v371 = vld [vmem:[#allocation5 + $0x700] sm:$0xff]
    %v372 = vld [vmem:[#allocation5 + $0x708] sm:$0xff]
    %v373 = vld [vmem:[#allocation5 + $0x710] sm:$0xff]
    %v374 = vld [vmem:[#allocation5 + $0x718] sm:$0xff]
    %v375 = vld [vmem:[#allocation5 + $0x720] sm:$0xff]
    %v376 = vld [vmem:[#allocation5 + $0x728] sm:$0xff]
    %v377 = vld [vmem:[#allocation5 + $0x730] sm:$0xff]
    %v378 = vld [vmem:[#allocation5 + $0x738] sm:$0xff]
    %v379 = vld [vmem:[#allocation5 + $0x740] sm:$0xff]
    %v380 = vld [vmem:[#allocation5 + $0x748] sm:$0xff]
    %v381 = vld [vmem:[#allocation5 + $0x750] sm:$0xff]
    %v382 = vld [vmem:[#allocation5 + $0x758] sm:$0xff]
    %v383 = vld [vmem:[#allocation5 + $0x760] sm:$0xff]
    %v384 = vld [vmem:[#allocation5 + $0x768] sm:$0xff]
    %v385 = vld [vmem:[#allocation5 + $0x770] sm:$0xff]
    %v386 = vld [vmem:[#allocation5 + $0x778] sm:$0xff]
    %v387 = vld [vmem:[#allocation5 + $0x780] sm:$0xff]
    %v388 = vld [vmem:[#allocation5 + $0x788] sm:$0xff]
    %v389 = vld [vmem:[#allocation5 + $0x790] sm:$0xff]
    %v390 = vld [vmem:[#allocation5 + $0x798] sm:$0xff]
    %v391 = vld [vmem:[#allocation5 + $0x7a0] sm:$0xff]
    %v392 = vld [vmem:[#allocation5 + $0x7a8] sm:$0xff]
    %v393 = vld [vmem:[#allocation5 + $0x7b0] sm:$0xff]
    %v394 = vld [vmem:[#allocation5 + $0x7b8] sm:$0xff]
    %v395 = vld [vmem:[#allocation5 + $0x7c0] sm:$0xff]
    %v396 = vld [vmem:[#allocation5 + $0x7c8] sm:$0xff]
    %v397 = vld [vmem:[#allocation5 + $0x7d0] sm:$0xff]
    %v398 = vld [vmem:[#allocation5 + $0x7d8] sm:$0xff]
    %v399 = vld [vmem:[#allocation5 + $0x7e0] sm:$0xff]
    %v400 = vld [vmem:[#allocation5 + $0x7e8] sm:$0xff]
    %v401 = vld [vmem:[#allocation5 + $0x7f0] sm:$0xff]
    %v402 = vld [vmem:[#allocation5 + $0x7f8] sm:$0xff]
    %v403 = vld [vmem:[#allocation5 + $0x800] sm:$0xff]
    %v404 = vld [vmem:[#allocation5 + $0x808] sm:$0xff]
    %v405 = vld [vmem:[#allocation5 + $0x810] sm:$0xff]
    %v406 = vld [vmem:[#allocation5 + $0x818] sm:$0xff]
    %v407 = vld [vmem:[#allocation5 + $0x820] sm:$0xff]
    %v408 = vld [vmem:[#allocation5 + $0x828] sm:$0xff]
    %v409 = vld [vmem:[#allocation5 + $0x830] sm:$0xff]
    %v410 = vld [vmem:[#allocation5 + $0x838] sm:$0xff]
    %v411 = vld [vmem:[#allocation5 + $0x840] sm:$0xff]
    %v412 = vld [vmem:[#allocation5 + $0x848] sm:$0xff]
    %v413 = vld [vmem:[#allocation5 + $0x850] sm:$0xff]
    %v414 = vld [vmem:[#allocation5 + $0x858] sm:$0xff]
    %v415 = vld [vmem:[#allocation5 + $0x860] sm:$0xff]
    %v416 = vld [vmem:[#allocation5 + $0x868] sm:$0xff]
    %v417 = vld [vmem:[#allocation5 + $0x870] sm:$0xff]
    %v418 = vld [vmem:[#allocation5 + $0x878] sm:$0xff]
    %v419 = vld [vmem:[#allocation5 + $0x880] sm:$0xff]
    %v420 = vld [vmem:[#allocation5 + $0x888] sm:$0xff]
    %v421 = vld [vmem:[#allocation5 + $0x890] sm:$0xff]
    %v422 = vld [vmem:[#allocation5 + $0x898] sm:$0xff]
    %v423 = vld [vmem:[#allocation5 + $0x8a0] sm:$0xff]
    %v424 = vld [vmem:[#allocation5 + $0x8a8] sm:$0xff]
    %v425 = vld [vmem:[#allocation5 + $0x8b0] sm:$0xff]
    %v426 = vld [vmem:[#allocation5 + $0x8b8] sm:$0xff]
    %v427 = vld [vmem:[#allocation5 + $0x8c0] sm:$0xff]
    %v428 = vld [vmem:[#allocation5 + $0x8c8] sm:$0xff]
    %v429 = vld [vmem:[#allocation5 + $0x8d0] sm:$0xff]
    %v430 = vld [vmem:[#allocation5 + $0x8d8] sm:$0xff]
    %v431 = vld [vmem:[#allocation5 + $0x8e0] sm:$0xff]
    %v432 = vld [vmem:[#allocation5 + $0x8e8] sm:$0xff]
    %v433 = vld [vmem:[#allocation5 + $0x8f0] sm:$0xff]
    %v434 = vld [vmem:[#allocation5 + $0x8f8] sm:$0xff]
    %v435 = vld [vmem:[#allocation5 + $0x900] sm:$0xff]
    %v436 = vld [vmem:[#allocation5 + $0x908] sm:$0xff]
    %v437 = vld [vmem:[#allocation5 + $0x910] sm:$0xff]
    %v438 = vld [vmem:[#allocation5 + $0x918] sm:$0xff]
    %v439 = vld [vmem:[#allocation5 + $0x920] sm:$0xff]
    %v440 = vld [vmem:[#allocation5 + $0x928] sm:$0xff]
    %v441 = vld [vmem:[#allocation5 + $0x930] sm:$0xff]
    %v442 = vld [vmem:[#allocation5 + $0x938] sm:$0xff]
    %v443 = vld [vmem:[#allocation5 + $0x940] sm:$0xff]
    %v444 = vld [vmem:[#allocation5 + $0x948] sm:$0xff]
    %v445 = vld [vmem:[#allocation5 + $0x950] sm:$0xff]
    %v446 = vld [vmem:[#allocation5 + $0x958] sm:$0xff]
    %v447 = vld [vmem:[#allocation5 + $0x960] sm:$0xff]
    %v448 = vld [vmem:[#allocation5 + $0x968] sm:$0xff]
    %v449 = vld [vmem:[#allocation5 + $0x970] sm:$0xff]
    %v450 = vld [vmem:[#allocation5 + $0x978] sm:$0xff]
    %v451 = vld [vmem:[#allocation5 + $0x980] sm:$0xff]
    %v452 = vld [vmem:[#allocation5 + $0x988] sm:$0xff]
    %v453 = vld [vmem:[#allocation5 + $0x990] sm:$0xff]
    %v454 = vld [vmem:[#allocation5 + $0x998] sm:$0xff]
    %v455 = vld [vmem:[#allocation5 + $0x9a0] sm:$0xff]
    %v456 = vld [vmem:[#allocation5 + $0x9a8] sm:$0xff]
    %v457 = vld [vmem:[#allocation5 + $0x9b0] sm:$0xff]
    %v458 = vld [vmem:[#allocation5 + $0x9b8] sm:$0xff]
    %v459 = vld [vmem:[#allocation5 + $0x9c0] sm:$0xff]
    %v460 = vld [vmem:[#allocation5 + $0x9c8] sm:$0xff]
    %v461 = vld [vmem:[#allocation5 + $0x9d0] sm:$0xff]
    %v462 = vld [vmem:[#allocation5 + $0x9d8] sm:$0xff]
    %v463 = vld [vmem:[#allocation5 + $0x9e0] sm:$0xff]
    %v464 = vld [vmem:[#allocation5 + $0x9e8] sm:$0xff]
    %v465 = vld [vmem:[#allocation5 + $0x9f0] sm:$0xff]
    %v466 = vld [vmem:[#allocation5 + $0x9f8] sm:$0xff]
    %v467 = vld [vmem:[#allocation5 + $0xa00] sm:$0xff]
    %v468 = vld [vmem:[#allocation5 + $0xa08] sm:$0xff]
    %v469 = vld [vmem:[#allocation5 + $0xa10] sm:$0xff]
    %v470 = vld [vmem:[#allocation5 + $0xa18] sm:$0xff]
    %v471 = vld [vmem:[#allocation5 + $0xa20] sm:$0xff]
    %v472 = vld [vmem:[#allocation5 + $0xa28] sm:$0xff]
    %v473 = vld [vmem:[#allocation5 + $0xa30] sm:$0xff]
    %v474 = vld [vmem:[#allocation5 + $0xa38] sm:$0xff]
    %v475 = vld [vmem:[#allocation5 + $0xa40] sm:$0xff]
    %v476 = vld [vmem:[#allocation5 + $0xa48] sm:$0xff]
    %v477 = vld [vmem:[#allocation5 + $0xa50] sm:$0xff]
    %v478 = vld [vmem:[#allocation5 + $0xa58] sm:$0xff]
    %v479 = vld [vmem:[#allocation5 + $0xa60] sm:$0xff]
    %v480 = vld [vmem:[#allocation5 + $0xa68] sm:$0xff]
    %v481 = vld [vmem:[#allocation5 + $0xa70] sm:$0xff]
    %v482 = vld [vmem:[#allocation5 + $0xa78] sm:$0xff]
    %v483 = vld [vmem:[#allocation5 + $0xa80] sm:$0xff]
    %v484 = vld [vmem:[#allocation5 + $0xa88] sm:$0xff]
    %v485 = vld [vmem:[#allocation5 + $0xa90] sm:$0xff]
    %v486 = vld [vmem:[#allocation5 + $0xa98] sm:$0xff]
    %v487 = vld [vmem:[#allocation5 + $0xaa0] sm:$0xff]
    %v488 = vld [vmem:[#allocation5 + $0xaa8] sm:$0xff]
    %v489 = vld [vmem:[#allocation5 + $0xab0] sm:$0xff]
    %v490 = vld [vmem:[#allocation5 + $0xab8] sm:$0xff]
    %v491 = vld [vmem:[#allocation5 + $0xac0] sm:$0xff]
    %v492 = vld [vmem:[#allocation5 + $0xac8] sm:$0xff]
    %v493 = vld [vmem:[#allocation5 + $0xad0] sm:$0xff]
    %v494 = vld [vmem:[#allocation5 + $0xad8] sm:$0xff]
    %v495 = vld [vmem:[#allocation5 + $0xae0] sm:$0xff]
    %v496 = vld [vmem:[#allocation5 + $0xae8] sm:$0xff]
    %v497 = vld [vmem:[#allocation5 + $0xaf0] sm:$0xff]
    %v498 = vld [vmem:[#allocation5 + $0xaf8] sm:$0xff]
    %v499 = vld [vmem:[#allocation5 + $0xb00] sm:$0xff]
    %v500 = vld [vmem:[#allocation5 + $0xb08] sm:$0xff]
    %v501 = vld [vmem:[#allocation5 + $0xb10] sm:$0xff]
    %v502 = vld [vmem:[#allocation5 + $0xb18] sm:$0xff]
    %v503 = vld [vmem:[#allocation5 + $0xb20] sm:$0xff]
    %v504 = vld [vmem:[#allocation5 + $0xb28] sm:$0xff]
    %v505 = vld [vmem:[#allocation5 + $0xb30] sm:$0xff]
    %v506 = vld [vmem:[#allocation5 + $0xb38] sm:$0xff]
    %v507 = vld [vmem:[#allocation5 + $0xb40] sm:$0xff]
    %v508 = vld [vmem:[#allocation5 + $0xb48] sm:$0xff]
    %v509 = vld [vmem:[#allocation5 + $0xb50] sm:$0xff]
    %v510 = vld [vmem:[#allocation5 + $0xb58] sm:$0xff]
    %v511 = vld [vmem:[#allocation5 + $0xb60] sm:$0xff]
    %v512 = vld [vmem:[#allocation5 + $0xb68] sm:$0xff]
    %v513 = vld [vmem:[#allocation5 + $0xb70] sm:$0xff]
    %v514 = vld [vmem:[#allocation5 + $0xb78] sm:$0xff]
    %v515 = vld [vmem:[#allocation5 + $0xb80] sm:$0xff]
    %v516 = vld [vmem:[#allocation5 + $0xb88] sm:$0xff]
    %v517 = vld [vmem:[#allocation5 + $0xb90] sm:$0xff]
    %v518 = vld [vmem:[#allocation5 + $0xb98] sm:$0xff]
    %v519 = vld [vmem:[#allocation5 + $0xba0] sm:$0xff]
    %v520 = vld [vmem:[#allocation5 + $0xba8] sm:$0xff]
    %v521 = vld [vmem:[#allocation5 + $0xbb0] sm:$0xff]
    %v522 = vld [vmem:[#allocation5 + $0xbb8] sm:$0xff]
    %v523 = vld [vmem:[#allocation5 + $0xbc0] sm:$0xff]
    %v524 = vld [vmem:[#allocation5 + $0xbc8] sm:$0xff]
    %v525 = vld [vmem:[#allocation5 + $0xbd0] sm:$0xff]
    %v526 = vld [vmem:[#allocation5 + $0xbd8] sm:$0xff]
    %v527 = vld [vmem:[#allocation5 + $0xbe0] sm:$0xff]
    %v528 = vld [vmem:[#allocation5 + $0xbe8] sm:$0xff]
    %v529 = vld [vmem:[#allocation5 + $0xbf0] sm:$0xff]
    %v530 = vld [vmem:[#allocation5 + $0xbf8] sm:$0xff]
    %v531 = vld [vmem:[#allocation5 + $0xc00] sm:$0xff]
    %v532 = vld [vmem:[#allocation5 + $0xc08] sm:$0xff]
    %v533 = vld [vmem:[#allocation5 + $0xc10] sm:$0xff]
    %v534 = vld [vmem:[#allocation5 + $0xc18] sm:$0xff]
    %v535 = vld [vmem:[#allocation5 + $0xc20] sm:$0xff]
    %v536 = vld [vmem:[#allocation5 + $0xc28] sm:$0xff]
    %v537 = vld [vmem:[#allocation5 + $0xc30] sm:$0xff]
    %v538 = vld [vmem:[#allocation5 + $0xc38] sm:$0xff]
    %v539 = vld [vmem:[#allocation5 + $0xc40] sm:$0xff]
    %v540 = vld [vmem:[#allocation5 + $0xc48] sm:$0xff]
    %v541 = vld [vmem:[#allocation5 + $0xc50] sm:$0xff]
    %v542 = vld [vmem:[#allocation5 + $0xc58] sm:$0xff]
    %v543 = vld [vmem:[#allocation5 + $0xc60] sm:$0xff]
    %v544 = vld [vmem:[#allocation5 + $0xc68] sm:$0xff]
    %v545 = vld [vmem:[#allocation5 + $0xc70] sm:$0xff]
    %v546 = vld [vmem:[#allocation5 + $0xc78] sm:$0xff]
    %v547 = vld [vmem:[#allocation7] sm:$0xff]
    %v549 = vperm.slane %v547, 0
    %v550 = vperm.slane %v547, 1
    %v551 = vperm.slane %v547, 2
    %v552 = vperm.slane %v547, 3
    %v553 = vperm.slane %v547, 4
    %v554 = vperm.slane %v547, 5
    %v555 = vperm.slane %v547, 6
    %v556 = vperm.slane %v547, 7
    %v965 = vunpack.c.l.b16 %v147
    %v966 = vunpack.c.h.b16 %v147
    %v967 = vunpack.c.l.b16 %v148
    %v968 = vunpack.c.h.b16 %v148
    %v969 = vunpack.c.l.b16 %v149
    %v970 = vunpack.c.h.b16 %v149
    %v971 = vunpack.c.l.b16 %v150
    %v972 = vunpack.c.h.b16 %v150
    %v973 = vunpack.c.l.b16 %v151
    %v974 = vunpack.c.h.b16 %v151
    %v975 = vunpack.c.l.b16 %v152
    %v976 = vunpack.c.h.b16 %v152
    %v977 = vunpack.c.l.b16 %v153
    %v978 = vunpack.c.h.b16 %v153
    %v979 = vunpack.c.l.b16 %v154
    %v980 = vunpack.c.h.b16 %v154
    %v981 = vunpack.c.l.b16 %v155
    %v982 = vunpack.c.h.b16 %v155
    %v983 = vunpack.c.l.b16 %v156
    %v984 = vunpack.c.h.b16 %v156
    %v985 = vunpack.c.l.b16 %v157
    %v986 = vunpack.c.h.b16 %v157
    %v987 = vunpack.c.l.b16 %v158
    %v988 = vunpack.c.h.b16 %v158
    %v989 = vunpack.c.l.b16 %v159
    %v990 = vunpack.c.h.b16 %v159
    %v991 = vunpack.c.l.b16 %v160
    %v992 = vunpack.c.h.b16 %v160
    %v993 = vunpack.c.l.b16 %v161
    %v994 = vunpack.c.h.b16 %v161
    %v995 = vunpack.c.l.b16 %v162
    %v996 = vunpack.c.h.b16 %v162
    %v997 = vunpack.c.l.b16 %v163
    %v998 = vunpack.c.h.b16 %v163
    %v999 = vunpack.c.l.b16 %v164
    %v1000 = vunpack.c.h.b16 %v164
    %v1001 = vunpack.c.l.b16 %v165
    %v1002 = vunpack.c.h.b16 %v165
    %v1003 = vunpack.c.l.b16 %v166
    %v1004 = vunpack.c.h.b16 %v166
    %v1005 = vunpack.c.l.b16 %v167
    %v1006 = vunpack.c.h.b16 %v167
    %v1007 = vunpack.c.l.b16 %v168
    %v1008 = vunpack.c.h.b16 %v168
    %v1009 = vunpack.c.l.b16 %v169
    %v1010 = vunpack.c.h.b16 %v169
    %v1011 = vunpack.c.l.b16 %v170
    %v1012 = vunpack.c.h.b16 %v170
    %v1013 = vunpack.c.l.b16 %v171
    %v1014 = vunpack.c.h.b16 %v171
    %v1015 = vunpack.c.l.b16 %v172
    %v1016 = vunpack.c.h.b16 %v172
    %v1017 = vunpack.c.l.b16 %v173
    %v1018 = vunpack.c.h.b16 %v173
    %v1019 = vunpack.c.l.b16 %v174
    %v1020 = vunpack.c.h.b16 %v174
    %v1021 = vunpack.c.l.b16 %v175
    %v1022 = vunpack.c.h.b16 %v175
    %v1023 = vunpack.c.l.b16 %v176
    %v1024 = vunpack.c.h.b16 %v176
    %v1025 = vunpack.c.l.b16 %v177
    %v1026 = vunpack.c.h.b16 %v177
    %v1027 = vunpack.c.l.b16 %v178
    %v1028 = vunpack.c.h.b16 %v178
    %v1029 = vunpack.c.l.b16 %v179
    %v1030 = vunpack.c.h.b16 %v179
    %v1031 = vunpack.c.l.b16 %v180
    %v1032 = vunpack.c.h.b16 %v180
    %v1033 = vunpack.c.l.b16 %v181
    %v1034 = vunpack.c.h.b16 %v181
    %v1035 = vunpack.c.l.b16 %v182
    %v1036 = vunpack.c.h.b16 %v182
    %v1037 = vunpack.c.l.b16 %v183
    %v1038 = vunpack.c.h.b16 %v183
    %v1039 = vunpack.c.l.b16 %v184
    %v1040 = vunpack.c.h.b16 %v184
    %v1041 = vunpack.c.l.b16 %v185
    %v1042 = vunpack.c.h.b16 %v185
    %v1043 = vunpack.c.l.b16 %v186
    %v1044 = vunpack.c.h.b16 %v186
    %v1045 = vunpack.c.l.b16 %v187
    %v1046 = vunpack.c.h.b16 %v187
    %v1047 = vunpack.c.l.b16 %v188
    %v1048 = vunpack.c.h.b16 %v188
    %v1049 = vunpack.c.l.b16 %v189
    %v1050 = vunpack.c.h.b16 %v189
    %v1051 = vunpack.c.l.b16 %v190
    %v1052 = vunpack.c.h.b16 %v190
    %v1053 = vunpack.c.l.b16 %v191
    %v1054 = vunpack.c.h.b16 %v191
    %v1055 = vunpack.c.l.b16 %v192
    %v1056 = vunpack.c.h.b16 %v192
    %v1057 = vunpack.c.l.b16 %v193
    %v1058 = vunpack.c.h.b16 %v193
    %v1059 = vunpack.c.l.b16 %v194
    %v1060 = vunpack.c.h.b16 %v194
    %v1061 = vunpack.c.l.b16 %v195
    %v1062 = vunpack.c.h.b16 %v195
    %v1063 = vunpack.c.l.b16 %v196
    %v1064 = vunpack.c.h.b16 %v196
    %v1065 = vunpack.c.l.b16 %v197
    %v1066 = vunpack.c.h.b16 %v197
    %v1067 = vunpack.c.l.b16 %v198
    %v1068 = vunpack.c.h.b16 %v198
    %v1069 = vunpack.c.l.b16 %v199
    %v1070 = vunpack.c.h.b16 %v199
    %v1071 = vunpack.c.l.b16 %v200
    %v1072 = vunpack.c.h.b16 %v200
    %v1073 = vunpack.c.l.b16 %v201
    %v1074 = vunpack.c.h.b16 %v201
    %v1075 = vunpack.c.l.b16 %v202
    %v1076 = vunpack.c.h.b16 %v202
    %v1077 = vunpack.c.l.b16 %v203
    %v1078 = vunpack.c.h.b16 %v203
    %v1079 = vunpack.c.l.b16 %v204
    %v1080 = vunpack.c.h.b16 %v204
    %v1081 = vunpack.c.l.b16 %v205
    %v1082 = vunpack.c.h.b16 %v205
    %v1083 = vunpack.c.l.b16 %v206
    %v1084 = vunpack.c.h.b16 %v206
    %v1085 = vunpack.c.l.b16 %v207
    %v1086 = vunpack.c.h.b16 %v207
    %v1087 = vunpack.c.l.b16 %v208
    %v1088 = vunpack.c.h.b16 %v208
    %v1089 = vunpack.c.l.b16 %v209
    %v1090 = vunpack.c.h.b16 %v209
    %v1091 = vunpack.c.l.b16 %v210
    %v1092 = vunpack.c.h.b16 %v210
    %v1093 = vunpack.c.l.b16 %v211
    %v1094 = vunpack.c.h.b16 %v211
    %v1095 = vunpack.c.l.b16 %v212
    %v1096 = vunpack.c.h.b16 %v212
    %v1097 = vunpack.c.l.b16 %v213
    %v1098 = vunpack.c.h.b16 %v213
    %v1099 = vunpack.c.l.b16 %v214
    %v1100 = vunpack.c.h.b16 %v214
    %v1101 = vunpack.c.l.b16 %v215
    %v1102 = vunpack.c.h.b16 %v215
    %v1103 = vunpack.c.l.b16 %v216
    %v1104 = vunpack.c.h.b16 %v216
    %v1105 = vunpack.c.l.b16 %v217
    %v1106 = vunpack.c.h.b16 %v217
    %v1107 = vunpack.c.l.b16 %v218
    %v1108 = vunpack.c.h.b16 %v218
    %v1109 = vunpack.c.l.b16 %v219
    %v1110 = vunpack.c.h.b16 %v219
    %v1111 = vunpack.c.l.b16 %v220
    %v1112 = vunpack.c.h.b16 %v220
    %v1113 = vunpack.c.l.b16 %v221
    %v1114 = vunpack.c.h.b16 %v221
    %v1115 = vunpack.c.l.b16 %v222
    %v1116 = vunpack.c.h.b16 %v222
    %v1117 = vunpack.c.l.b16 %v223
    %v1118 = vunpack.c.h.b16 %v223
    %v1119 = vunpack.c.l.b16 %v224
    %v1120 = vunpack.c.h.b16 %v224
    %v1121 = vunpack.c.l.b16 %v225
    %v1122 = vunpack.c.h.b16 %v225
    %v1123 = vunpack.c.l.b16 %v226
    %v1124 = vunpack.c.h.b16 %v226
    %v1125 = vunpack.c.l.b16 %v227
    %v1126 = vunpack.c.h.b16 %v227
    %v1127 = vunpack.c.l.b16 %v228
    %v1128 = vunpack.c.h.b16 %v228
    %v1129 = vunpack.c.l.b16 %v229
    %v1130 = vunpack.c.h.b16 %v229
    %v1131 = vunpack.c.l.b16 %v230
    %v1132 = vunpack.c.h.b16 %v230
    %v1133 = vunpack.c.l.b16 %v231
    %v1134 = vunpack.c.h.b16 %v231
    %v1135 = vunpack.c.l.b16 %v232
    %v1136 = vunpack.c.h.b16 %v232
    %v1137 = vunpack.c.l.b16 %v233
    %v1138 = vunpack.c.h.b16 %v233
    %v1139 = vunpack.c.l.b16 %v234
    %v1140 = vunpack.c.h.b16 %v234
    %v1141 = vunpack.c.l.b16 %v235
    %v1142 = vunpack.c.h.b16 %v235
    %v1143 = vunpack.c.l.b16 %v236
    %v1144 = vunpack.c.h.b16 %v236
    %v1145 = vunpack.c.l.b16 %v237
    %v1146 = vunpack.c.h.b16 %v237
    %v1147 = vunpack.c.l.b16 %v238
    %v1148 = vunpack.c.h.b16 %v238
    %v1149 = vunpack.c.l.b16 %v239
    %v1150 = vunpack.c.h.b16 %v239
    %v1151 = vunpack.c.l.b16 %v240
    %v1152 = vunpack.c.h.b16 %v240
    %v1153 = vunpack.c.l.b16 %v241
    %v1154 = vunpack.c.h.b16 %v241
    %v1155 = vunpack.c.l.b16 %v242
    %v1156 = vunpack.c.h.b16 %v242
    %v1157 = vunpack.c.l.b16 %v243
    %v1158 = vunpack.c.h.b16 %v243
    %v1159 = vunpack.c.l.b16 %v244
    %v1160 = vunpack.c.h.b16 %v244
    %v1161 = vunpack.c.l.b16 %v245
    %v1162 = vunpack.c.h.b16 %v245
    %v1163 = vunpack.c.l.b16 %v246
    %v1164 = vunpack.c.h.b16 %v246
    %v1165 = vunpack.c.l.b16 %v247
    %v1166 = vunpack.c.h.b16 %v247
    %v1167 = vunpack.c.l.b16 %v248
    %v1168 = vunpack.c.h.b16 %v248
    %v1169 = vunpack.c.l.b16 %v249
    %v1170 = vunpack.c.h.b16 %v249
    %v1171 = vunpack.c.l.b16 %v250
    %v1172 = vunpack.c.h.b16 %v250
    %v1173 = vunpack.c.l.b16 %v251
    %v1174 = vunpack.c.h.b16 %v251
    %v1175 = vunpack.c.l.b16 %v252
    %v1176 = vunpack.c.h.b16 %v252
    %v1177 = vunpack.c.l.b16 %v253
    %v1178 = vunpack.c.h.b16 %v253
    %v1179 = vunpack.c.l.b16 %v254
    %v1180 = vunpack.c.h.b16 %v254
    %v1181 = vunpack.c.l.b16 %v255
    %v1182 = vunpack.c.h.b16 %v255
    %v1183 = vunpack.c.l.b16 %v256
    %v1184 = vunpack.c.h.b16 %v256
    %v1185 = vunpack.c.l.b16 %v257
    %v1186 = vunpack.c.h.b16 %v257
    %v1187 = vunpack.c.l.b16 %v258
    %v1188 = vunpack.c.h.b16 %v258
    %v1189 = vunpack.c.l.b16 %v259
    %v1190 = vunpack.c.h.b16 %v259
    %v1191 = vunpack.c.l.b16 %v260
    %v1192 = vunpack.c.h.b16 %v260
    %v1193 = vunpack.c.l.b16 %v261
    %v1194 = vunpack.c.h.b16 %v261
    %v1195 = vunpack.c.l.b16 %v262
    %v1196 = vunpack.c.h.b16 %v262
    %v1197 = vunpack.c.l.b16 %v263
    %v1198 = vunpack.c.h.b16 %v263
    %v1199 = vunpack.c.l.b16 %v264
    %v1200 = vunpack.c.h.b16 %v264
    %v1201 = vunpack.c.l.b16 %v265
    %v1202 = vunpack.c.h.b16 %v265
    %v1203 = vunpack.c.l.b16 %v266
    %v1204 = vunpack.c.h.b16 %v266
    %v1205 = vunpack.c.l.b16 %v267
    %v1206 = vunpack.c.h.b16 %v267
    %v1207 = vunpack.c.l.b16 %v268
    %v1208 = vunpack.c.h.b16 %v268
    %v1209 = vunpack.c.l.b16 %v269
    %v1210 = vunpack.c.h.b16 %v269
    %v1211 = vunpack.c.l.b16 %v270
    %v1212 = vunpack.c.h.b16 %v270
    %v1213 = vunpack.c.l.b16 %v271
    %v1214 = vunpack.c.h.b16 %v271
    %v1215 = vunpack.c.l.b16 %v272
    %v1216 = vunpack.c.h.b16 %v272
    %v1217 = vunpack.c.l.b16 %v273
    %v1218 = vunpack.c.h.b16 %v273
    %v1219 = vunpack.c.l.b16 %v274
    %v1220 = vunpack.c.h.b16 %v274
    %v1221 = vunpack.c.l.b16 %v275
    %v1222 = vunpack.c.h.b16 %v275
    %v1223 = vunpack.c.l.b16 %v276
    %v1224 = vunpack.c.h.b16 %v276
    %v1225 = vunpack.c.l.b16 %v277
    %v1226 = vunpack.c.h.b16 %v277
    %v1227 = vunpack.c.l.b16 %v278
    %v1228 = vunpack.c.h.b16 %v278
    %v1229 = vunpack.c.l.b16 %v279
    %v1230 = vunpack.c.h.b16 %v279
    %v1231 = vunpack.c.l.b16 %v280
    %v1232 = vunpack.c.h.b16 %v280
    %v1233 = vunpack.c.l.b16 %v281
    %v1234 = vunpack.c.h.b16 %v281
    %v1235 = vunpack.c.l.b16 %v282
    %v1236 = vunpack.c.h.b16 %v282
    %v1237 = vunpack.c.l.b16 %v283
    %v1238 = vunpack.c.h.b16 %v283
    %v1239 = vunpack.c.l.b16 %v284
    %v1240 = vunpack.c.h.b16 %v284
    %v1241 = vunpack.c.l.b16 %v285
    %v1242 = vunpack.c.h.b16 %v285
    %v1243 = vunpack.c.l.b16 %v286
    %v1244 = vunpack.c.h.b16 %v286
    %v1245 = vunpack.c.l.b16 %v287
    %v1246 = vunpack.c.h.b16 %v287
    %v1247 = vunpack.c.l.b16 %v288
    %v1248 = vunpack.c.h.b16 %v288
    %v1249 = vunpack.c.l.b16 %v289
    %v1250 = vunpack.c.h.b16 %v289
    %v1251 = vunpack.c.l.b16 %v290
    %v1252 = vunpack.c.h.b16 %v290
    %v1253 = vunpack.c.l.b16 %v291
    %v1254 = vunpack.c.h.b16 %v291
    %v1255 = vunpack.c.l.b16 %v292
    %v1256 = vunpack.c.h.b16 %v292
    %v1257 = vunpack.c.l.b16 %v293
    %v1258 = vunpack.c.h.b16 %v293
    %v1259 = vunpack.c.l.b16 %v294
    %v1260 = vunpack.c.h.b16 %v294
    %v1261 = vunpack.c.l.b16 %v295
    %v1262 = vunpack.c.h.b16 %v295
    %v1263 = vunpack.c.l.b16 %v296
    %v1264 = vunpack.c.h.b16 %v296
    %v1265 = vunpack.c.l.b16 %v297
    %v1266 = vunpack.c.h.b16 %v297
    %v1267 = vunpack.c.l.b16 %v298
    %v1268 = vunpack.c.h.b16 %v298
    %v1269 = vunpack.c.l.b16 %v299
    %v1270 = vunpack.c.h.b16 %v299
    %v1271 = vunpack.c.l.b16 %v300
    %v1272 = vunpack.c.h.b16 %v300
    %v1273 = vunpack.c.l.b16 %v301
    %v1274 = vunpack.c.h.b16 %v301
    %v1275 = vunpack.c.l.b16 %v302
    %v1276 = vunpack.c.h.b16 %v302
    %v1277 = vunpack.c.l.b16 %v303
    %v1278 = vunpack.c.h.b16 %v303
    %v1279 = vunpack.c.l.b16 %v304
    %v1280 = vunpack.c.h.b16 %v304
    %v1281 = vunpack.c.l.b16 %v305
    %v1282 = vunpack.c.h.b16 %v305
    %v1283 = vunpack.c.l.b16 %v306
    %v1284 = vunpack.c.h.b16 %v306
    %v1285 = vunpack.c.l.b16 %v307
    %v1286 = vunpack.c.h.b16 %v307
    %v1287 = vunpack.c.l.b16 %v308
    %v1288 = vunpack.c.h.b16 %v308
    %v1289 = vunpack.c.l.b16 %v309
    %v1290 = vunpack.c.h.b16 %v309
    %v1291 = vunpack.c.l.b16 %v310
    %v1292 = vunpack.c.h.b16 %v310
    %v1293 = vunpack.c.l.b16 %v311
    %v1294 = vunpack.c.h.b16 %v311
    %v1295 = vunpack.c.l.b16 %v312
    %v1296 = vunpack.c.h.b16 %v312
    %v1297 = vunpack.c.l.b16 %v313
    %v1298 = vunpack.c.h.b16 %v313
    %v1299 = vunpack.c.l.b16 %v314
    %v1300 = vunpack.c.h.b16 %v314
    %v1301 = vunpack.c.l.b16 %v315
    %v1302 = vunpack.c.h.b16 %v315
    %v1303 = vunpack.c.l.b16 %v316
    %v1304 = vunpack.c.h.b16 %v316
    %v1305 = vunpack.c.l.b16 %v317
    %v1306 = vunpack.c.h.b16 %v317
    %v1307 = vunpack.c.l.b16 %v318
    %v1308 = vunpack.c.h.b16 %v318
    %v1309 = vunpack.c.l.b16 %v319
    %v1310 = vunpack.c.h.b16 %v319
    %v1311 = vunpack.c.l.b16 %v320
    %v1312 = vunpack.c.h.b16 %v320
    %v1313 = vunpack.c.l.b16 %v321
    %v1314 = vunpack.c.h.b16 %v321
    %v1315 = vunpack.c.l.b16 %v322
    %v1316 = vunpack.c.h.b16 %v322
    %v1317 = vunpack.c.l.b16 %v323
    %v1318 = vunpack.c.h.b16 %v323
    %v1319 = vunpack.c.l.b16 %v324
    %v1320 = vunpack.c.h.b16 %v324
    %v1321 = vunpack.c.l.b16 %v325
    %v1322 = vunpack.c.h.b16 %v325
    %v1323 = vunpack.c.l.b16 %v326
    %v1324 = vunpack.c.h.b16 %v326
    %v1325 = vunpack.c.l.b16 %v327
    %v1326 = vunpack.c.h.b16 %v327
    %v1327 = vunpack.c.l.b16 %v328
    %v1328 = vunpack.c.h.b16 %v328
    %v1329 = vunpack.c.l.b16 %v329
    %v1330 = vunpack.c.h.b16 %v329
    %v1331 = vunpack.c.l.b16 %v330
    %v1332 = vunpack.c.h.b16 %v330
    %v1333 = vunpack.c.l.b16 %v331
    %v1334 = vunpack.c.h.b16 %v331
    %v1335 = vunpack.c.l.b16 %v332
    %v1336 = vunpack.c.h.b16 %v332
    %v1337 = vunpack.c.l.b16 %v333
    %v1338 = vunpack.c.h.b16 %v333
    %v1339 = vunpack.c.l.b16 %v334
    %v1340 = vunpack.c.h.b16 %v334
    %v1341 = vunpack.c.l.b16 %v335
    %v1342 = vunpack.c.h.b16 %v335
    %v1343 = vunpack.c.l.b16 %v336
    %v1344 = vunpack.c.h.b16 %v336
    %v1345 = vunpack.c.l.b16 %v337
    %v1346 = vunpack.c.h.b16 %v337
    %v1347 = vunpack.c.l.b16 %v338
    %v1348 = vunpack.c.h.b16 %v338
    %v1349 = vunpack.c.l.b16 %v339
    %v1350 = vunpack.c.h.b16 %v339
    %v1351 = vunpack.c.l.b16 %v340
    %v1352 = vunpack.c.h.b16 %v340
    %v1353 = vunpack.c.l.b16 %v341
    %v1354 = vunpack.c.h.b16 %v341
    %v1355 = vunpack.c.l.b16 %v342
    %v1356 = vunpack.c.h.b16 %v342
    %v1357 = vunpack.c.l.b16 %v343
    %v1358 = vunpack.c.h.b16 %v343
    %v1359 = vunpack.c.l.b16 %v344
    %v1360 = vunpack.c.h.b16 %v344
    %v1361 = vunpack.c.l.b16 %v345
    %v1362 = vunpack.c.h.b16 %v345
    %v1363 = vunpack.c.l.b16 %v346
    %v1364 = vunpack.c.h.b16 %v346
    %v1365 = vunpack.c.l.b16 %v347
    %v1366 = vunpack.c.h.b16 %v347
    %v1367 = vunpack.c.l.b16 %v348
    %v1368 = vunpack.c.h.b16 %v348
    %v1369 = vunpack.c.l.b16 %v349
    %v1370 = vunpack.c.h.b16 %v349
    %v1371 = vunpack.c.l.b16 %v350
    %v1372 = vunpack.c.h.b16 %v350
    %v1373 = vunpack.c.l.b16 %v351
    %v1374 = vunpack.c.h.b16 %v351
    %v1375 = vunpack.c.l.b16 %v352
    %v1376 = vunpack.c.h.b16 %v352
    %v1377 = vunpack.c.l.b16 %v353
    %v1378 = vunpack.c.h.b16 %v353
    %v1379 = vunpack.c.l.b16 %v354
    %v1380 = vunpack.c.h.b16 %v354
    %v1381 = vunpack.c.l.b16 %v355
    %v1382 = vunpack.c.h.b16 %v355
    %v1383 = vunpack.c.l.b16 %v356
    %v1384 = vunpack.c.h.b16 %v356
    %v1385 = vunpack.c.l.b16 %v357
    %v1386 = vunpack.c.h.b16 %v357
    %v1387 = vunpack.c.l.b16 %v358
    %v1388 = vunpack.c.h.b16 %v358
    %v1389 = vunpack.c.l.b16 %v359
    %v1390 = vunpack.c.h.b16 %v359
    %v1391 = vunpack.c.l.b16 %v360
    %v1392 = vunpack.c.h.b16 %v360
    %v1393 = vunpack.c.l.b16 %v361
    %v1394 = vunpack.c.h.b16 %v361
    %v1395 = vunpack.c.l.b16 %v362
    %v1396 = vunpack.c.h.b16 %v362
    %v1397 = vunpack.c.l.b16 %v363
    %v1398 = vunpack.c.h.b16 %v363
    %v1399 = vunpack.c.l.b16 %v364
    %v1400 = vunpack.c.h.b16 %v364
    %v1401 = vunpack.c.l.b16 %v365
    %v1402 = vunpack.c.h.b16 %v365
    %v1403 = vunpack.c.l.b16 %v366
    %v1404 = vunpack.c.h.b16 %v366
    %v1405 = vunpack.c.l.b16 %v367
    %v1406 = vunpack.c.h.b16 %v367
    %v1407 = vunpack.c.l.b16 %v368
    %v1408 = vunpack.c.h.b16 %v368
    %v1409 = vunpack.c.l.b16 %v369
    %v1410 = vunpack.c.h.b16 %v369
    %v1411 = vunpack.c.l.b16 %v370
    %v1412 = vunpack.c.h.b16 %v370
    %v1413 = vunpack.c.l.b16 %v371
    %v1414 = vunpack.c.h.b16 %v371
    %v1415 = vunpack.c.l.b16 %v372
    %v1416 = vunpack.c.h.b16 %v372
    %v1417 = vunpack.c.l.b16 %v373
    %v1418 = vunpack.c.h.b16 %v373
    %v1419 = vunpack.c.l.b16 %v374
    %v1420 = vunpack.c.h.b16 %v374
    %v1421 = vunpack.c.l.b16 %v375
    %v1422 = vunpack.c.h.b16 %v375
    %v1423 = vunpack.c.l.b16 %v376
    %v1424 = vunpack.c.h.b16 %v376
    %v1425 = vunpack.c.l.b16 %v377
    %v1426 = vunpack.c.h.b16 %v377
    %v1427 = vunpack.c.l.b16 %v378
    %v1428 = vunpack.c.h.b16 %v378
    %v1429 = vunpack.c.l.b16 %v379
    %v1430 = vunpack.c.h.b16 %v379
    %v1431 = vunpack.c.l.b16 %v380
    %v1432 = vunpack.c.h.b16 %v380
    %v1433 = vunpack.c.l.b16 %v381
    %v1434 = vunpack.c.h.b16 %v381
    %v1435 = vunpack.c.l.b16 %v382
    %v1436 = vunpack.c.h.b16 %v382
    %v1437 = vunpack.c.l.b16 %v383
    %v1438 = vunpack.c.h.b16 %v383
    %v1439 = vunpack.c.l.b16 %v384
    %v1440 = vunpack.c.h.b16 %v384
    %v1441 = vunpack.c.l.b16 %v385
    %v1442 = vunpack.c.h.b16 %v385
    %v1443 = vunpack.c.l.b16 %v386
    %v1444 = vunpack.c.h.b16 %v386
    %v1445 = vunpack.c.l.b16 %v387
    %v1446 = vunpack.c.h.b16 %v387
    %v1447 = vunpack.c.l.b16 %v388
    %v1448 = vunpack.c.h.b16 %v388
    %v1449 = vunpack.c.l.b16 %v389
    %v1450 = vunpack.c.h.b16 %v389
    %v1451 = vunpack.c.l.b16 %v390
    %v1452 = vunpack.c.h.b16 %v390
    %v1453 = vunpack.c.l.b16 %v391
    %v1454 = vunpack.c.h.b16 %v391
    %v1455 = vunpack.c.l.b16 %v392
    %v1456 = vunpack.c.h.b16 %v392
    %v1457 = vunpack.c.l.b16 %v393
    %v1458 = vunpack.c.h.b16 %v393
    %v1459 = vunpack.c.l.b16 %v394
    %v1460 = vunpack.c.h.b16 %v394
    %v1461 = vunpack.c.l.b16 %v395
    %v1462 = vunpack.c.h.b16 %v395
    %v1463 = vunpack.c.l.b16 %v396
    %v1464 = vunpack.c.h.b16 %v396
    %v1465 = vunpack.c.l.b16 %v397
    %v1466 = vunpack.c.h.b16 %v397
    %v1467 = vunpack.c.l.b16 %v398
    %v1468 = vunpack.c.h.b16 %v398
    %v1469 = vunpack.c.l.b16 %v399
    %v1470 = vunpack.c.h.b16 %v399
    %v1471 = vunpack.c.l.b16 %v400
    %v1472 = vunpack.c.h.b16 %v400
    %v1473 = vunpack.c.l.b16 %v401
    %v1474 = vunpack.c.h.b16 %v401
    %v1475 = vunpack.c.l.b16 %v402
    %v1476 = vunpack.c.h.b16 %v402
    %v1477 = vunpack.c.l.b16 %v403
    %v1478 = vunpack.c.h.b16 %v403
    %v1479 = vunpack.c.l.b16 %v404
    %v1480 = vunpack.c.h.b16 %v404
    %v1481 = vunpack.c.l.b16 %v405
    %v1482 = vunpack.c.h.b16 %v405
    %v1483 = vunpack.c.l.b16 %v406
    %v1484 = vunpack.c.h.b16 %v406
    %v1485 = vunpack.c.l.b16 %v407
    %v1486 = vunpack.c.h.b16 %v407
    %v1487 = vunpack.c.l.b16 %v408
    %v1488 = vunpack.c.h.b16 %v408
    %v1489 = vunpack.c.l.b16 %v409
    %v1490 = vunpack.c.h.b16 %v409
    %v1491 = vunpack.c.l.b16 %v410
    %v1492 = vunpack.c.h.b16 %v410
    %v1493 = vunpack.c.l.b16 %v411
    %v1494 = vunpack.c.h.b16 %v411
    %v1495 = vunpack.c.l.b16 %v412
    %v1496 = vunpack.c.h.b16 %v412
    %v1497 = vunpack.c.l.b16 %v413
    %v1498 = vunpack.c.h.b16 %v413
    %v1499 = vunpack.c.l.b16 %v414
    %v1500 = vunpack.c.h.b16 %v414
    %v1501 = vunpack.c.l.b16 %v415
    %v1502 = vunpack.c.h.b16 %v415
    %v1503 = vunpack.c.l.b16 %v416
    %v1504 = vunpack.c.h.b16 %v416
    %v1505 = vunpack.c.l.b16 %v417
    %v1506 = vunpack.c.h.b16 %v417
    %v1507 = vunpack.c.l.b16 %v418
    %v1508 = vunpack.c.h.b16 %v418
    %v1509 = vunpack.c.l.b16 %v419
    %v1510 = vunpack.c.h.b16 %v419
    %v1511 = vunpack.c.l.b16 %v420
    %v1512 = vunpack.c.h.b16 %v420
    %v1513 = vunpack.c.l.b16 %v421
    %v1514 = vunpack.c.h.b16 %v421
    %v1515 = vunpack.c.l.b16 %v422
    %v1516 = vunpack.c.h.b16 %v422
    %v1517 = vunpack.c.l.b16 %v423
    %v1518 = vunpack.c.h.b16 %v423
    %v1519 = vunpack.c.l.b16 %v424
    %v1520 = vunpack.c.h.b16 %v424
    %v1521 = vunpack.c.l.b16 %v425
    %v1522 = vunpack.c.h.b16 %v425
    %v1523 = vunpack.c.l.b16 %v426
    %v1524 = vunpack.c.h.b16 %v426
    %v1525 = vunpack.c.l.b16 %v427
    %v1526 = vunpack.c.h.b16 %v427
    %v1527 = vunpack.c.l.b16 %v428
    %v1528 = vunpack.c.h.b16 %v428
    %v1529 = vunpack.c.l.b16 %v429
    %v1530 = vunpack.c.h.b16 %v429
    %v1531 = vunpack.c.l.b16 %v430
    %v1532 = vunpack.c.h.b16 %v430
    %v1533 = vunpack.c.l.b16 %v431
    %v1534 = vunpack.c.h.b16 %v431
    %v1535 = vunpack.c.l.b16 %v432
    %v1536 = vunpack.c.h.b16 %v432
    %v1537 = vunpack.c.l.b16 %v433
    %v1538 = vunpack.c.h.b16 %v433
    %v1539 = vunpack.c.l.b16 %v434
    %v1540 = vunpack.c.h.b16 %v434
    %v1541 = vunpack.c.l.b16 %v435
    %v1542 = vunpack.c.h.b16 %v435
    %v1543 = vunpack.c.l.b16 %v436
    %v1544 = vunpack.c.h.b16 %v436
    %v1545 = vunpack.c.l.b16 %v437
    %v1546 = vunpack.c.h.b16 %v437
    %v1547 = vunpack.c.l.b16 %v438
    %v1548 = vunpack.c.h.b16 %v438
    %v1549 = vunpack.c.l.b16 %v439
    %v1550 = vunpack.c.h.b16 %v439
    %v1551 = vunpack.c.l.b16 %v440
    %v1552 = vunpack.c.h.b16 %v440
    %v1553 = vunpack.c.l.b16 %v441
    %v1554 = vunpack.c.h.b16 %v441
    %v1555 = vunpack.c.l.b16 %v442
    %v1556 = vunpack.c.h.b16 %v442
    %v1557 = vunpack.c.l.b16 %v443
    %v1558 = vunpack.c.h.b16 %v443
    %v1559 = vunpack.c.l.b16 %v444
    %v1560 = vunpack.c.h.b16 %v444
    %v1561 = vunpack.c.l.b16 %v445
    %v1562 = vunpack.c.h.b16 %v445
    %v1563 = vunpack.c.l.b16 %v446
    %v1564 = vunpack.c.h.b16 %v446
    %v1565 = vunpack.c.l.b16 %v447
    %v1566 = vunpack.c.h.b16 %v447
    %v1567 = vunpack.c.l.b16 %v448
    %v1568 = vunpack.c.h.b16 %v448
    %v1569 = vunpack.c.l.b16 %v449
    %v1570 = vunpack.c.h.b16 %v449
    %v1571 = vunpack.c.l.b16 %v450
    %v1572 = vunpack.c.h.b16 %v450
    %v1573 = vunpack.c.l.b16 %v451
    %v1574 = vunpack.c.h.b16 %v451
    %v1575 = vunpack.c.l.b16 %v452
    %v1576 = vunpack.c.h.b16 %v452
    %v1577 = vunpack.c.l.b16 %v453
    %v1578 = vunpack.c.h.b16 %v453
    %v1579 = vunpack.c.l.b16 %v454
    %v1580 = vunpack.c.h.b16 %v454
    %v1581 = vunpack.c.l.b16 %v455
    %v1582 = vunpack.c.h.b16 %v455
    %v1583 = vunpack.c.l.b16 %v456
    %v1584 = vunpack.c.h.b16 %v456
    %v1585 = vunpack.c.l.b16 %v457
    %v1586 = vunpack.c.h.b16 %v457
    %v1587 = vunpack.c.l.b16 %v458
    %v1588 = vunpack.c.h.b16 %v458
    %v1589 = vunpack.c.l.b16 %v459
    %v1590 = vunpack.c.h.b16 %v459
    %v1591 = vunpack.c.l.b16 %v460
    %v1592 = vunpack.c.h.b16 %v460
    %v1593 = vunpack.c.l.b16 %v461
    %v1594 = vunpack.c.h.b16 %v461
    %v1595 = vunpack.c.l.b16 %v462
    %v1596 = vunpack.c.h.b16 %v462
    %v1597 = vunpack.c.l.b16 %v463
    %v1598 = vunpack.c.h.b16 %v463
    %v1599 = vunpack.c.l.b16 %v464
    %v1600 = vunpack.c.h.b16 %v464
    %v1601 = vunpack.c.l.b16 %v465
    %v1602 = vunpack.c.h.b16 %v465
    %v1603 = vunpack.c.l.b16 %v466
    %v1604 = vunpack.c.h.b16 %v466
    %v1605 = vunpack.c.l.b16 %v467
    %v1606 = vunpack.c.h.b16 %v467
    %v1607 = vunpack.c.l.b16 %v468
    %v1608 = vunpack.c.h.b16 %v468
    %v1609 = vunpack.c.l.b16 %v469
    %v1610 = vunpack.c.h.b16 %v469
    %v1611 = vunpack.c.l.b16 %v470
    %v1612 = vunpack.c.h.b16 %v470
    %v1613 = vunpack.c.l.b16 %v471
    %v1614 = vunpack.c.h.b16 %v471
    %v1615 = vunpack.c.l.b16 %v472
    %v1616 = vunpack.c.h.b16 %v472
    %v1617 = vunpack.c.l.b16 %v473
    %v1618 = vunpack.c.h.b16 %v473
    %v1619 = vunpack.c.l.b16 %v474
    %v1620 = vunpack.c.h.b16 %v474
    %v1621 = vunpack.c.l.b16 %v475
    %v1622 = vunpack.c.h.b16 %v475
    %v1623 = vunpack.c.l.b16 %v476
    %v1624 = vunpack.c.h.b16 %v476
    %v1625 = vunpack.c.l.b16 %v477
    %v1626 = vunpack.c.h.b16 %v477
    %v1627 = vunpack.c.l.b16 %v478
    %v1628 = vunpack.c.h.b16 %v478
    %v1629 = vunpack.c.l.b16 %v479
    %v1630 = vunpack.c.h.b16 %v479
    %v1631 = vunpack.c.l.b16 %v480
    %v1632 = vunpack.c.h.b16 %v480
    %v1633 = vunpack.c.l.b16 %v481
    %v1634 = vunpack.c.h.b16 %v481
    %v1635 = vunpack.c.l.b16 %v482
    %v1636 = vunpack.c.h.b16 %v482
    %v1637 = vunpack.c.l.b16 %v483
    %v1638 = vunpack.c.h.b16 %v483
    %v1639 = vunpack.c.l.b16 %v484
    %v1640 = vunpack.c.h.b16 %v484
    %v1641 = vunpack.c.l.b16 %v485
    %v1642 = vunpack.c.h.b16 %v485
    %v1643 = vunpack.c.l.b16 %v486
    %v1644 = vunpack.c.h.b16 %v486
    %v1645 = vunpack.c.l.b16 %v487
    %v1646 = vunpack.c.h.b16 %v487
    %v1647 = vunpack.c.l.b16 %v488
    %v1648 = vunpack.c.h.b16 %v488
    %v1649 = vunpack.c.l.b16 %v489
    %v1650 = vunpack.c.h.b16 %v489
    %v1651 = vunpack.c.l.b16 %v490
    %v1652 = vunpack.c.h.b16 %v490
    %v1653 = vunpack.c.l.b16 %v491
    %v1654 = vunpack.c.h.b16 %v491
    %v1655 = vunpack.c.l.b16 %v492
    %v1656 = vunpack.c.h.b16 %v492
    %v1657 = vunpack.c.l.b16 %v493
    %v1658 = vunpack.c.h.b16 %v493
    %v1659 = vunpack.c.l.b16 %v494
    %v1660 = vunpack.c.h.b16 %v494
    %v1661 = vunpack.c.l.b16 %v495
    %v1662 = vunpack.c.h.b16 %v495
    %v1663 = vunpack.c.l.b16 %v496
    %v1664 = vunpack.c.h.b16 %v496
    %v1665 = vunpack.c.l.b16 %v497
    %v1666 = vunpack.c.h.b16 %v497
    %v1667 = vunpack.c.l.b16 %v498
    %v1668 = vunpack.c.h.b16 %v498
    %v1669 = vunpack.c.l.b16 %v499
    %v1670 = vunpack.c.h.b16 %v499
    %v1671 = vunpack.c.l.b16 %v500
    %v1672 = vunpack.c.h.b16 %v500
    %v1673 = vunpack.c.l.b16 %v501
    %v1674 = vunpack.c.h.b16 %v501
    %v1675 = vunpack.c.l.b16 %v502
    %v1676 = vunpack.c.h.b16 %v502
    %v1677 = vunpack.c.l.b16 %v503
    %v1678 = vunpack.c.h.b16 %v503
    %v1679 = vunpack.c.l.b16 %v504
    %v1680 = vunpack.c.h.b16 %v504
    %v1681 = vunpack.c.l.b16 %v505
    %v1682 = vunpack.c.h.b16 %v505
    %v1683 = vunpack.c.l.b16 %v506
    %v1684 = vunpack.c.h.b16 %v506
    %v1685 = vunpack.c.l.b16 %v507
    %v1686 = vunpack.c.h.b16 %v507
    %v1687 = vunpack.c.l.b16 %v508
    %v1688 = vunpack.c.h.b16 %v508
    %v1689 = vunpack.c.l.b16 %v509
    %v1690 = vunpack.c.h.b16 %v509
    %v1691 = vunpack.c.l.b16 %v510
    %v1692 = vunpack.c.h.b16 %v510
    %v1693 = vunpack.c.l.b16 %v511
    %v1694 = vunpack.c.h.b16 %v511
    %v1695 = vunpack.c.l.b16 %v512
    %v1696 = vunpack.c.h.b16 %v512
    %v1697 = vunpack.c.l.b16 %v513
    %v1698 = vunpack.c.h.b16 %v513
    %v1699 = vunpack.c.l.b16 %v514
    %v1700 = vunpack.c.h.b16 %v514
    %v1701 = vunpack.c.l.b16 %v515
    %v1702 = vunpack.c.h.b16 %v515
    %v1703 = vunpack.c.l.b16 %v516
    %v1704 = vunpack.c.h.b16 %v516
    %v1705 = vunpack.c.l.b16 %v517
    %v1706 = vunpack.c.h.b16 %v517
    %v1707 = vunpack.c.l.b16 %v518
    %v1708 = vunpack.c.h.b16 %v518
    %v1709 = vunpack.c.l.b16 %v519
    %v1710 = vunpack.c.h.b16 %v519
    %v1711 = vunpack.c.l.b16 %v520
    %v1712 = vunpack.c.h.b16 %v520
    %v1713 = vunpack.c.l.b16 %v521
    %v1714 = vunpack.c.h.b16 %v521
    %v1715 = vunpack.c.l.b16 %v522
    %v1716 = vunpack.c.h.b16 %v522
    %v1717 = vunpack.c.l.b16 %v523
    %v1718 = vunpack.c.h.b16 %v523
    %v1719 = vunpack.c.l.b16 %v524
    %v1720 = vunpack.c.h.b16 %v524
    %v1721 = vunpack.c.l.b16 %v525
    %v1722 = vunpack.c.h.b16 %v525
    %v1723 = vunpack.c.l.b16 %v526
    %v1724 = vunpack.c.h.b16 %v526
    %v1725 = vunpack.c.l.b16 %v527
    %v1726 = vunpack.c.h.b16 %v527
    %v1727 = vunpack.c.l.b16 %v528
    %v1728 = vunpack.c.h.b16 %v528
    %v1729 = vunpack.c.l.b16 %v529
    %v1730 = vunpack.c.h.b16 %v529
    %v1731 = vunpack.c.l.b16 %v530
    %v1732 = vunpack.c.h.b16 %v530
    %v1733 = vunpack.c.l.b16 %v531
    %v1734 = vunpack.c.h.b16 %v531
    %v1735 = vunpack.c.l.b16 %v532
    %v1736 = vunpack.c.h.b16 %v532
    %v1737 = vunpack.c.l.b16 %v533
    %v1738 = vunpack.c.h.b16 %v533
    %v1739 = vunpack.c.l.b16 %v534
    %v1740 = vunpack.c.h.b16 %v534
    %v1741 = vunpack.c.l.b16 %v535
    %v1742 = vunpack.c.h.b16 %v535
    %v1743 = vunpack.c.l.b16 %v536
    %v1744 = vunpack.c.h.b16 %v536
    %v1745 = vunpack.c.l.b16 %v537
    %v1746 = vunpack.c.h.b16 %v537
    %v1747 = vunpack.c.l.b16 %v538
    %v1748 = vunpack.c.h.b16 %v538
    %v1749 = vunpack.c.l.b16 %v539
    %v1750 = vunpack.c.h.b16 %v539
    %v1751 = vunpack.c.l.b16 %v540
    %v1752 = vunpack.c.h.b16 %v540
    %v1753 = vunpack.c.l.b16 %v541
    %v1754 = vunpack.c.h.b16 %v541
    %v1755 = vunpack.c.l.b16 %v542
    %v1756 = vunpack.c.h.b16 %v542
    %v1757 = vunpack.c.l.b16 %v543
    %v1758 = vunpack.c.h.b16 %v543
    %v1759 = vunpack.c.l.b16 %v544
    %v1760 = vunpack.c.h.b16 %v544
    %v1761 = vunpack.c.l.b16 %v545
    %v1762 = vunpack.c.h.b16 %v545
    %v1763 = vunpack.c.l.b16 %v546
    %v1764 = vunpack.c.h.b16 %v546
    %v1765 = vpack.c.b16 %v973, %v965
    %v1766 = vpack.c.b16 %v974, %v966
    %v1767 = vpack.c.b16 %v975, %v967
    %v1768 = vpack.c.b16 %v976, %v968
    %v1769 = vpack.c.b16 %v977, %v969
    %v1770 = vpack.c.b16 %v978, %v970
    %v1771 = vpack.c.b16 %v979, %v971
    %v1772 = vpack.c.b16 %v980, %v972
    %v1773 = vpack.c.b16 %v989, %v981
    %v1774 = vpack.c.b16 %v990, %v982
    %v1775 = vpack.c.b16 %v991, %v983
    %v1776 = vpack.c.b16 %v992, %v984
    %v1777 = vpack.c.b16 %v993, %v985
    %v1778 = vpack.c.b16 %v994, %v986
    %v1779 = vpack.c.b16 %v995, %v987
    %v1780 = vpack.c.b16 %v996, %v988
    %v1781 = vpack.c.b16 %v1005, %v997
    %v1782 = vpack.c.b16 %v1006, %v998
    %v1783 = vpack.c.b16 %v1007, %v999
    %v1784 = vpack.c.b16 %v1008, %v1000
    %v1785 = vpack.c.b16 %v1009, %v1001
    %v1786 = vpack.c.b16 %v1010, %v1002
    %v1787 = vpack.c.b16 %v1011, %v1003
    %v1788 = vpack.c.b16 %v1012, %v1004
    %v1789 = vpack.c.b16 %v1021, %v1013
    %v1790 = vpack.c.b16 %v1022, %v1014
    %v1791 = vpack.c.b16 %v1023, %v1015
    %v1792 = vpack.c.b16 %v1024, %v1016
    %v1793 = vpack.c.b16 %v1025, %v1017
    %v1794 = vpack.c.b16 %v1026, %v1018
    %v1795 = vpack.c.b16 %v1027, %v1019
    %v1796 = vpack.c.b16 %v1028, %v1020
    %v1797 = vpack.c.b16 %v1037, %v1029
    %v1798 = vpack.c.b16 %v1038, %v1030
    %v1799 = vpack.c.b16 %v1039, %v1031
    %v1800 = vpack.c.b16 %v1040, %v1032
    %v1801 = vpack.c.b16 %v1041, %v1033
    %v1802 = vpack.c.b16 %v1042, %v1034
    %v1803 = vpack.c.b16 %v1043, %v1035
    %v1804 = vpack.c.b16 %v1044, %v1036
    %v1805 = vpack.c.b16 %v1053, %v1045
    %v1806 = vpack.c.b16 %v1054, %v1046
    %v1807 = vpack.c.b16 %v1055, %v1047
    %v1808 = vpack.c.b16 %v1056, %v1048
    %v1809 = vpack.c.b16 %v1057, %v1049
    %v1810 = vpack.c.b16 %v1058, %v1050
    %v1811 = vpack.c.b16 %v1059, %v1051
    %v1812 = vpack.c.b16 %v1060, %v1052
    %v1813 = vpack.c.b16 %v1069, %v1061
    %v1814 = vpack.c.b16 %v1070, %v1062
    %v1815 = vpack.c.b16 %v1071, %v1063
    %v1816 = vpack.c.b16 %v1072, %v1064
    %v1817 = vpack.c.b16 %v1073, %v1065
    %v1818 = vpack.c.b16 %v1074, %v1066
    %v1819 = vpack.c.b16 %v1075, %v1067
    %v1820 = vpack.c.b16 %v1076, %v1068
    %v1821 = vpack.c.b16 %v1085, %v1077
    %v1822 = vpack.c.b16 %v1086, %v1078
    %v1823 = vpack.c.b16 %v1087, %v1079
    %v1824 = vpack.c.b16 %v1088, %v1080
    %v1825 = vpack.c.b16 %v1089, %v1081
    %v1826 = vpack.c.b16 %v1090, %v1082
    %v1827 = vpack.c.b16 %v1091, %v1083
    %v1828 = vpack.c.b16 %v1092, %v1084
    %v1829 = vpack.c.b16 %v1101, %v1093
    %v1830 = vpack.c.b16 %v1102, %v1094
    %v1831 = vpack.c.b16 %v1103, %v1095
    %v1832 = vpack.c.b16 %v1104, %v1096
    %v1833 = vpack.c.b16 %v1105, %v1097
    %v1834 = vpack.c.b16 %v1106, %v1098
    %v1835 = vpack.c.b16 %v1107, %v1099
    %v1836 = vpack.c.b16 %v1108, %v1100
    %v1837 = vpack.c.b16 %v1117, %v1109
    %v1838 = vpack.c.b16 %v1118, %v1110
    %v1839 = vpack.c.b16 %v1119, %v1111
    %v1840 = vpack.c.b16 %v1120, %v1112
    %v1841 = vpack.c.b16 %v1121, %v1113
    %v1842 = vpack.c.b16 %v1122, %v1114
    %v1843 = vpack.c.b16 %v1123, %v1115
    %v1844 = vpack.c.b16 %v1124, %v1116
    %v1845 = vpack.c.b16 %v1133, %v1125
    %v1846 = vpack.c.b16 %v1134, %v1126
    %v1847 = vpack.c.b16 %v1135, %v1127
    %v1848 = vpack.c.b16 %v1136, %v1128
    %v1849 = vpack.c.b16 %v1137, %v1129
    %v1850 = vpack.c.b16 %v1138, %v1130
    %v1851 = vpack.c.b16 %v1139, %v1131
    %v1852 = vpack.c.b16 %v1140, %v1132
    %v1853 = vpack.c.b16 %v1149, %v1141
    %v1854 = vpack.c.b16 %v1150, %v1142
    %v1855 = vpack.c.b16 %v1151, %v1143
    %v1856 = vpack.c.b16 %v1152, %v1144
    %v1857 = vpack.c.b16 %v1153, %v1145
    %v1858 = vpack.c.b16 %v1154, %v1146
    %v1859 = vpack.c.b16 %v1155, %v1147
    %v1860 = vpack.c.b16 %v1156, %v1148
    %v1861 = vpack.c.b16 %v1165, %v1157
    %v1862 = vpack.c.b16 %v1166, %v1158
    %v1863 = vpack.c.b16 %v1167, %v1159
    %v1864 = vpack.c.b16 %v1168, %v1160
    %v1865 = vpack.c.b16 %v1169, %v1161
    %v1866 = vpack.c.b16 %v1170, %v1162
    %v1867 = vpack.c.b16 %v1171, %v1163
    %v1868 = vpack.c.b16 %v1172, %v1164
    %v1869 = vpack.c.b16 %v1181, %v1173
    %v1870 = vpack.c.b16 %v1182, %v1174
    %v1871 = vpack.c.b16 %v1183, %v1175
    %v1872 = vpack.c.b16 %v1184, %v1176
    %v1873 = vpack.c.b16 %v1185, %v1177
    %v1874 = vpack.c.b16 %v1186, %v1178
    %v1875 = vpack.c.b16 %v1187, %v1179
    %v1876 = vpack.c.b16 %v1188, %v1180
    %v1877 = vpack.c.b16 %v1197, %v1189
    %v1878 = vpack.c.b16 %v1198, %v1190
    %v1879 = vpack.c.b16 %v1199, %v1191
    %v1880 = vpack.c.b16 %v1200, %v1192
    %v1881 = vpack.c.b16 %v1201, %v1193
    %v1882 = vpack.c.b16 %v1202, %v1194
    %v1883 = vpack.c.b16 %v1203, %v1195
    %v1884 = vpack.c.b16 %v1204, %v1196
    %v1885 = vpack.c.b16 %v1213, %v1205
    %v1886 = vpack.c.b16 %v1214, %v1206
    %v1887 = vpack.c.b16 %v1215, %v1207
    %v1888 = vpack.c.b16 %v1216, %v1208
    %v1889 = vpack.c.b16 %v1217, %v1209
    %v1890 = vpack.c.b16 %v1218, %v1210
    %v1891 = vpack.c.b16 %v1219, %v1211
    %v1892 = vpack.c.b16 %v1220, %v1212
    %v1893 = vpack.c.b16 %v1229, %v1221
    %v1894 = vpack.c.b16 %v1230, %v1222
    %v1895 = vpack.c.b16 %v1231, %v1223
    %v1896 = vpack.c.b16 %v1232, %v1224
    %v1897 = vpack.c.b16 %v1233, %v1225
    %v1898 = vpack.c.b16 %v1234, %v1226
    %v1899 = vpack.c.b16 %v1235, %v1227
    %v1900 = vpack.c.b16 %v1236, %v1228
    %v1901 = vpack.c.b16 %v1245, %v1237
    %v1902 = vpack.c.b16 %v1246, %v1238
    %v1903 = vpack.c.b16 %v1247, %v1239
    %v1904 = vpack.c.b16 %v1248, %v1240
    %v1905 = vpack.c.b16 %v1249, %v1241
    %v1906 = vpack.c.b16 %v1250, %v1242
    %v1907 = vpack.c.b16 %v1251, %v1243
    %v1908 = vpack.c.b16 %v1252, %v1244
    %v1909 = vpack.c.b16 %v1261, %v1253
    %v1910 = vpack.c.b16 %v1262, %v1254
    %v1911 = vpack.c.b16 %v1263, %v1255
    %v1912 = vpack.c.b16 %v1264, %v1256
    %v1913 = vpack.c.b16 %v1265, %v1257
    %v1914 = vpack.c.b16 %v1266, %v1258
    %v1915 = vpack.c.b16 %v1267, %v1259
    %v1916 = vpack.c.b16 %v1268, %v1260
    %v1917 = vpack.c.b16 %v1277, %v1269
    %v1918 = vpack.c.b16 %v1278, %v1270
    %v1919 = vpack.c.b16 %v1279, %v1271
    %v1920 = vpack.c.b16 %v1280, %v1272
    %v1921 = vpack.c.b16 %v1281, %v1273
    %v1922 = vpack.c.b16 %v1282, %v1274
    %v1923 = vpack.c.b16 %v1283, %v1275
    %v1924 = vpack.c.b16 %v1284, %v1276
    %v1925 = vpack.c.b16 %v1293, %v1285
    %v1926 = vpack.c.b16 %v1294, %v1286
    %v1927 = vpack.c.b16 %v1295, %v1287
    %v1928 = vpack.c.b16 %v1296, %v1288
    %v1929 = vpack.c.b16 %v1297, %v1289
    %v1930 = vpack.c.b16 %v1298, %v1290
    %v1931 = vpack.c.b16 %v1299, %v1291
    %v1932 = vpack.c.b16 %v1300, %v1292
    %v1933 = vpack.c.b16 %v1309, %v1301
    %v1934 = vpack.c.b16 %v1310, %v1302
    %v1935 = vpack.c.b16 %v1311, %v1303
    %v1936 = vpack.c.b16 %v1312, %v1304
    %v1937 = vpack.c.b16 %v1313, %v1305
    %v1938 = vpack.c.b16 %v1314, %v1306
    %v1939 = vpack.c.b16 %v1315, %v1307
    %v1940 = vpack.c.b16 %v1316, %v1308
    %v1941 = vpack.c.b16 %v1325, %v1317
    %v1942 = vpack.c.b16 %v1326, %v1318
    %v1943 = vpack.c.b16 %v1327, %v1319
    %v1944 = vpack.c.b16 %v1328, %v1320
    %v1945 = vpack.c.b16 %v1329, %v1321
    %v1946 = vpack.c.b16 %v1330, %v1322
    %v1947 = vpack.c.b16 %v1331, %v1323
    %v1948 = vpack.c.b16 %v1332, %v1324
    %v1949 = vpack.c.b16 %v1341, %v1333
    %v1950 = vpack.c.b16 %v1342, %v1334
    %v1951 = vpack.c.b16 %v1343, %v1335
    %v1952 = vpack.c.b16 %v1344, %v1336
    %v1953 = vpack.c.b16 %v1345, %v1337
    %v1954 = vpack.c.b16 %v1346, %v1338
    %v1955 = vpack.c.b16 %v1347, %v1339
    %v1956 = vpack.c.b16 %v1348, %v1340
    %v1957 = vpack.c.b16 %v1357, %v1349
    %v1958 = vpack.c.b16 %v1358, %v1350
    %v1959 = vpack.c.b16 %v1359, %v1351
    %v1960 = vpack.c.b16 %v1360, %v1352
    %v1961 = vpack.c.b16 %v1361, %v1353
    %v1962 = vpack.c.b16 %v1362, %v1354
    %v1963 = vpack.c.b16 %v1363, %v1355
    %v1964 = vpack.c.b16 %v1364, %v1356
    %v1965 = vpack.c.b16 %v1373, %v1365
    %v1966 = vpack.c.b16 %v1374, %v1366
    %v1967 = vpack.c.b16 %v1375, %v1367
    %v1968 = vpack.c.b16 %v1376, %v1368
    %v1969 = vpack.c.b16 %v1377, %v1369
    %v1970 = vpack.c.b16 %v1378, %v1370
    %v1971 = vpack.c.b16 %v1379, %v1371
    %v1972 = vpack.c.b16 %v1380, %v1372
    %v1973 = vpack.c.b16 %v1389, %v1381
    %v1974 = vpack.c.b16 %v1390, %v1382
    %v1975 = vpack.c.b16 %v1391, %v1383
    %v1976 = vpack.c.b16 %v1392, %v1384
    %v1977 = vpack.c.b16 %v1393, %v1385
    %v1978 = vpack.c.b16 %v1394, %v1386
    %v1979 = vpack.c.b16 %v1395, %v1387
    %v1980 = vpack.c.b16 %v1396, %v1388
    %v1981 = vpack.c.b16 %v1405, %v1397
    %v1982 = vpack.c.b16 %v1406, %v1398
    %v1983 = vpack.c.b16 %v1407, %v1399
    %v1984 = vpack.c.b16 %v1408, %v1400
    %v1985 = vpack.c.b16 %v1409, %v1401
    %v1986 = vpack.c.b16 %v1410, %v1402
    %v1987 = vpack.c.b16 %v1411, %v1403
    %v1988 = vpack.c.b16 %v1412, %v1404
    %v1989 = vpack.c.b16 %v1421, %v1413
    %v1990 = vpack.c.b16 %v1422, %v1414
    %v1991 = vpack.c.b16 %v1423, %v1415
    %v1992 = vpack.c.b16 %v1424, %v1416
    %v1993 = vpack.c.b16 %v1425, %v1417
    %v1994 = vpack.c.b16 %v1426, %v1418
    %v1995 = vpack.c.b16 %v1427, %v1419
    %v1996 = vpack.c.b16 %v1428, %v1420
    %v1997 = vpack.c.b16 %v1437, %v1429
    %v1998 = vpack.c.b16 %v1438, %v1430
    %v1999 = vpack.c.b16 %v1439, %v1431
    %v2000 = vpack.c.b16 %v1440, %v1432
    %v2001 = vpack.c.b16 %v1441, %v1433
    %v2002 = vpack.c.b16 %v1442, %v1434
    %v2003 = vpack.c.b16 %v1443, %v1435
    %v2004 = vpack.c.b16 %v1444, %v1436
    %v2005 = vpack.c.b16 %v1453, %v1445
    %v2006 = vpack.c.b16 %v1454, %v1446
    %v2007 = vpack.c.b16 %v1455, %v1447
    %v2008 = vpack.c.b16 %v1456, %v1448
    %v2009 = vpack.c.b16 %v1457, %v1449
    %v2010 = vpack.c.b16 %v1458, %v1450
    %v2011 = vpack.c.b16 %v1459, %v1451
    %v2012 = vpack.c.b16 %v1460, %v1452
    %v2013 = vpack.c.b16 %v1469, %v1461
    %v2014 = vpack.c.b16 %v1470, %v1462
    %v2015 = vpack.c.b16 %v1471, %v1463
    %v2016 = vpack.c.b16 %v1472, %v1464
    %v2017 = vpack.c.b16 %v1473, %v1465
    %v2018 = vpack.c.b16 %v1474, %v1466
    %v2019 = vpack.c.b16 %v1475, %v1467
    %v2020 = vpack.c.b16 %v1476, %v1468
    %v2021 = vpack.c.b16 %v1485, %v1477
    %v2022 = vpack.c.b16 %v1486, %v1478
    %v2023 = vpack.c.b16 %v1487, %v1479
    %v2024 = vpack.c.b16 %v1488, %v1480
    %v2025 = vpack.c.b16 %v1489, %v1481
    %v2026 = vpack.c.b16 %v1490, %v1482
    %v2027 = vpack.c.b16 %v1491, %v1483
    %v2028 = vpack.c.b16 %v1492, %v1484
    %v2029 = vpack.c.b16 %v1501, %v1493
    %v2030 = vpack.c.b16 %v1502, %v1494
    %v2031 = vpack.c.b16 %v1503, %v1495
    %v2032 = vpack.c.b16 %v1504, %v1496
    %v2033 = vpack.c.b16 %v1505, %v1497
    %v2034 = vpack.c.b16 %v1506, %v1498
    %v2035 = vpack.c.b16 %v1507, %v1499
    %v2036 = vpack.c.b16 %v1508, %v1500
    %v2037 = vpack.c.b16 %v1517, %v1509
    %v2038 = vpack.c.b16 %v1518, %v1510
    %v2039 = vpack.c.b16 %v1519, %v1511
    %v2040 = vpack.c.b16 %v1520, %v1512
    %v2041 = vpack.c.b16 %v1521, %v1513
    %v2042 = vpack.c.b16 %v1522, %v1514
    %v2043 = vpack.c.b16 %v1523, %v1515
    %v2044 = vpack.c.b16 %v1524, %v1516
    %v2045 = vpack.c.b16 %v1533, %v1525
    %v2046 = vpack.c.b16 %v1534, %v1526
    %v2047 = vpack.c.b16 %v1535, %v1527
    %v2048 = vpack.c.b16 %v1536, %v1528
    %v2049 = vpack.c.b16 %v1537, %v1529
    %v2050 = vpack.c.b16 %v1538, %v1530
    %v2051 = vpack.c.b16 %v1539, %v1531
    %v2052 = vpack.c.b16 %v1540, %v1532
    %v2053 = vpack.c.b16 %v1549, %v1541
    %v2054 = vpack.c.b16 %v1550, %v1542
    %v2055 = vpack.c.b16 %v1551, %v1543
    %v2056 = vpack.c.b16 %v1552, %v1544
    %v2057 = vpack.c.b16 %v1553, %v1545
    %v2058 = vpack.c.b16 %v1554, %v1546
    %v2059 = vpack.c.b16 %v1555, %v1547
    %v2060 = vpack.c.b16 %v1556, %v1548
    %v2061 = vpack.c.b16 %v1565, %v1557
    %v2062 = vpack.c.b16 %v1566, %v1558
    %v2063 = vpack.c.b16 %v1567, %v1559
    %v2064 = vpack.c.b16 %v1568, %v1560
    %v2065 = vpack.c.b16 %v1569, %v1561
    %v2066 = vpack.c.b16 %v1570, %v1562
    %v2067 = vpack.c.b16 %v1571, %v1563
    %v2068 = vpack.c.b16 %v1572, %v1564
    %v2069 = vpack.c.b16 %v1581, %v1573
    %v2070 = vpack.c.b16 %v1582, %v1574
    %v2071 = vpack.c.b16 %v1583, %v1575
    %v2072 = vpack.c.b16 %v1584, %v1576
    %v2073 = vpack.c.b16 %v1585, %v1577
    %v2074 = vpack.c.b16 %v1586, %v1578
    %v2075 = vpack.c.b16 %v1587, %v1579
    %v2076 = vpack.c.b16 %v1588, %v1580
    %v2077 = vpack.c.b16 %v1597, %v1589
    %v2078 = vpack.c.b16 %v1598, %v1590
    %v2079 = vpack.c.b16 %v1599, %v1591
    %v2080 = vpack.c.b16 %v1600, %v1592
    %v2081 = vpack.c.b16 %v1601, %v1593
    %v2082 = vpack.c.b16 %v1602, %v1594
    %v2083 = vpack.c.b16 %v1603, %v1595
    %v2084 = vpack.c.b16 %v1604, %v1596
    %v2085 = vpack.c.b16 %v1613, %v1605
    %v2086 = vpack.c.b16 %v1614, %v1606
    %v2087 = vpack.c.b16 %v1615, %v1607
    %v2088 = vpack.c.b16 %v1616, %v1608
    %v2089 = vpack.c.b16 %v1617, %v1609
    %v2090 = vpack.c.b16 %v1618, %v1610
    %v2091 = vpack.c.b16 %v1619, %v1611
    %v2092 = vpack.c.b16 %v1620, %v1612
    %v2093 = vpack.c.b16 %v1629, %v1621
    %v2094 = vpack.c.b16 %v1630, %v1622
    %v2095 = vpack.c.b16 %v1631, %v1623
    %v2096 = vpack.c.b16 %v1632, %v1624
    %v2097 = vpack.c.b16 %v1633, %v1625
    %v2098 = vpack.c.b16 %v1634, %v1626
    %v2099 = vpack.c.b16 %v1635, %v1627
    %v2100 = vpack.c.b16 %v1636, %v1628
    %v2101 = vpack.c.b16 %v1645, %v1637
    %v2102 = vpack.c.b16 %v1646, %v1638
    %v2103 = vpack.c.b16 %v1647, %v1639
    %v2104 = vpack.c.b16 %v1648, %v1640
    %v2105 = vpack.c.b16 %v1649, %v1641
    %v2106 = vpack.c.b16 %v1650, %v1642
    %v2107 = vpack.c.b16 %v1651, %v1643
    %v2108 = vpack.c.b16 %v1652, %v1644
    %v2109 = vpack.c.b16 %v1661, %v1653
    %v2110 = vpack.c.b16 %v1662, %v1654
    %v2111 = vpack.c.b16 %v1663, %v1655
    %v2112 = vpack.c.b16 %v1664, %v1656
    %v2113 = vpack.c.b16 %v1665, %v1657
    %v2114 = vpack.c.b16 %v1666, %v1658
    %v2115 = vpack.c.b16 %v1667, %v1659
    %v2116 = vpack.c.b16 %v1668, %v1660
    %v2117 = vpack.c.b16 %v1677, %v1669
    %v2118 = vpack.c.b16 %v1678, %v1670
    %v2119 = vpack.c.b16 %v1679, %v1671
    %v2120 = vpack.c.b16 %v1680, %v1672
    %v2121 = vpack.c.b16 %v1681, %v1673
    %v2122 = vpack.c.b16 %v1682, %v1674
    %v2123 = vpack.c.b16 %v1683, %v1675
    %v2124 = vpack.c.b16 %v1684, %v1676
    %v2125 = vpack.c.b16 %v1693, %v1685
    %v2126 = vpack.c.b16 %v1694, %v1686
    %v2127 = vpack.c.b16 %v1695, %v1687
    %v2128 = vpack.c.b16 %v1696, %v1688
    %v2129 = vpack.c.b16 %v1697, %v1689
    %v2130 = vpack.c.b16 %v1698, %v1690
    %v2131 = vpack.c.b16 %v1699, %v1691
    %v2132 = vpack.c.b16 %v1700, %v1692
    %v2133 = vpack.c.b16 %v1709, %v1701
    %v2134 = vpack.c.b16 %v1710, %v1702
    %v2135 = vpack.c.b16 %v1711, %v1703
    %v2136 = vpack.c.b16 %v1712, %v1704
    %v2137 = vpack.c.b16 %v1713, %v1705
    %v2138 = vpack.c.b16 %v1714, %v1706
    %v2139 = vpack.c.b16 %v1715, %v1707
    %v2140 = vpack.c.b16 %v1716, %v1708
    %v2141 = vpack.c.b16 %v1725, %v1717
    %v2142 = vpack.c.b16 %v1726, %v1718
    %v2143 = vpack.c.b16 %v1727, %v1719
    %v2144 = vpack.c.b16 %v1728, %v1720
    %v2145 = vpack.c.b16 %v1729, %v1721
    %v2146 = vpack.c.b16 %v1730, %v1722
    %v2147 = vpack.c.b16 %v1731, %v1723
    %v2148 = vpack.c.b16 %v1732, %v1724
    %v2149 = vpack.c.b16 %v1741, %v1733
    %v2150 = vpack.c.b16 %v1742, %v1734
    %v2151 = vpack.c.b16 %v1743, %v1735
    %v2152 = vpack.c.b16 %v1744, %v1736
    %v2153 = vpack.c.b16 %v1745, %v1737
    %v2154 = vpack.c.b16 %v1746, %v1738
    %v2155 = vpack.c.b16 %v1747, %v1739
    %v2156 = vpack.c.b16 %v1748, %v1740
    %v2157 = vpack.c.b16 %v1757, %v1749
    %v2158 = vpack.c.b16 %v1758, %v1750
    %v2159 = vpack.c.b16 %v1759, %v1751
    %v2160 = vpack.c.b16 %v1760, %v1752
    %v2161 = vpack.c.b16 %v1761, %v1753
    %v2162 = vpack.c.b16 %v1762, %v1754
    %v2163 = vpack.c.b16 %v1763, %v1755
    %v2164 = vpack.c.b16 %v1764, %v1756
    %vm2565 = vcmask 261120
    %v2567 = vsel %vm2565, %v146, 0
    %2569 = vmatpush.bf16.msra.mxu0 %v1821
    %2570 = vmatpush.bf16.msra.mxu0 %v1813
    %2571 = vmatpush.bf16.msra.mxu0 %v1805
    %2572 = vmatpush.bf16.msra.mxu0 %v1797
    %2573 = vmatpush.bf16.msra.mxu0 %v1789
    %2574 = vmatpush.bf16.msra.mxu0 %v1781
    %2575 = vmatpush.bf16.msra.mxu0 %v1773
    %2576 = vmatpush.bf16.msra.mxu0 %v1765
    %2577 = vmatmul.bf16.gmra.mxu0 %v140
    %v2578 = vpop.f32.mrf.mxu0
    %v2579 = vadd.f32 %v549, %v2578
    %v2580 = vpop.f32.mrf.mxu0
    %2581 = vdwg.mxu0
    %2582 = vmatpush.bf16.msra.mxu0 %v1885
    %2583 = vmatpush.bf16.msra.mxu0 %v1877
    %2584 = vmatpush.bf16.msra.mxu0 %v1869
    %2585 = vmatpush.bf16.msra.mxu0 %v1861
    %2586 = vmatpush.bf16.msra.mxu0 %v1853
    %2587 = vmatpush.bf16.msra.mxu0 %v1845
    %2588 = vmatpush.bf16.msra.mxu0 %v1837
    %2589 = vmatpush.bf16.msra.mxu0 %v1829
    %2590 = vmatmul.bf16.gmra.mxu0 %v141
    %v2591 = vpop.f32.mrf.mxu0
    %v2592 = vadd.f32 %v2579, %v2591
    %v2593 = vpop.f32.mrf.mxu0
    %2594 = vdwg.mxu0
    %2595 = vmatpush.bf16.msra.mxu0 %v1949
    %2596 = vmatpush.bf16.msra.mxu0 %v1941
    %2597 = vmatpush.bf16.msra.mxu0 %v1933
    %2598 = vmatpush.bf16.msra.mxu0 %v1925
    %2599 = vmatpush.bf16.msra.mxu0 %v1917
    %2600 = vmatpush.bf16.msra.mxu0 %v1909
    %2601 = vmatpush.bf16.msra.mxu0 %v1901
    %2602 = vmatpush.bf16.msra.mxu0 %v1893
    %2603 = vmatmul.bf16.gmra.mxu0 %v142
    %v2604 = vpop.f32.mrf.mxu0
    %v2605 = vadd.f32 %v2592, %v2604
    %v2606 = vpop.f32.mrf.mxu0
    %2607 = vdwg.mxu0
    %2608 = vmatpush.bf16.msra.mxu0 %v2013
    %2609 = vmatpush.bf16.msra.mxu0 %v2005
    %2610 = vmatpush.bf16.msra.mxu0 %v1997
    %2611 = vmatpush.bf16.msra.mxu0 %v1989
    %2612 = vmatpush.bf16.msra.mxu0 %v1981
    %2613 = vmatpush.bf16.msra.mxu0 %v1973
    %2614 = vmatpush.bf16.msra.mxu0 %v1965
    %2615 = vmatpush.bf16.msra.mxu0 %v1957
    %2616 = vmatmul.bf16.gmra.mxu0 %v143
    %v2617 = vpop.f32.mrf.mxu0
    %v2618 = vadd.f32 %v2605, %v2617
    %v2619 = vpop.f32.mrf.mxu0
    %2620 = vdwg.mxu0
    %2621 = vmatpush.bf16.msra.mxu0 %v2077
    %2622 = vmatpush.bf16.msra.mxu0 %v2069
    %2623 = vmatpush.bf16.msra.mxu0 %v2061
    %2624 = vmatpush.bf16.msra.mxu0 %v2053
    %2625 = vmatpush.bf16.msra.mxu0 %v2045
    %2626 = vmatpush.bf16.msra.mxu0 %v2037
    %2627 = vmatpush.bf16.msra.mxu0 %v2029
    %2628 = vmatpush.bf16.msra.mxu0 %v2021
    %2629 = vmatmul.bf16.gmra.mxu0 %v144
    %v2630 = vpop.f32.mrf.mxu0
    %v2631 = vadd.f32 %v2618, %v2630
    %v2632 = vpop.f32.mrf.mxu0
    %2633 = vdwg.mxu0
    %2634 = vmatpush.bf16.msra.mxu0 %v2141
    %2635 = vmatpush.bf16.msra.mxu0 %v2133
    %2636 = vmatpush.bf16.msra.mxu0 %v2125
    %2637 = vmatpush.bf16.msra.mxu0 %v2117
    %2638 = vmatpush.bf16.msra.mxu0 %v2109
    %2639 = vmatpush.bf16.msra.mxu0 %v2101
    %2640 = vmatpush.bf16.msra.mxu0 %v2093
    %2641 = vmatpush.bf16.msra.mxu0 %v2085
    %2642 = vmatmul.bf16.gmra.mxu0 %v145
    %v2643 = vpop.f32.mrf.mxu0
    %v2644 = vadd.f32 %v2631, %v2643
    %v2645 = vpop.f32.mrf.mxu0
    %2646 = vdwg.mxu0
    %2647 = vmatpush.bf16.msra.mxu0 0
    %2648 = vmatpush.bf16.msra.mxu0 0
    %2649 = vmatpush.bf16.msra.mxu0 0
    %2650 = vmatpush.bf16.msra.mxu0 0
    %2651 = vmatpush.bf16.msra.mxu0 0
    %2652 = vmatpush.bf16.msra.mxu0 0
    %2653 = vmatpush.bf16.msra.mxu0 %v2157
    %2654 = vmatpush.bf16.msra.mxu0 %v2149
    %2655 = vmatmul.bf16.gmra.mxu0 %v2567
    %v2656 = vpop.f32.mrf.mxu0
    %v2657 = vadd.f32 %v2644, %v2656
    %v2658 = vpop.f32.mrf.mxu0
    %2659 = vdwg.mxu0
    %2660 = vmatpush.bf16.msra.mxu0 %v1822
    %2661 = vmatpush.bf16.msra.mxu0 %v1814
    %2662 = vmatpush.bf16.msra.mxu0 %v1806
    %2663 = vmatpush.bf16.msra.mxu0 %v1798
    %2664 = vmatpush.bf16.msra.mxu0 %v1790
    %2665 = vmatpush.bf16.msra.mxu0 %v1782
    %2666 = vmatpush.bf16.msra.mxu0 %v1774
    %2667 = vmatpush.bf16.msra.mxu0 %v1766
    %2668 = vmatmul.bf16.gmra.mxu0 %v140
    %v2669 = vpop.f32.mrf.mxu0
    %v2670 = vadd.f32 %v550, %v2669
    %v2671 = vpop.f32.mrf.mxu0
    %2672 = vdwg.mxu0
    %2673 = vmatpush.bf16.msra.mxu0 %v1886
    %2674 = vmatpush.bf16.msra.mxu0 %v1878
    %2675 = vmatpush.bf16.msra.mxu0 %v1870
    %2676 = vmatpush.bf16.msra.mxu0 %v1862
    %2677 = vmatpush.bf16.msra.mxu0 %v1854
    %2678 = vmatpush.bf16.msra.mxu0 %v1846
    %2679 = vmatpush.bf16.msra.mxu0 %v1838
    %2680 = vmatpush.bf16.msra.mxu0 %v1830
    %2681 = vmatmul.bf16.gmra.mxu0 %v141
    %v2682 = vpop.f32.mrf.mxu0
    %v2683 = vadd.f32 %v2670, %v2682
    %v2684 = vpop.f32.mrf.mxu0
    %2685 = vdwg.mxu0
    %2686 = vmatpush.bf16.msra.mxu0 %v1950
    %2687 = vmatpush.bf16.msra.mxu0 %v1942
    %2688 = vmatpush.bf16.msra.mxu0 %v1934
    %2689 = vmatpush.bf16.msra.mxu0 %v1926
    %2690 = vmatpush.bf16.msra.mxu0 %v1918
    %2691 = vmatpush.bf16.msra.mxu0 %v1910
    %2692 = vmatpush.bf16.msra.mxu0 %v1902
    %2693 = vmatpush.bf16.msra.mxu0 %v1894
    %2694 = vmatmul.bf16.gmra.mxu0 %v142
    %v2695 = vpop.f32.mrf.mxu0
    %v2696 = vadd.f32 %v2683, %v2695
    %v2697 = vpop.f32.mrf.mxu0
    %2698 = vdwg.mxu0
    %2699 = vmatpush.bf16.msra.mxu0 %v2014
    %2700 = vmatpush.bf16.msra.mxu0 %v2006
    %2701 = vmatpush.bf16.msra.mxu0 %v1998
    %2702 = vmatpush.bf16.msra.mxu0 %v1990
    %2703 = vmatpush.bf16.msra.mxu0 %v1982
    %2704 = vmatpush.bf16.msra.mxu0 %v1974
    %2705 = vmatpush.bf16.msra.mxu0 %v1966
    %2706 = vmatpush.bf16.msra.mxu0 %v1958
    %2707 = vmatmul.bf16.gmra.mxu0 %v143
    %v2708 = vpop.f32.mrf.mxu0
    %v2709 = vadd.f32 %v2696, %v2708
    %v2710 = vpop.f32.mrf.mxu0
    %2711 = vdwg.mxu0
    %2712 = vmatpush.bf16.msra.mxu0 %v2078
    %2713 = vmatpush.bf16.msra.mxu0 %v2070
    %2714 = vmatpush.bf16.msra.mxu0 %v2062
    %2715 = vmatpush.bf16.msra.mxu0 %v2054
    %2716 = vmatpush.bf16.msra.mxu0 %v2046
    %2717 = vmatpush.bf16.msra.mxu0 %v2038
    %2718 = vmatpush.bf16.msra.mxu0 %v2030
    %2719 = vmatpush.bf16.msra.mxu0 %v2022
    %2720 = vmatmul.bf16.gmra.mxu0 %v144
    %v2721 = vpop.f32.mrf.mxu0
    %v2722 = vadd.f32 %v2709, %v2721
    %v2723 = vpop.f32.mrf.mxu0
    %2724 = vdwg.mxu0
    %2725 = vmatpush.bf16.msra.mxu0 %v2142
    %2726 = vmatpush.bf16.msra.mxu0 %v2134
    %2727 = vmatpush.bf16.msra.mxu0 %v2126
    %2728 = vmatpush.bf16.msra.mxu0 %v2118
    %2729 = vmatpush.bf16.msra.mxu0 %v2110
    %2730 = vmatpush.bf16.msra.mxu0 %v2102
    %2731 = vmatpush.bf16.msra.mxu0 %v2094
    %2732 = vmatpush.bf16.msra.mxu0 %v2086
    %2733 = vmatmul.bf16.gmra.mxu0 %v145
    %v2734 = vpop.f32.mrf.mxu0
    %v2735 = vadd.f32 %v2722, %v2734
    %v2736 = vpop.f32.mrf.mxu0
    %2737 = vdwg.mxu0
    %2738 = vmatpush.bf16.msra.mxu0 0
    %2739 = vmatpush.bf16.msra.mxu0 0
    %2740 = vmatpush.bf16.msra.mxu0 0
    %2741 = vmatpush.bf16.msra.mxu0 0
    %2742 = vmatpush.bf16.msra.mxu0 0
    %2743 = vmatpush.bf16.msra.mxu0 0
    %2744 = vmatpush.bf16.msra.mxu0 %v2158
    %2745 = vmatpush.bf16.msra.mxu0 %v2150
    %2746 = vmatmul.bf16.gmra.mxu0 %v2567
    %v2747 = vpop.f32.mrf.mxu0
    %v2748 = vadd.f32 %v2735, %v2747
    %v2749 = vpop.f32.mrf.mxu0
    %2750 = vdwg.mxu0
    %2751 = vmatpush.bf16.msra.mxu0 %v1823
    %2752 = vmatpush.bf16.msra.mxu0 %v1815
    %2753 = vmatpush.bf16.msra.mxu0 %v1807
    %2754 = vmatpush.bf16.msra.mxu0 %v1799
    %2755 = vmatpush.bf16.msra.mxu0 %v1791
    %2756 = vmatpush.bf16.msra.mxu0 %v1783
    %2757 = vmatpush.bf16.msra.mxu0 %v1775
    %2758 = vmatpush.bf16.msra.mxu0 %v1767
    %2759 = vmatmul.bf16.gmra.mxu0 %v140
    %v2760 = vpop.f32.mrf.mxu0
    %v2761 = vadd.f32 %v551, %v2760
    %v2762 = vpop.f32.mrf.mxu0
    %2763 = vdwg.mxu0
    %2764 = vmatpush.bf16.msra.mxu0 %v1887
    %2765 = vmatpush.bf16.msra.mxu0 %v1879
    %2766 = vmatpush.bf16.msra.mxu0 %v1871
    %2767 = vmatpush.bf16.msra.mxu0 %v1863
    %2768 = vmatpush.bf16.msra.mxu0 %v1855
    %2769 = vmatpush.bf16.msra.mxu0 %v1847
    %2770 = vmatpush.bf16.msra.mxu0 %v1839
    %2771 = vmatpush.bf16.msra.mxu0 %v1831
    %2772 = vmatmul.bf16.gmra.mxu0 %v141
    %v2773 = vpop.f32.mrf.mxu0
    %v2774 = vadd.f32 %v2761, %v2773
    %v2775 = vpop.f32.mrf.mxu0
    %2776 = vdwg.mxu0
    %2777 = vmatpush.bf16.msra.mxu0 %v1951
    %2778 = vmatpush.bf16.msra.mxu0 %v1943
    %2779 = vmatpush.bf16.msra.mxu0 %v1935
    %2780 = vmatpush.bf16.msra.mxu0 %v1927
    %2781 = vmatpush.bf16.msra.mxu0 %v1919
    %2782 = vmatpush.bf16.msra.mxu0 %v1911
    %2783 = vmatpush.bf16.msra.mxu0 %v1903
    %2784 = vmatpush.bf16.msra.mxu0 %v1895
    %2785 = vmatmul.bf16.gmra.mxu0 %v142
    %v2786 = vpop.f32.mrf.mxu0
    %v2787 = vadd.f32 %v2774, %v2786
    %v2788 = vpop.f32.mrf.mxu0
    %2789 = vdwg.mxu0
    %2790 = vmatpush.bf16.msra.mxu0 %v2015
    %2791 = vmatpush.bf16.msra.mxu0 %v2007
    %2792 = vmatpush.bf16.msra.mxu0 %v1999
    %2793 = vmatpush.bf16.msra.mxu0 %v1991
    %2794 = vmatpush.bf16.msra.mxu0 %v1983
    %2795 = vmatpush.bf16.msra.mxu0 %v1975
    %2796 = vmatpush.bf16.msra.mxu0 %v1967
    %2797 = vmatpush.bf16.msra.mxu0 %v1959
    %2798 = vmatmul.bf16.gmra.mxu0 %v143
    %v2799 = vpop.f32.mrf.mxu0
    %v2800 = vadd.f32 %v2787, %v2799
    %v2801 = vpop.f32.mrf.mxu0
    %2802 = vdwg.mxu0
    %2803 = vmatpush.bf16.msra.mxu0 %v2079
    %2804 = vmatpush.bf16.msra.mxu0 %v2071
    %2805 = vmatpush.bf16.msra.mxu0 %v2063
    %2806 = vmatpush.bf16.msra.mxu0 %v2055
    %2807 = vmatpush.bf16.msra.mxu0 %v2047
    %2808 = vmatpush.bf16.msra.mxu0 %v2039
    %2809 = vmatpush.bf16.msra.mxu0 %v2031
    %2810 = vmatpush.bf16.msra.mxu0 %v2023
    %2811 = vmatmul.bf16.gmra.mxu0 %v144
    %v2812 = vpop.f32.mrf.mxu0
    %v2813 = vadd.f32 %v2800, %v2812
    %v2814 = vpop.f32.mrf.mxu0
    %2815 = vdwg.mxu0
    %2816 = vmatpush.bf16.msra.mxu0 %v2143
    %2817 = vmatpush.bf16.msra.mxu0 %v2135
    %2818 = vmatpush.bf16.msra.mxu0 %v2127
    %2819 = vmatpush.bf16.msra.mxu0 %v2119
    %2820 = vmatpush.bf16.msra.mxu0 %v2111
    %2821 = vmatpush.bf16.msra.mxu0 %v2103
    %2822 = vmatpush.bf16.msra.mxu0 %v2095
    %2823 = vmatpush.bf16.msra.mxu0 %v2087
    %2824 = vmatmul.bf16.gmra.mxu0 %v145
    %v2825 = vpop.f32.mrf.mxu0
    %v2826 = vadd.f32 %v2813, %v2825
    %v2827 = vpop.f32.mrf.mxu0
    %2828 = vdwg.mxu0
    %2829 = vmatpush.bf16.msra.mxu0 0
    %2830 = vmatpush.bf16.msra.mxu0 0
    %2831 = vmatpush.bf16.msra.mxu0 0
    %2832 = vmatpush.bf16.msra.mxu0 0
    %2833 = vmatpush.bf16.msra.mxu0 0
    %2834 = vmatpush.bf16.msra.mxu0 0
    %2835 = vmatpush.bf16.msra.mxu0 %v2159
    %2836 = vmatpush.bf16.msra.mxu0 %v2151
    %2837 = vmatmul.bf16.gmra.mxu0 %v2567
    %v2838 = vpop.f32.mrf.mxu0
    %v2839 = vadd.f32 %v2826, %v2838
    %v2840 = vpop.f32.mrf.mxu0
    %2841 = vdwg.mxu0
    %2842 = vmatpush.bf16.msra.mxu0 %v1824
    %2843 = vmatpush.bf16.msra.mxu0 %v1816
    %2844 = vmatpush.bf16.msra.mxu0 %v1808
    %2845 = vmatpush.bf16.msra.mxu0 %v1800
    %2846 = vmatpush.bf16.msra.mxu0 %v1792
    %2847 = vmatpush.bf16.msra.mxu0 %v1784
    %2848 = vmatpush.bf16.msra.mxu0 %v1776
    %2849 = vmatpush.bf16.msra.mxu0 %v1768
    %2850 = vmatmul.bf16.gmra.mxu0 %v140
    %v2851 = vpop.f32.mrf.mxu0
    %v2852 = vadd.f32 %v552, %v2851
    %v2853 = vpop.f32.mrf.mxu0
    %2854 = vdwg.mxu0
    %2855 = vmatpush.bf16.msra.mxu0 %v1888
    %2856 = vmatpush.bf16.msra.mxu0 %v1880
    %2857 = vmatpush.bf16.msra.mxu0 %v1872
    %2858 = vmatpush.bf16.msra.mxu0 %v1864
    %2859 = vmatpush.bf16.msra.mxu0 %v1856
    %2860 = vmatpush.bf16.msra.mxu0 %v1848
    %2861 = vmatpush.bf16.msra.mxu0 %v1840
    %2862 = vmatpush.bf16.msra.mxu0 %v1832
    %2863 = vmatmul.bf16.gmra.mxu0 %v141
    %v2864 = vpop.f32.mrf.mxu0
    %v2865 = vadd.f32 %v2852, %v2864
    %v2866 = vpop.f32.mrf.mxu0
    %2867 = vdwg.mxu0
    %2868 = vmatpush.bf16.msra.mxu0 %v1952
    %2869 = vmatpush.bf16.msra.mxu0 %v1944
    %2870 = vmatpush.bf16.msra.mxu0 %v1936
    %2871 = vmatpush.bf16.msra.mxu0 %v1928
    %2872 = vmatpush.bf16.msra.mxu0 %v1920
    %2873 = vmatpush.bf16.msra.mxu0 %v1912
    %2874 = vmatpush.bf16.msra.mxu0 %v1904
    %2875 = vmatpush.bf16.msra.mxu0 %v1896
    %2876 = vmatmul.bf16.gmra.mxu0 %v142
    %v2877 = vpop.f32.mrf.mxu0
    %v2878 = vadd.f32 %v2865, %v2877
    %v2879 = vpop.f32.mrf.mxu0
    %2880 = vdwg.mxu0
    %2881 = vmatpush.bf16.msra.mxu0 %v2016
    %2882 = vmatpush.bf16.msra.mxu0 %v2008
    %2883 = vmatpush.bf16.msra.mxu0 %v2000
    %2884 = vmatpush.bf16.msra.mxu0 %v1992
    %2885 = vmatpush.bf16.msra.mxu0 %v1984
    %2886 = vmatpush.bf16.msra.mxu0 %v1976
    %2887 = vmatpush.bf16.msra.mxu0 %v1968
    %2888 = vmatpush.bf16.msra.mxu0 %v1960
    %2889 = vmatmul.bf16.gmra.mxu0 %v143
    %v2890 = vpop.f32.mrf.mxu0
    %v2891 = vadd.f32 %v2878, %v2890
    %v2892 = vpop.f32.mrf.mxu0
    %2893 = vdwg.mxu0
    %2894 = vmatpush.bf16.msra.mxu0 %v2080
    %2895 = vmatpush.bf16.msra.mxu0 %v2072
    %2896 = vmatpush.bf16.msra.mxu0 %v2064
    %2897 = vmatpush.bf16.msra.mxu0 %v2056
    %2898 = vmatpush.bf16.msra.mxu0 %v2048
    %2899 = vmatpush.bf16.msra.mxu0 %v2040
    %2900 = vmatpush.bf16.msra.mxu0 %v2032
    %2901 = vmatpush.bf16.msra.mxu0 %v2024
    %2902 = vmatmul.bf16.gmra.mxu0 %v144
    %v2903 = vpop.f32.mrf.mxu0
    %v2904 = vadd.f32 %v2891, %v2903
    %v2905 = vpop.f32.mrf.mxu0
    %2906 = vdwg.mxu0
    %2907 = vmatpush.bf16.msra.mxu0 %v2144
    %2908 = vmatpush.bf16.msra.mxu0 %v2136
    %2909 = vmatpush.bf16.msra.mxu0 %v2128
    %2910 = vmatpush.bf16.msra.mxu0 %v2120
    %2911 = vmatpush.bf16.msra.mxu0 %v2112
    %2912 = vmatpush.bf16.msra.mxu0 %v2104
    %2913 = vmatpush.bf16.msra.mxu0 %v2096
    %2914 = vmatpush.bf16.msra.mxu0 %v2088
    %2915 = vmatmul.bf16.gmra.mxu0 %v145
    %v2916 = vpop.f32.mrf.mxu0
    %v2917 = vadd.f32 %v2904, %v2916
    %v2918 = vpop.f32.mrf.mxu0
    %2919 = vdwg.mxu0
    %2920 = vmatpush.bf16.msra.mxu0 0
    %2921 = vmatpush.bf16.msra.mxu0 0
    %2922 = vmatpush.bf16.msra.mxu0 0
    %2923 = vmatpush.bf16.msra.mxu0 0
    %2924 = vmatpush.bf16.msra.mxu0 0
    %2925 = vmatpush.bf16.msra.mxu0 0
    %2926 = vmatpush.bf16.msra.mxu0 %v2160
    %2927 = vmatpush.bf16.msra.mxu0 %v2152
    %2928 = vmatmul.bf16.gmra.mxu0 %v2567
    %v2929 = vpop.f32.mrf.mxu0
    %v2930 = vadd.f32 %v2917, %v2929
    %v2931 = vpop.f32.mrf.mxu0
    %2932 = vdwg.mxu0
    %2933 = vmatpush.bf16.msra.mxu0 %v1825
    %2934 = vmatpush.bf16.msra.mxu0 %v1817
    %2935 = vmatpush.bf16.msra.mxu0 %v1809
    %2936 = vmatpush.bf16.msra.mxu0 %v1801
    %2937 = vmatpush.bf16.msra.mxu0 %v1793
    %2938 = vmatpush.bf16.msra.mxu0 %v1785
    %2939 = vmatpush.bf16.msra.mxu0 %v1777
    %2940 = vmatpush.bf16.msra.mxu0 %v1769
    %2941 = vmatmul.bf16.gmra.mxu0 %v140
    %v2942 = vpop.f32.mrf.mxu0
    %v2943 = vadd.f32 %v553, %v2942
    %v2944 = vpop.f32.mrf.mxu0
    %2945 = vdwg.mxu0
    %2946 = vmatpush.bf16.msra.mxu0 %v1889
    %2947 = vmatpush.bf16.msra.mxu0 %v1881
    %2948 = vmatpush.bf16.msra.mxu0 %v1873
    %2949 = vmatpush.bf16.msra.mxu0 %v1865
    %2950 = vmatpush.bf16.msra.mxu0 %v1857
    %2951 = vmatpush.bf16.msra.mxu0 %v1849
    %2952 = vmatpush.bf16.msra.mxu0 %v1841
    %2953 = vmatpush.bf16.msra.mxu0 %v1833
    %2954 = vmatmul.bf16.gmra.mxu0 %v141
    %v2955 = vpop.f32.mrf.mxu0
    %v2956 = vadd.f32 %v2943, %v2955
    %v2957 = vpop.f32.mrf.mxu0
    %2958 = vdwg.mxu0
    %2959 = vmatpush.bf16.msra.mxu0 %v1953
    %2960 = vmatpush.bf16.msra.mxu0 %v1945
    %2961 = vmatpush.bf16.msra.mxu0 %v1937
    %2962 = vmatpush.bf16.msra.mxu0 %v1929
    %2963 = vmatpush.bf16.msra.mxu0 %v1921
    %2964 = vmatpush.bf16.msra.mxu0 %v1913
    %2965 = vmatpush.bf16.msra.mxu0 %v1905
    %2966 = vmatpush.bf16.msra.mxu0 %v1897
    %2967 = vmatmul.bf16.gmra.mxu0 %v142
    %v2968 = vpop.f32.mrf.mxu0
    %v2969 = vadd.f32 %v2956, %v2968
    %v2970 = vpop.f32.mrf.mxu0
    %2971 = vdwg.mxu0
    %2972 = vmatpush.bf16.msra.mxu0 %v2017
    %2973 = vmatpush.bf16.msra.mxu0 %v2009
    %2974 = vmatpush.bf16.msra.mxu0 %v2001
    %2975 = vmatpush.bf16.msra.mxu0 %v1993
    %2976 = vmatpush.bf16.msra.mxu0 %v1985
    %2977 = vmatpush.bf16.msra.mxu0 %v1977
    %2978 = vmatpush.bf16.msra.mxu0 %v1969
    %2979 = vmatpush.bf16.msra.mxu0 %v1961
    %2980 = vmatmul.bf16.gmra.mxu0 %v143
    %v2981 = vpop.f32.mrf.mxu0
    %v2982 = vadd.f32 %v2969, %v2981
    %v2983 = vpop.f32.mrf.mxu0
    %2984 = vdwg.mxu0
    %2985 = vmatpush.bf16.msra.mxu0 %v2081
    %2986 = vmatpush.bf16.msra.mxu0 %v2073
    %2987 = vmatpush.bf16.msra.mxu0 %v2065
    %2988 = vmatpush.bf16.msra.mxu0 %v2057
    %2989 = vmatpush.bf16.msra.mxu0 %v2049
    %2990 = vmatpush.bf16.msra.mxu0 %v2041
    %2991 = vmatpush.bf16.msra.mxu0 %v2033
    %2992 = vmatpush.bf16.msra.mxu0 %v2025
    %2993 = vmatmul.bf16.gmra.mxu0 %v144
    %v2994 = vpop.f32.mrf.mxu0
    %v2995 = vadd.f32 %v2982, %v2994
    %v2996 = vpop.f32.mrf.mxu0
    %2997 = vdwg.mxu0
    %2998 = vmatpush.bf16.msra.mxu0 %v2145
    %2999 = vmatpush.bf16.msra.mxu0 %v2137
    %3000 = vmatpush.bf16.msra.mxu0 %v2129
    %3001 = vmatpush.bf16.msra.mxu0 %v2121
    %3002 = vmatpush.bf16.msra.mxu0 %v2113
    %3003 = vmatpush.bf16.msra.mxu0 %v2105
    %3004 = vmatpush.bf16.msra.mxu0 %v2097
    %3005 = vmatpush.bf16.msra.mxu0 %v2089
    %3006 = vmatmul.bf16.gmra.mxu0 %v145
    %v3007 = vpop.f32.mrf.mxu0
    %v3008 = vadd.f32 %v2995, %v3007
    %v3009 = vpop.f32.mrf.mxu0
    %3010 = vdwg.mxu0
    %3011 = vmatpush.bf16.msra.mxu0 0
    %3012 = vmatpush.bf16.msra.mxu0 0
    %3013 = vmatpush.bf16.msra.mxu0 0
    %3014 = vmatpush.bf16.msra.mxu0 0
    %3015 = vmatpush.bf16.msra.mxu0 0
    %3016 = vmatpush.bf16.msra.mxu0 0
    %3017 = vmatpush.bf16.msra.mxu0 %v2161
    %3018 = vmatpush.bf16.msra.mxu0 %v2153
    %3019 = vmatmul.bf16.gmra.mxu0 %v2567
    %v3020 = vpop.f32.mrf.mxu0
    %v3021 = vadd.f32 %v3008, %v3020
    %v3022 = vpop.f32.mrf.mxu0
    %3023 = vdwg.mxu0
    %3024 = vmatpush.bf16.msra.mxu0 %v1826
    %3025 = vmatpush.bf16.msra.mxu0 %v1818
    %3026 = vmatpush.bf16.msra.mxu0 %v1810
    %3027 = vmatpush.bf16.msra.mxu0 %v1802
    %3028 = vmatpush.bf16.msra.mxu0 %v1794
    %3029 = vmatpush.bf16.msra.mxu0 %v1786
    %3030 = vmatpush.bf16.msra.mxu0 %v1778
    %3031 = vmatpush.bf16.msra.mxu0 %v1770
    %3032 = vmatmul.bf16.gmra.mxu0 %v140
    %v3033 = vpop.f32.mrf.mxu0
    %v3034 = vadd.f32 %v554, %v3033
    %v3035 = vpop.f32.mrf.mxu0
    %3036 = vdwg.mxu0
    %3037 = vmatpush.bf16.msra.mxu0 %v1890
    %3038 = vmatpush.bf16.msra.mxu0 %v1882
    %3039 = vmatpush.bf16.msra.mxu0 %v1874
    %3040 = vmatpush.bf16.msra.mxu0 %v1866
    %3041 = vmatpush.bf16.msra.mxu0 %v1858
    %3042 = vmatpush.bf16.msra.mxu0 %v1850
    %3043 = vmatpush.bf16.msra.mxu0 %v1842
    %3044 = vmatpush.bf16.msra.mxu0 %v1834
    %3045 = vmatmul.bf16.gmra.mxu0 %v141
    %v3046 = vpop.f32.mrf.mxu0
    %v3047 = vadd.f32 %v3034, %v3046
    %v3048 = vpop.f32.mrf.mxu0
    %3049 = vdwg.mxu0
    %3050 = vmatpush.bf16.msra.mxu0 %v1954
    %3051 = vmatpush.bf16.msra.mxu0 %v1946
    %3052 = vmatpush.bf16.msra.mxu0 %v1938
    %3053 = vmatpush.bf16.msra.mxu0 %v1930
    %3054 = vmatpush.bf16.msra.mxu0 %v1922
    %3055 = vmatpush.bf16.msra.mxu0 %v1914
    %3056 = vmatpush.bf16.msra.mxu0 %v1906
    %3057 = vmatpush.bf16.msra.mxu0 %v1898
    %3058 = vmatmul.bf16.gmra.mxu0 %v142
    %v3059 = vpop.f32.mrf.mxu0
    %v3060 = vadd.f32 %v3047, %v3059
    %v3061 = vpop.f32.mrf.mxu0
    %3062 = vdwg.mxu0
    %3063 = vmatpush.bf16.msra.mxu0 %v2018
    %3064 = vmatpush.bf16.msra.mxu0 %v2010
    %3065 = vmatpush.bf16.msra.mxu0 %v2002
    %3066 = vmatpush.bf16.msra.mxu0 %v1994
    %3067 = vmatpush.bf16.msra.mxu0 %v1986
    %3068 = vmatpush.bf16.msra.mxu0 %v1978
    %3069 = vmatpush.bf16.msra.mxu0 %v1970
    %3070 = vmatpush.bf16.msra.mxu0 %v1962
    %3071 = vmatmul.bf16.gmra.mxu0 %v143
    %v3072 = vpop.f32.mrf.mxu0
    %v3073 = vadd.f32 %v3060, %v3072
    %v3074 = vpop.f32.mrf.mxu0
    %3075 = vdwg.mxu0
    %3076 = vmatpush.bf16.msra.mxu0 %v2082
    %3077 = vmatpush.bf16.msra.mxu0 %v2074
    %3078 = vmatpush.bf16.msra.mxu0 %v2066
    %3079 = vmatpush.bf16.msra.mxu0 %v2058
    %3080 = vmatpush.bf16.msra.mxu0 %v2050
    %3081 = vmatpush.bf16.msra.mxu0 %v2042
    %3082 = vmatpush.bf16.msra.mxu0 %v2034
    %3083 = vmatpush.bf16.msra.mxu0 %v2026
    %3084 = vmatmul.bf16.gmra.mxu0 %v144
    %v3085 = vpop.f32.mrf.mxu0
    %v3086 = vadd.f32 %v3073, %v3085
    %v3087 = vpop.f32.mrf.mxu0
    %3088 = vdwg.mxu0
    %3089 = vmatpush.bf16.msra.mxu0 %v2146
    %3090 = vmatpush.bf16.msra.mxu0 %v2138
    %3091 = vmatpush.bf16.msra.mxu0 %v2130
    %3092 = vmatpush.bf16.msra.mxu0 %v2122
    %3093 = vmatpush.bf16.msra.mxu0 %v2114
    %3094 = vmatpush.bf16.msra.mxu0 %v2106
    %3095 = vmatpush.bf16.msra.mxu0 %v2098
    %3096 = vmatpush.bf16.msra.mxu0 %v2090
    %3097 = vmatmul.bf16.gmra.mxu0 %v145
    %v3098 = vpop.f32.mrf.mxu0
    %v3099 = vadd.f32 %v3086, %v3098
    %v3100 = vpop.f32.mrf.mxu0
    %3101 = vdwg.mxu0
    %3102 = vmatpush.bf16.msra.mxu0 0
    %3103 = vmatpush.bf16.msra.mxu0 0
    %3104 = vmatpush.bf16.msra.mxu0 0
    %3105 = vmatpush.bf16.msra.mxu0 0
    %3106 = vmatpush.bf16.msra.mxu0 0
    %3107 = vmatpush.bf16.msra.mxu0 0
    %3108 = vmatpush.bf16.msra.mxu0 %v2162
    %3109 = vmatpush.bf16.msra.mxu0 %v2154
    %3110 = vmatmul.bf16.gmra.mxu0 %v2567
    %v3111 = vpop.f32.mrf.mxu0
    %v3112 = vadd.f32 %v3099, %v3111
    %v3113 = vpop.f32.mrf.mxu0
    %3114 = vdwg.mxu0
    %3115 = vmatpush.bf16.msra.mxu0 %v1827
    %3116 = vmatpush.bf16.msra.mxu0 %v1819
    %3117 = vmatpush.bf16.msra.mxu0 %v1811
    %3118 = vmatpush.bf16.msra.mxu0 %v1803
    %3119 = vmatpush.bf16.msra.mxu0 %v1795
    %3120 = vmatpush.bf16.msra.mxu0 %v1787
    %3121 = vmatpush.bf16.msra.mxu0 %v1779
    %3122 = vmatpush.bf16.msra.mxu0 %v1771
    %3123 = vmatmul.bf16.gmra.mxu0 %v140
    %v3124 = vpop.f32.mrf.mxu0
    %v3125 = vadd.f32 %v555, %v3124
    %v3126 = vpop.f32.mrf.mxu0
    %3127 = vdwg.mxu0
    %3128 = vmatpush.bf16.msra.mxu0 %v1891
    %3129 = vmatpush.bf16.msra.mxu0 %v1883
    %3130 = vmatpush.bf16.msra.mxu0 %v1875
    %3131 = vmatpush.bf16.msra.mxu0 %v1867
    %3132 = vmatpush.bf16.msra.mxu0 %v1859
    %3133 = vmatpush.bf16.msra.mxu0 %v1851
    %3134 = vmatpush.bf16.msra.mxu0 %v1843
    %3135 = vmatpush.bf16.msra.mxu0 %v1835
    %3136 = vmatmul.bf16.gmra.mxu0 %v141
    %v3137 = vpop.f32.mrf.mxu0
    %v3138 = vadd.f32 %v3125, %v3137
    %v3139 = vpop.f32.mrf.mxu0
    %3140 = vdwg.mxu0
    %3141 = vmatpush.bf16.msra.mxu0 %v1955
    %3142 = vmatpush.bf16.msra.mxu0 %v1947
    %3143 = vmatpush.bf16.msra.mxu0 %v1939
    %3144 = vmatpush.bf16.msra.mxu0 %v1931
    %3145 = vmatpush.bf16.msra.mxu0 %v1923
    %3146 = vmatpush.bf16.msra.mxu0 %v1915
    %3147 = vmatpush.bf16.msra.mxu0 %v1907
    %3148 = vmatpush.bf16.msra.mxu0 %v1899
    %3149 = vmatmul.bf16.gmra.mxu0 %v142
    %v3150 = vpop.f32.mrf.mxu0
    %v3151 = vadd.f32 %v3138, %v3150
    %v3152 = vpop.f32.mrf.mxu0
    %3153 = vdwg.mxu0
    %3154 = vmatpush.bf16.msra.mxu0 %v2019
    %3155 = vmatpush.bf16.msra.mxu0 %v2011
    %3156 = vmatpush.bf16.msra.mxu0 %v2003
    %3157 = vmatpush.bf16.msra.mxu0 %v1995
    %3158 = vmatpush.bf16.msra.mxu0 %v1987
    %3159 = vmatpush.bf16.msra.mxu0 %v1979
    %3160 = vmatpush.bf16.msra.mxu0 %v1971
    %3161 = vmatpush.bf16.msra.mxu0 %v1963
    %3162 = vmatmul.bf16.gmra.mxu0 %v143
    %v3163 = vpop.f32.mrf.mxu0
    %v3164 = vadd.f32 %v3151, %v3163
    %v3165 = vpop.f32.mrf.mxu0
    %3166 = vdwg.mxu0
    %3167 = vmatpush.bf16.msra.mxu0 %v2083
    %3168 = vmatpush.bf16.msra.mxu0 %v2075
    %3169 = vmatpush.bf16.msra.mxu0 %v2067
    %3170 = vmatpush.bf16.msra.mxu0 %v2059
    %3171 = vmatpush.bf16.msra.mxu0 %v2051
    %3172 = vmatpush.bf16.msra.mxu0 %v2043
    %3173 = vmatpush.bf16.msra.mxu0 %v2035
    %3174 = vmatpush.bf16.msra.mxu0 %v2027
    %3175 = vmatmul.bf16.gmra.mxu0 %v144
    %v3176 = vpop.f32.mrf.mxu0
    %v3177 = vadd.f32 %v3164, %v3176
    %v3178 = vpop.f32.mrf.mxu0
    %3179 = vdwg.mxu0
    %3180 = vmatpush.bf16.msra.mxu0 %v2147
    %3181 = vmatpush.bf16.msra.mxu0 %v2139
    %3182 = vmatpush.bf16.msra.mxu0 %v2131
    %3183 = vmatpush.bf16.msra.mxu0 %v2123
    %3184 = vmatpush.bf16.msra.mxu0 %v2115
    %3185 = vmatpush.bf16.msra.mxu0 %v2107
    %3186 = vmatpush.bf16.msra.mxu0 %v2099
    %3187 = vmatpush.bf16.msra.mxu0 %v2091
    %3188 = vmatmul.bf16.gmra.mxu0 %v145
    %v3189 = vpop.f32.mrf.mxu0
    %v3190 = vadd.f32 %v3177, %v3189
    %v3191 = vpop.f32.mrf.mxu0
    %3192 = vdwg.mxu0
    %3193 = vmatpush.bf16.msra.mxu0 0
    %3194 = vmatpush.bf16.msra.mxu0 0
    %3195 = vmatpush.bf16.msra.mxu0 0
    %3196 = vmatpush.bf16.msra.mxu0 0
    %3197 = vmatpush.bf16.msra.mxu0 0
    %3198 = vmatpush.bf16.msra.mxu0 0
    %3199 = vmatpush.bf16.msra.mxu0 %v2163
    %3200 = vmatpush.bf16.msra.mxu0 %v2155
    %3201 = vmatmul.bf16.gmra.mxu0 %v2567
    %v3202 = vpop.f32.mrf.mxu0
    %v3203 = vadd.f32 %v3190, %v3202
    %v3204 = vpop.f32.mrf.mxu0
    %3205 = vdwg.mxu0
    %3206 = vmatpush.bf16.msra.mxu0 %v1828
    %3207 = vmatpush.bf16.msra.mxu0 %v1820
    %3208 = vmatpush.bf16.msra.mxu0 %v1812
    %3209 = vmatpush.bf16.msra.mxu0 %v1804
    %3210 = vmatpush.bf16.msra.mxu0 %v1796
    %3211 = vmatpush.bf16.msra.mxu0 %v1788
    %3212 = vmatpush.bf16.msra.mxu0 %v1780
    %3213 = vmatpush.bf16.msra.mxu0 %v1772
    %3214 = vmatmul.bf16.gmra.mxu0 %v140
    %v3215 = vpop.f32.mrf.mxu0
    %v3216 = vadd.f32 %v556, %v3215
    %v3217 = vpop.f32.mrf.mxu0
    %3218 = vdwg.mxu0
    %3219 = vmatpush.bf16.msra.mxu0 %v1892
    %3220 = vmatpush.bf16.msra.mxu0 %v1884
    %3221 = vmatpush.bf16.msra.mxu0 %v1876
    %3222 = vmatpush.bf16.msra.mxu0 %v1868
    %3223 = vmatpush.bf16.msra.mxu0 %v1860
    %3224 = vmatpush.bf16.msra.mxu0 %v1852
    %3225 = vmatpush.bf16.msra.mxu0 %v1844
    %3226 = vmatpush.bf16.msra.mxu0 %v1836
    %3227 = vmatmul.bf16.gmra.mxu0 %v141
    %v3228 = vpop.f32.mrf.mxu0
    %v3229 = vadd.f32 %v3216, %v3228
    %v3230 = vpop.f32.mrf.mxu0
    %3231 = vdwg.mxu0
    %3232 = vmatpush.bf16.msra.mxu0 %v1956
    %3233 = vmatpush.bf16.msra.mxu0 %v1948
    %3234 = vmatpush.bf16.msra.mxu0 %v1940
    %3235 = vmatpush.bf16.msra.mxu0 %v1932
    %3236 = vmatpush.bf16.msra.mxu0 %v1924
    %3237 = vmatpush.bf16.msra.mxu0 %v1916
    %3238 = vmatpush.bf16.msra.mxu0 %v1908
    %3239 = vmatpush.bf16.msra.mxu0 %v1900
    %3240 = vmatmul.bf16.gmra.mxu0 %v142
    %v3241 = vpop.f32.mrf.mxu0
    %v3242 = vadd.f32 %v3229, %v3241
    %v3243 = vpop.f32.mrf.mxu0
    %3244 = vdwg.mxu0
    %3245 = vmatpush.bf16.msra.mxu0 %v2020
    %3246 = vmatpush.bf16.msra.mxu0 %v2012
    %3247 = vmatpush.bf16.msra.mxu0 %v2004
    %3248 = vmatpush.bf16.msra.mxu0 %v1996
    %3249 = vmatpush.bf16.msra.mxu0 %v1988
    %3250 = vmatpush.bf16.msra.mxu0 %v1980
    %3251 = vmatpush.bf16.msra.mxu0 %v1972
    %3252 = vmatpush.bf16.msra.mxu0 %v1964
    %3253 = vmatmul.bf16.gmra.mxu0 %v143
    %v3254 = vpop.f32.mrf.mxu0
    %v3255 = vadd.f32 %v3242, %v3254
    %v3256 = vpop.f32.mrf.mxu0
    %3257 = vdwg.mxu0
    %3258 = vmatpush.bf16.msra.mxu0 %v2084
    %3259 = vmatpush.bf16.msra.mxu0 %v2076
    %3260 = vmatpush.bf16.msra.mxu0 %v2068
    %3261 = vmatpush.bf16.msra.mxu0 %v2060
    %3262 = vmatpush.bf16.msra.mxu0 %v2052
    %3263 = vmatpush.bf16.msra.mxu0 %v2044
    %3264 = vmatpush.bf16.msra.mxu0 %v2036
    %3265 = vmatpush.bf16.msra.mxu0 %v2028
    %3266 = vmatmul.bf16.gmra.mxu0 %v144
    %v3267 = vpop.f32.mrf.mxu0
    %v3268 = vadd.f32 %v3255, %v3267
    %v3269 = vpop.f32.mrf.mxu0
    %3270 = vdwg.mxu0
    %3271 = vmatpush.bf16.msra.mxu0 %v2148
    %3272 = vmatpush.bf16.msra.mxu0 %v2140
    %3273 = vmatpush.bf16.msra.mxu0 %v2132
    %3274 = vmatpush.bf16.msra.mxu0 %v2124
    %3275 = vmatpush.bf16.msra.mxu0 %v2116
    %3276 = vmatpush.bf16.msra.mxu0 %v2108
    %3277 = vmatpush.bf16.msra.mxu0 %v2100
    %3278 = vmatpush.bf16.msra.mxu0 %v2092
    %3279 = vmatmul.bf16.gmra.mxu0 %v145
    %v3280 = vpop.f32.mrf.mxu0
    %v3281 = vadd.f32 %v3268, %v3280
    %v3282 = vpop.f32.mrf.mxu0
    %3283 = vdwg.mxu0
    %3284 = vmatpush.bf16.msra.mxu0 0
    %3285 = vmatpush.bf16.msra.mxu0 0
    %3286 = vmatpush.bf16.msra.mxu0 0
    %3287 = vmatpush.bf16.msra.mxu0 0
    %3288 = vmatpush.bf16.msra.mxu0 0
    %3289 = vmatpush.bf16.msra.mxu0 0
    %3290 = vmatpush.bf16.msra.mxu0 %v2164
    %3291 = vmatpush.bf16.msra.mxu0 %v2156
    %3292 = vmatmul.bf16.gmra.mxu0 %v2567
    %v3293 = vpop.f32.mrf.mxu0
    %v3294 = vadd.f32 %v3281, %v3293
    %v3295 = vpop.f32.mrf.mxu0
    %3296 = vdwg.mxu0
    %v3297 = vmax.f32 %v2657, 0.0
    %v3298 = vmax.f32 %v2748, 0.0
    %v3299 = vmax.f32 %v2839, 0.0
    %v3300 = vmax.f32 %v2930, 0.0
    %v3301 = vmax.f32 %v3021, 0.0
    %v3302 = vmax.f32 %v3112, 0.0
    %v3303 = vmax.f32 %v3203, 0.0
    %v3304 = vmax.f32 %v3294, 0.0
    %v3305 = vpack.c.bf16 %v3297, %v3297
    %v3306 = vpack.c.bf16 %v3298, %v3298
    %v3307 = vpack.c.bf16 %v3299, %v3299
    %v3308 = vpack.c.bf16 %v3300, %v3300
    %v3309 = vpack.c.bf16 %v3301, %v3301
    %v3310 = vpack.c.bf16 %v3302, %v3302
    %v3311 = vpack.c.bf16 %v3303, %v3303
    %v3312 = vpack.c.bf16 %v3304, %v3304
    %v3313 = vld [vmem:[#allocation8] sm:$0xff]
    %v3314 = vld [vmem:[#allocation8 + $0x8] sm:$0xff]
    %v3315 = vld [vmem:[#allocation8 + $0x10] sm:$0xff]
    %v3316 = vld [vmem:[#allocation8 + $0x18] sm:$0xff]
    %v3317 = vld [vmem:[#allocation8 + $0x20] sm:$0xff]
    %v3318 = vld [vmem:[#allocation8 + $0x28] sm:$0xff]
    %v3319 = vld [vmem:[#allocation8 + $0x30] sm:$0xff]
    %v3320 = vld [vmem:[#allocation8 + $0x38] sm:$0xff]
    %v3321 = vld [vmem:[#allocation8 + $0x40] sm:$0xff]
    %v3322 = vld [vmem:[#allocation8 + $0x48] sm:$0xff]
    %v3323 = vld [vmem:[#allocation8 + $0x50] sm:$0xff]
    %v3324 = vld [vmem:[#allocation8 + $0x58] sm:$0xff]
    %v3325 = vld [vmem:[#allocation8 + $0x60] sm:$0xff]
    %v3326 = vld [vmem:[#allocation8 + $0x68] sm:$0xff]
    %v3327 = vld [vmem:[#allocation8 + $0x70] sm:$0xff]
    %v3328 = vld [vmem:[#allocation8 + $0x78] sm:$0xff]
    %v3329 = vld [vmem:[#allocation8 + $0x80] sm:$0xff]
    %v3330 = vld [vmem:[#allocation8 + $0x88] sm:$0xff]
    %v3331 = vld [vmem:[#allocation8 + $0x90] sm:$0xff]
    %v3332 = vld [vmem:[#allocation8 + $0x98] sm:$0xff]
    %v3333 = vld [vmem:[#allocation8 + $0xa0] sm:$0xff]
    %v3334 = vld [vmem:[#allocation8 + $0xa8] sm:$0xff]
    %v3335 = vld [vmem:[#allocation8 + $0xb0] sm:$0xff]
    %v3336 = vld [vmem:[#allocation8 + $0xb8] sm:$0xff]
    %v3337 = vld [vmem:[#allocation8 + $0xc0] sm:$0xff]
    %v3338 = vld [vmem:[#allocation8 + $0xc8] sm:$0xff]
    %v3339 = vld [vmem:[#allocation8 + $0xd0] sm:$0xff]
    %v3340 = vld [vmem:[#allocation8 + $0xd8] sm:$0xff]
    %v3341 = vld [vmem:[#allocation8 + $0xe0] sm:$0xff]
    %v3342 = vld [vmem:[#allocation8 + $0xe8] sm:$0xff]
    %v3343 = vld [vmem:[#allocation8 + $0xf0] sm:$0xff]
    %v3344 = vld [vmem:[#allocation8 + $0xf8] sm:$0xff]
    %v3345 = vld [vmem:[#allocation8 + $0x100] sm:$0xff]
    %v3346 = vld [vmem:[#allocation8 + $0x108] sm:$0xff]
    %v3347 = vld [vmem:[#allocation8 + $0x110] sm:$0xff]
    %v3348 = vld [vmem:[#allocation8 + $0x118] sm:$0xff]
    %v3349 = vld [vmem:[#allocation8 + $0x120] sm:$0xff]
    %v3350 = vld [vmem:[#allocation8 + $0x128] sm:$0xff]
    %v3351 = vld [vmem:[#allocation8 + $0x130] sm:$0xff]
    %v3352 = vld [vmem:[#allocation8 + $0x138] sm:$0xff]
    %v3353 = vld [vmem:[#allocation8 + $0x140] sm:$0xff]
    %v3354 = vld [vmem:[#allocation8 + $0x148] sm:$0xff]
    %v3355 = vld [vmem:[#allocation8 + $0x150] sm:$0xff]
    %v3356 = vld [vmem:[#allocation8 + $0x158] sm:$0xff]
    %v3357 = vld [vmem:[#allocation8 + $0x160] sm:$0xff]
    %v3358 = vld [vmem:[#allocation8 + $0x168] sm:$0xff]
    %v3359 = vld [vmem:[#allocation8 + $0x170] sm:$0xff]
    %v3360 = vld [vmem:[#allocation8 + $0x178] sm:$0xff]
    %v3361 = vld [vmem:[#allocation8 + $0x180] sm:$0xff]
    %v3362 = vld [vmem:[#allocation8 + $0x188] sm:$0xff]
    %v3363 = vld [vmem:[#allocation8 + $0x190] sm:$0xff]
    %v3364 = vld [vmem:[#allocation8 + $0x198] sm:$0xff]
    %v3365 = vld [vmem:[#allocation8 + $0x1a0] sm:$0xff]
    %v3366 = vld [vmem:[#allocation8 + $0x1a8] sm:$0xff]
    %v3367 = vld [vmem:[#allocation8 + $0x1b0] sm:$0xff]
    %v3368 = vld [vmem:[#allocation8 + $0x1b8] sm:$0xff]
    %v3369 = vld [vmem:[#allocation8 + $0x1c0] sm:$0xff]
    %v3370 = vld [vmem:[#allocation8 + $0x1c8] sm:$0xff]
    %v3371 = vld [vmem:[#allocation8 + $0x1d0] sm:$0xff]
    %v3372 = vld [vmem:[#allocation8 + $0x1d8] sm:$0xff]
    %v3373 = vld [vmem:[#allocation8 + $0x1e0] sm:$0xff]
    %v3374 = vld [vmem:[#allocation8 + $0x1e8] sm:$0xff]
    %v3375 = vld [vmem:[#allocation8 + $0x1f0] sm:$0xff]
    %v3376 = vld [vmem:[#allocation8 + $0x1f8] sm:$0xff]
    %v3377 = vld [vmem:[#allocation8 + $0x200] sm:$0xff]
    %v3378 = vld [vmem:[#allocation8 + $0x208] sm:$0xff]
    %v3379 = vld [vmem:[#allocation8 + $0x210] sm:$0xff]
    %v3380 = vld [vmem:[#allocation8 + $0x218] sm:$0xff]
    %v3381 = vld [vmem:[#allocation8 + $0x220] sm:$0xff]
    %v3382 = vld [vmem:[#allocation8 + $0x228] sm:$0xff]
    %v3383 = vld [vmem:[#allocation8 + $0x230] sm:$0xff]
    %v3384 = vld [vmem:[#allocation8 + $0x238] sm:$0xff]
    %v3385 = vld [vmem:[#allocation8 + $0x240] sm:$0xff]
    %v3386 = vld [vmem:[#allocation8 + $0x248] sm:$0xff]
    %v3387 = vld [vmem:[#allocation8 + $0x250] sm:$0xff]
    %v3388 = vld [vmem:[#allocation8 + $0x258] sm:$0xff]
    %v3389 = vld [vmem:[#allocation8 + $0x260] sm:$0xff]
    %v3390 = vld [vmem:[#allocation8 + $0x268] sm:$0xff]
    %v3391 = vld [vmem:[#allocation8 + $0x270] sm:$0xff]
    %v3392 = vld [vmem:[#allocation8 + $0x278] sm:$0xff]
    %v3393 = vld [vmem:[#allocation8 + $0x280] sm:$0xff]
    %v3394 = vld [vmem:[#allocation8 + $0x288] sm:$0xff]
    %v3395 = vld [vmem:[#allocation8 + $0x290] sm:$0xff]
    %v3396 = vld [vmem:[#allocation8 + $0x298] sm:$0xff]
    %v3397 = vld [vmem:[#allocation8 + $0x2a0] sm:$0xff]
    %v3398 = vld [vmem:[#allocation8 + $0x2a8] sm:$0xff]
    %v3399 = vld [vmem:[#allocation8 + $0x2b0] sm:$0xff]
    %v3400 = vld [vmem:[#allocation8 + $0x2b8] sm:$0xff]
    %v3401 = vld [vmem:[#allocation8 + $0x2c0] sm:$0xff]
    %v3402 = vld [vmem:[#allocation8 + $0x2c8] sm:$0xff]
    %v3403 = vld [vmem:[#allocation8 + $0x2d0] sm:$0xff]
    %v3404 = vld [vmem:[#allocation8 + $0x2d8] sm:$0xff]
    %v3405 = vld [vmem:[#allocation8 + $0x2e0] sm:$0xff]
    %v3406 = vld [vmem:[#allocation8 + $0x2e8] sm:$0xff]
    %v3407 = vld [vmem:[#allocation8 + $0x2f0] sm:$0xff]
    %v3408 = vld [vmem:[#allocation8 + $0x2f8] sm:$0xff]
    %v3409 = vld [vmem:[#allocation8 + $0x300] sm:$0xff]
    %v3410 = vld [vmem:[#allocation8 + $0x308] sm:$0xff]
    %v3411 = vld [vmem:[#allocation8 + $0x310] sm:$0xff]
    %v3412 = vld [vmem:[#allocation8 + $0x318] sm:$0xff]
    %v3413 = vld [vmem:[#allocation8 + $0x320] sm:$0xff]
    %v3414 = vld [vmem:[#allocation8 + $0x328] sm:$0xff]
    %v3415 = vld [vmem:[#allocation8 + $0x330] sm:$0xff]
    %v3416 = vld [vmem:[#allocation8 + $0x338] sm:$0xff]
    %v3417 = vld [vmem:[#allocation8 + $0x340] sm:$0xff]
    %v3418 = vld [vmem:[#allocation8 + $0x348] sm:$0xff]
    %v3419 = vld [vmem:[#allocation8 + $0x350] sm:$0xff]
    %v3420 = vld [vmem:[#allocation8 + $0x358] sm:$0xff]
    %v3421 = vld [vmem:[#allocation8 + $0x360] sm:$0xff]
    %v3422 = vld [vmem:[#allocation8 + $0x368] sm:$0xff]
    %v3423 = vld [vmem:[#allocation8 + $0x370] sm:$0xff]
    %v3424 = vld [vmem:[#allocation8 + $0x378] sm:$0xff]
    %v3425 = vld [vmem:[#allocation8 + $0x380] sm:$0xff]
    %v3426 = vld [vmem:[#allocation8 + $0x388] sm:$0xff]
    %v3427 = vld [vmem:[#allocation8 + $0x390] sm:$0xff]
    %v3428 = vld [vmem:[#allocation8 + $0x398] sm:$0xff]
    %v3429 = vld [vmem:[#allocation8 + $0x3a0] sm:$0xff]
    %v3430 = vld [vmem:[#allocation8 + $0x3a8] sm:$0xff]
    %v3431 = vld [vmem:[#allocation8 + $0x3b0] sm:$0xff]
    %v3432 = vld [vmem:[#allocation8 + $0x3b8] sm:$0xff]
    %v3433 = vld [vmem:[#allocation8 + $0x3c0] sm:$0xff]
    %v3434 = vld [vmem:[#allocation8 + $0x3c8] sm:$0xff]
    %v3435 = vld [vmem:[#allocation8 + $0x3d0] sm:$0xff]
    %v3436 = vld [vmem:[#allocation8 + $0x3d8] sm:$0xff]
    %v3437 = vld [vmem:[#allocation8 + $0x3e0] sm:$0xff]
    %v3438 = vld [vmem:[#allocation8 + $0x3e8] sm:$0xff]
    %v3439 = vld [vmem:[#allocation8 + $0x3f0] sm:$0xff]
    %v3440 = vld [vmem:[#allocation8 + $0x3f8] sm:$0xff]
    %v3441 = vld [vmem:[#allocation8 + $0x400] sm:$0xff]
    %v3442 = vld [vmem:[#allocation8 + $0x408] sm:$0xff]
    %v3443 = vld [vmem:[#allocation8 + $0x410] sm:$0xff]
    %v3444 = vld [vmem:[#allocation8 + $0x418] sm:$0xff]
    %v3445 = vld [vmem:[#allocation8 + $0x420] sm:$0xff]
    %v3446 = vld [vmem:[#allocation8 + $0x428] sm:$0xff]
    %v3447 = vld [vmem:[#allocation8 + $0x430] sm:$0xff]
    %v3448 = vld [vmem:[#allocation8 + $0x438] sm:$0xff]
    %v3449 = vld [vmem:[#allocation8 + $0x440] sm:$0xff]
    %v3450 = vld [vmem:[#allocation8 + $0x448] sm:$0xff]
    %v3451 = vld [vmem:[#allocation8 + $0x450] sm:$0xff]
    %v3452 = vld [vmem:[#allocation8 + $0x458] sm:$0xff]
    %v3453 = vld [vmem:[#allocation8 + $0x460] sm:$0xff]
    %v3454 = vld [vmem:[#allocation8 + $0x468] sm:$0xff]
    %v3455 = vld [vmem:[#allocation8 + $0x470] sm:$0xff]
    %v3456 = vld [vmem:[#allocation8 + $0x478] sm:$0xff]
    %v3457 = vld [vmem:[#allocation8 + $0x480] sm:$0xff]
    %v3458 = vld [vmem:[#allocation8 + $0x488] sm:$0xff]
    %v3459 = vld [vmem:[#allocation8 + $0x490] sm:$0xff]
    %v3460 = vld [vmem:[#allocation8 + $0x498] sm:$0xff]
    %v3461 = vld [vmem:[#allocation8 + $0x4a0] sm:$0xff]
    %v3462 = vld [vmem:[#allocation8 + $0x4a8] sm:$0xff]
    %v3463 = vld [vmem:[#allocation8 + $0x4b0] sm:$0xff]
    %v3464 = vld [vmem:[#allocation8 + $0x4b8] sm:$0xff]
    %v3465 = vld [vmem:[#allocation8 + $0x4c0] sm:$0xff]
    %v3466 = vld [vmem:[#allocation8 + $0x4c8] sm:$0xff]
    %v3467 = vld [vmem:[#allocation8 + $0x4d0] sm:$0xff]
    %v3468 = vld [vmem:[#allocation8 + $0x4d8] sm:$0xff]
    %v3469 = vld [vmem:[#allocation8 + $0x4e0] sm:$0xff]
    %v3470 = vld [vmem:[#allocation8 + $0x4e8] sm:$0xff]
    %v3471 = vld [vmem:[#allocation8 + $0x4f0] sm:$0xff]
    %v3472 = vld [vmem:[#allocation8 + $0x4f8] sm:$0xff]
    %v3473 = vld [vmem:[#allocation8 + $0x500] sm:$0xff]
    %v3474 = vld [vmem:[#allocation8 + $0x508] sm:$0xff]
    %v3475 = vld [vmem:[#allocation8 + $0x510] sm:$0xff]
    %v3476 = vld [vmem:[#allocation8 + $0x518] sm:$0xff]
    %v3477 = vld [vmem:[#allocation8 + $0x520] sm:$0xff]
    %v3478 = vld [vmem:[#allocation8 + $0x528] sm:$0xff]
    %v3479 = vld [vmem:[#allocation8 + $0x530] sm:$0xff]
    %v3480 = vld [vmem:[#allocation8 + $0x538] sm:$0xff]
    %v3481 = vld [vmem:[#allocation8 + $0x540] sm:$0xff]
    %v3482 = vld [vmem:[#allocation8 + $0x548] sm:$0xff]
    %v3483 = vld [vmem:[#allocation8 + $0x550] sm:$0xff]
    %v3484 = vld [vmem:[#allocation8 + $0x558] sm:$0xff]
    %v3485 = vld [vmem:[#allocation8 + $0x560] sm:$0xff]
    %v3486 = vld [vmem:[#allocation8 + $0x568] sm:$0xff]
    %v3487 = vld [vmem:[#allocation8 + $0x570] sm:$0xff]
    %v3488 = vld [vmem:[#allocation8 + $0x578] sm:$0xff]
    %v3489 = vld [vmem:[#allocation8 + $0x580] sm:$0xff]
    %v3490 = vld [vmem:[#allocation8 + $0x588] sm:$0xff]
    %v3491 = vld [vmem:[#allocation8 + $0x590] sm:$0xff]
    %v3492 = vld [vmem:[#allocation8 + $0x598] sm:$0xff]
    %v3493 = vld [vmem:[#allocation8 + $0x5a0] sm:$0xff]
    %v3494 = vld [vmem:[#allocation8 + $0x5a8] sm:$0xff]
    %v3495 = vld [vmem:[#allocation8 + $0x5b0] sm:$0xff]
    %v3496 = vld [vmem:[#allocation8 + $0x5b8] sm:$0xff]
    %v3497 = vld [vmem:[#allocation8 + $0x5c0] sm:$0xff]
    %v3498 = vld [vmem:[#allocation8 + $0x5c8] sm:$0xff]
    %v3499 = vld [vmem:[#allocation8 + $0x5d0] sm:$0xff]
    %v3500 = vld [vmem:[#allocation8 + $0x5d8] sm:$0xff]
    %v3501 = vld [vmem:[#allocation8 + $0x5e0] sm:$0xff]
    %v3502 = vld [vmem:[#allocation8 + $0x5e8] sm:$0xff]
    %v3503 = vld [vmem:[#allocation8 + $0x5f0] sm:$0xff]
    %v3504 = vld [vmem:[#allocation8 + $0x5f8] sm:$0xff]
    %v3505 = vld [vmem:[#allocation8 + $0x600] sm:$0xff]
    %v3506 = vld [vmem:[#allocation8 + $0x608] sm:$0xff]
    %v3507 = vld [vmem:[#allocation8 + $0x610] sm:$0xff]
    %v3508 = vld [vmem:[#allocation8 + $0x618] sm:$0xff]
    %v3509 = vld [vmem:[#allocation8 + $0x620] sm:$0xff]
    %v3510 = vld [vmem:[#allocation8 + $0x628] sm:$0xff]
    %v3511 = vld [vmem:[#allocation8 + $0x630] sm:$0xff]
    %v3512 = vld [vmem:[#allocation8 + $0x638] sm:$0xff]
    %v3513 = vld [vmem:[#allocation8 + $0x640] sm:$0xff]
    %v3514 = vld [vmem:[#allocation8 + $0x648] sm:$0xff]
    %v3515 = vld [vmem:[#allocation8 + $0x650] sm:$0xff]
    %v3516 = vld [vmem:[#allocation8 + $0x658] sm:$0xff]
    %v3517 = vld [vmem:[#allocation8 + $0x660] sm:$0xff]
    %v3518 = vld [vmem:[#allocation8 + $0x668] sm:$0xff]
    %v3519 = vld [vmem:[#allocation8 + $0x670] sm:$0xff]
    %v3520 = vld [vmem:[#allocation8 + $0x678] sm:$0xff]
    %v3521 = vld [vmem:[#allocation8 + $0x680] sm:$0xff]
    %v3522 = vld [vmem:[#allocation8 + $0x688] sm:$0xff]
    %v3523 = vld [vmem:[#allocation8 + $0x690] sm:$0xff]
    %v3524 = vld [vmem:[#allocation8 + $0x698] sm:$0xff]
    %v3525 = vld [vmem:[#allocation8 + $0x6a0] sm:$0xff]
    %v3526 = vld [vmem:[#allocation8 + $0x6a8] sm:$0xff]
    %v3527 = vld [vmem:[#allocation8 + $0x6b0] sm:$0xff]
    %v3528 = vld [vmem:[#allocation8 + $0x6b8] sm:$0xff]
    %v3529 = vld [vmem:[#allocation8 + $0x6c0] sm:$0xff]
    %v3530 = vld [vmem:[#allocation8 + $0x6c8] sm:$0xff]
    %v3531 = vld [vmem:[#allocation8 + $0x6d0] sm:$0xff]
    %v3532 = vld [vmem:[#allocation8 + $0x6d8] sm:$0xff]
    %v3533 = vld [vmem:[#allocation8 + $0x6e0] sm:$0xff]
    %v3534 = vld [vmem:[#allocation8 + $0x6e8] sm:$0xff]
    %v3535 = vld [vmem:[#allocation8 + $0x6f0] sm:$0xff]
    %v3536 = vld [vmem:[#allocation8 + $0x6f8] sm:$0xff]
    %v3537 = vld [vmem:[#allocation8 + $0x700] sm:$0xff]
    %v3538 = vld [vmem:[#allocation8 + $0x708] sm:$0xff]
    %v3539 = vld [vmem:[#allocation8 + $0x710] sm:$0xff]
    %v3540 = vld [vmem:[#allocation8 + $0x718] sm:$0xff]
    %v3541 = vld [vmem:[#allocation8 + $0x720] sm:$0xff]
    %v3542 = vld [vmem:[#allocation8 + $0x728] sm:$0xff]
    %v3543 = vld [vmem:[#allocation8 + $0x730] sm:$0xff]
    %v3544 = vld [vmem:[#allocation8 + $0x738] sm:$0xff]
    %v3545 = vld [vmem:[#allocation8 + $0x740] sm:$0xff]
    %v3546 = vld [vmem:[#allocation8 + $0x748] sm:$0xff]
    %v3547 = vld [vmem:[#allocation8 + $0x750] sm:$0xff]
    %v3548 = vld [vmem:[#allocation8 + $0x758] sm:$0xff]
    %v3549 = vld [vmem:[#allocation8 + $0x760] sm:$0xff]
    %v3550 = vld [vmem:[#allocation8 + $0x768] sm:$0xff]
    %v3551 = vld [vmem:[#allocation8 + $0x770] sm:$0xff]
    %v3552 = vld [vmem:[#allocation8 + $0x778] sm:$0xff]
    %v3553 = vld [vmem:[#allocation8 + $0x780] sm:$0xff]
    %v3554 = vld [vmem:[#allocation8 + $0x788] sm:$0xff]
    %v3555 = vld [vmem:[#allocation8 + $0x790] sm:$0xff]
    %v3556 = vld [vmem:[#allocation8 + $0x798] sm:$0xff]
    %v3557 = vld [vmem:[#allocation8 + $0x7a0] sm:$0xff]
    %v3558 = vld [vmem:[#allocation8 + $0x7a8] sm:$0xff]
    %v3559 = vld [vmem:[#allocation8 + $0x7b0] sm:$0xff]
    %v3560 = vld [vmem:[#allocation8 + $0x7b8] sm:$0xff]
    %v3561 = vld [vmem:[#allocation8 + $0x7c0] sm:$0xff]
    %v3562 = vld [vmem:[#allocation8 + $0x7c8] sm:$0xff]
    %v3563 = vld [vmem:[#allocation8 + $0x7d0] sm:$0xff]
    %v3564 = vld [vmem:[#allocation8 + $0x7d8] sm:$0xff]
    %v3565 = vld [vmem:[#allocation8 + $0x7e0] sm:$0xff]
    %v3566 = vld [vmem:[#allocation8 + $0x7e8] sm:$0xff]
    %v3567 = vld [vmem:[#allocation8 + $0x7f0] sm:$0xff]
    %v3568 = vld [vmem:[#allocation8 + $0x7f8] sm:$0xff]
    %v3569 = vld [vmem:[#allocation8 + $0x800] sm:$0xff]
    %v3570 = vld [vmem:[#allocation8 + $0x808] sm:$0xff]
    %v3571 = vld [vmem:[#allocation8 + $0x810] sm:$0xff]
    %v3572 = vld [vmem:[#allocation8 + $0x818] sm:$0xff]
    %v3573 = vld [vmem:[#allocation8 + $0x820] sm:$0xff]
    %v3574 = vld [vmem:[#allocation8 + $0x828] sm:$0xff]
    %v3575 = vld [vmem:[#allocation8 + $0x830] sm:$0xff]
    %v3576 = vld [vmem:[#allocation8 + $0x838] sm:$0xff]
    %v3577 = vld [vmem:[#allocation8 + $0x840] sm:$0xff]
    %v3578 = vld [vmem:[#allocation8 + $0x848] sm:$0xff]
    %v3579 = vld [vmem:[#allocation8 + $0x850] sm:$0xff]
    %v3580 = vld [vmem:[#allocation8 + $0x858] sm:$0xff]
    %v3581 = vld [vmem:[#allocation8 + $0x860] sm:$0xff]
    %v3582 = vld [vmem:[#allocation8 + $0x868] sm:$0xff]
    %v3583 = vld [vmem:[#allocation8 + $0x870] sm:$0xff]
    %v3584 = vld [vmem:[#allocation8 + $0x878] sm:$0xff]
    %v3585 = vld [vmem:[#allocation8 + $0x880] sm:$0xff]
    %v3586 = vld [vmem:[#allocation8 + $0x888] sm:$0xff]
    %v3587 = vld [vmem:[#allocation8 + $0x890] sm:$0xff]
    %v3588 = vld [vmem:[#allocation8 + $0x898] sm:$0xff]
    %v3589 = vld [vmem:[#allocation8 + $0x8a0] sm:$0xff]
    %v3590 = vld [vmem:[#allocation8 + $0x8a8] sm:$0xff]
    %v3591 = vld [vmem:[#allocation8 + $0x8b0] sm:$0xff]
    %v3592 = vld [vmem:[#allocation8 + $0x8b8] sm:$0xff]
    %v3593 = vld [vmem:[#allocation8 + $0x8c0] sm:$0xff]
    %v3594 = vld [vmem:[#allocation8 + $0x8c8] sm:$0xff]
    %v3595 = vld [vmem:[#allocation8 + $0x8d0] sm:$0xff]
    %v3596 = vld [vmem:[#allocation8 + $0x8d8] sm:$0xff]
    %v3597 = vld [vmem:[#allocation8 + $0x8e0] sm:$0xff]
    %v3598 = vld [vmem:[#allocation8 + $0x8e8] sm:$0xff]
    %v3599 = vld [vmem:[#allocation8 + $0x8f0] sm:$0xff]
    %v3600 = vld [vmem:[#allocation8 + $0x8f8] sm:$0xff]
    %v3601 = vld [vmem:[#allocation8 + $0x900] sm:$0xff]
    %v3602 = vld [vmem:[#allocation8 + $0x908] sm:$0xff]
    %v3603 = vld [vmem:[#allocation8 + $0x910] sm:$0xff]
    %v3604 = vld [vmem:[#allocation8 + $0x918] sm:$0xff]
    %v3605 = vld [vmem:[#allocation8 + $0x920] sm:$0xff]
    %v3606 = vld [vmem:[#allocation8 + $0x928] sm:$0xff]
    %v3607 = vld [vmem:[#allocation8 + $0x930] sm:$0xff]
    %v3608 = vld [vmem:[#allocation8 + $0x938] sm:$0xff]
    %v3609 = vld [vmem:[#allocation8 + $0x940] sm:$0xff]
    %v3610 = vld [vmem:[#allocation8 + $0x948] sm:$0xff]
    %v3611 = vld [vmem:[#allocation8 + $0x950] sm:$0xff]
    %v3612 = vld [vmem:[#allocation8 + $0x958] sm:$0xff]
    %v3613 = vld [vmem:[#allocation8 + $0x960] sm:$0xff]
    %v3614 = vld [vmem:[#allocation8 + $0x968] sm:$0xff]
    %v3615 = vld [vmem:[#allocation8 + $0x970] sm:$0xff]
    %v3616 = vld [vmem:[#allocation8 + $0x978] sm:$0xff]
    %v3617 = vld [vmem:[#allocation8 + $0x980] sm:$0xff]
    %v3618 = vld [vmem:[#allocation8 + $0x988] sm:$0xff]
    %v3619 = vld [vmem:[#allocation8 + $0x990] sm:$0xff]
    %v3620 = vld [vmem:[#allocation8 + $0x998] sm:$0xff]
    %v3621 = vld [vmem:[#allocation8 + $0x9a0] sm:$0xff]
    %v3622 = vld [vmem:[#allocation8 + $0x9a8] sm:$0xff]
    %v3623 = vld [vmem:[#allocation8 + $0x9b0] sm:$0xff]
    %v3624 = vld [vmem:[#allocation8 + $0x9b8] sm:$0xff]
    %v3625 = vld [vmem:[#allocation8 + $0x9c0] sm:$0xff]
    %v3626 = vld [vmem:[#allocation8 + $0x9c8] sm:$0xff]
    %v3627 = vld [vmem:[#allocation8 + $0x9d0] sm:$0xff]
    %v3628 = vld [vmem:[#allocation8 + $0x9d8] sm:$0xff]
    %v3629 = vld [vmem:[#allocation8 + $0x9e0] sm:$0xff]
    %v3630 = vld [vmem:[#allocation8 + $0x9e8] sm:$0xff]
    %v3631 = vld [vmem:[#allocation8 + $0x9f0] sm:$0xff]
    %v3632 = vld [vmem:[#allocation8 + $0x9f8] sm:$0xff]
    %v3633 = vld [vmem:[#allocation8 + $0xa00] sm:$0xff]
    %v3634 = vld [vmem:[#allocation8 + $0xa08] sm:$0xff]
    %v3635 = vld [vmem:[#allocation8 + $0xa10] sm:$0xff]
    %v3636 = vld [vmem:[#allocation8 + $0xa18] sm:$0xff]
    %v3637 = vld [vmem:[#allocation8 + $0xa20] sm:$0xff]
    %v3638 = vld [vmem:[#allocation8 + $0xa28] sm:$0xff]
    %v3639 = vld [vmem:[#allocation8 + $0xa30] sm:$0xff]
    %v3640 = vld [vmem:[#allocation8 + $0xa38] sm:$0xff]
    %v3641 = vld [vmem:[#allocation8 + $0xa40] sm:$0xff]
    %v3642 = vld [vmem:[#allocation8 + $0xa48] sm:$0xff]
    %v3643 = vld [vmem:[#allocation8 + $0xa50] sm:$0xff]
    %v3644 = vld [vmem:[#allocation8 + $0xa58] sm:$0xff]
    %v3645 = vld [vmem:[#allocation8 + $0xa60] sm:$0xff]
    %v3646 = vld [vmem:[#allocation8 + $0xa68] sm:$0xff]
    %v3647 = vld [vmem:[#allocation8 + $0xa70] sm:$0xff]
    %v3648 = vld [vmem:[#allocation8 + $0xa78] sm:$0xff]
    %v3649 = vld [vmem:[#allocation8 + $0xa80] sm:$0xff]
    %v3650 = vld [vmem:[#allocation8 + $0xa88] sm:$0xff]
    %v3651 = vld [vmem:[#allocation8 + $0xa90] sm:$0xff]
    %v3652 = vld [vmem:[#allocation8 + $0xa98] sm:$0xff]
    %v3653 = vld [vmem:[#allocation8 + $0xaa0] sm:$0xff]
    %v3654 = vld [vmem:[#allocation8 + $0xaa8] sm:$0xff]
    %v3655 = vld [vmem:[#allocation8 + $0xab0] sm:$0xff]
    %v3656 = vld [vmem:[#allocation8 + $0xab8] sm:$0xff]
    %v3657 = vld [vmem:[#allocation8 + $0xac0] sm:$0xff]
    %v3658 = vld [vmem:[#allocation8 + $0xac8] sm:$0xff]
    %v3659 = vld [vmem:[#allocation8 + $0xad0] sm:$0xff]
    %v3660 = vld [vmem:[#allocation8 + $0xad8] sm:$0xff]
    %v3661 = vld [vmem:[#allocation8 + $0xae0] sm:$0xff]
    %v3662 = vld [vmem:[#allocation8 + $0xae8] sm:$0xff]
    %v3663 = vld [vmem:[#allocation8 + $0xaf0] sm:$0xff]
    %v3664 = vld [vmem:[#allocation8 + $0xaf8] sm:$0xff]
    %v3665 = vld [vmem:[#allocation8 + $0xb00] sm:$0xff]
    %v3666 = vld [vmem:[#allocation8 + $0xb08] sm:$0xff]
    %v3667 = vld [vmem:[#allocation8 + $0xb10] sm:$0xff]
    %v3668 = vld [vmem:[#allocation8 + $0xb18] sm:$0xff]
    %v3669 = vld [vmem:[#allocation8 + $0xb20] sm:$0xff]
    %v3670 = vld [vmem:[#allocation8 + $0xb28] sm:$0xff]
    %v3671 = vld [vmem:[#allocation8 + $0xb30] sm:$0xff]
    %v3672 = vld [vmem:[#allocation8 + $0xb38] sm:$0xff]
    %v3673 = vld [vmem:[#allocation8 + $0xb40] sm:$0xff]
    %v3674 = vld [vmem:[#allocation8 + $0xb48] sm:$0xff]
    %v3675 = vld [vmem:[#allocation8 + $0xb50] sm:$0xff]
    %v3676 = vld [vmem:[#allocation8 + $0xb58] sm:$0xff]
    %v3677 = vld [vmem:[#allocation8 + $0xb60] sm:$0xff]
    %v3678 = vld [vmem:[#allocation8 + $0xb68] sm:$0xff]
    %v3679 = vld [vmem:[#allocation8 + $0xb70] sm:$0xff]
    %v3680 = vld [vmem:[#allocation8 + $0xb78] sm:$0xff]
    %v3681 = vld [vmem:[#allocation8 + $0xb80] sm:$0xff]
    %v3682 = vld [vmem:[#allocation8 + $0xb88] sm:$0xff]
    %v3683 = vld [vmem:[#allocation8 + $0xb90] sm:$0xff]
    %v3684 = vld [vmem:[#allocation8 + $0xb98] sm:$0xff]
    %v3685 = vld [vmem:[#allocation8 + $0xba0] sm:$0xff]
    %v3686 = vld [vmem:[#allocation8 + $0xba8] sm:$0xff]
    %v3687 = vld [vmem:[#allocation8 + $0xbb0] sm:$0xff]
    %v3688 = vld [vmem:[#allocation8 + $0xbb8] sm:$0xff]
    %v3689 = vld [vmem:[#allocation8 + $0xbc0] sm:$0xff]
    %v3690 = vld [vmem:[#allocation8 + $0xbc8] sm:$0xff]
    %v3691 = vld [vmem:[#allocation8 + $0xbd0] sm:$0xff]
    %v3692 = vld [vmem:[#allocation8 + $0xbd8] sm:$0xff]
    %v3693 = vld [vmem:[#allocation8 + $0xbe0] sm:$0xff]
    %v3694 = vld [vmem:[#allocation8 + $0xbe8] sm:$0xff]
    %v3695 = vld [vmem:[#allocation8 + $0xbf0] sm:$0xff]
    %v3696 = vld [vmem:[#allocation8 + $0xbf8] sm:$0xff]
    %v3697 = vld [vmem:[#allocation8 + $0xc00] sm:$0xff]
    %v3698 = vld [vmem:[#allocation8 + $0xc08] sm:$0xff]
    %v3699 = vld [vmem:[#allocation8 + $0xc10] sm:$0xff]
    %v3700 = vld [vmem:[#allocation8 + $0xc18] sm:$0xff]
    %v3701 = vld [vmem:[#allocation8 + $0xc20] sm:$0xff]
    %v3702 = vld [vmem:[#allocation8 + $0xc28] sm:$0xff]
    %v3703 = vld [vmem:[#allocation8 + $0xc30] sm:$0xff]
    %v3704 = vld [vmem:[#allocation8 + $0xc38] sm:$0xff]
    %v3705 = vld [vmem:[#allocation8 + $0xc40] sm:$0xff]
    %v3706 = vld [vmem:[#allocation8 + $0xc48] sm:$0xff]
    %v3707 = vld [vmem:[#allocation8 + $0xc50] sm:$0xff]
    %v3708 = vld [vmem:[#allocation8 + $0xc58] sm:$0xff]
    %v3709 = vld [vmem:[#allocation8 + $0xc60] sm:$0xff]
    %v3710 = vld [vmem:[#allocation8 + $0xc68] sm:$0xff]
    %v3711 = vld [vmem:[#allocation8 + $0xc70] sm:$0xff]
    %v3712 = vld [vmem:[#allocation8 + $0xc78] sm:$0xff]
    %v3713 = vld [vmem:[#allocation8 + $0xc80] sm:$0xff]
    %v3714 = vld [vmem:[#allocation8 + $0xc88] sm:$0xff]
    %v3715 = vld [vmem:[#allocation8 + $0xc90] sm:$0xff]
    %v3716 = vld [vmem:[#allocation8 + $0xc98] sm:$0xff]
    %v3717 = vld [vmem:[#allocation8 + $0xca0] sm:$0xff]
    %v3718 = vld [vmem:[#allocation8 + $0xca8] sm:$0xff]
    %v3719 = vld [vmem:[#allocation8 + $0xcb0] sm:$0xff]
    %v3720 = vld [vmem:[#allocation8 + $0xcb8] sm:$0xff]
    %v3721 = vld [vmem:[#allocation8 + $0xcc0] sm:$0xff]
    %v3722 = vld [vmem:[#allocation8 + $0xcc8] sm:$0xff]
    %v3723 = vld [vmem:[#allocation8 + $0xcd0] sm:$0xff]
    %v3724 = vld [vmem:[#allocation8 + $0xcd8] sm:$0xff]
    %v3725 = vld [vmem:[#allocation8 + $0xce0] sm:$0xff]
    %v3726 = vld [vmem:[#allocation8 + $0xce8] sm:$0xff]
    %v3727 = vld [vmem:[#allocation8 + $0xcf0] sm:$0xff]
    %v3728 = vld [vmem:[#allocation8 + $0xcf8] sm:$0xff]
    %v3729 = vld [vmem:[#allocation8 + $0xd00] sm:$0xff]
    %v3730 = vld [vmem:[#allocation8 + $0xd08] sm:$0xff]
    %v3731 = vld [vmem:[#allocation8 + $0xd10] sm:$0xff]
    %v3732 = vld [vmem:[#allocation8 + $0xd18] sm:$0xff]
    %v3733 = vld [vmem:[#allocation8 + $0xd20] sm:$0xff]
    %v3734 = vld [vmem:[#allocation8 + $0xd28] sm:$0xff]
    %v3735 = vld [vmem:[#allocation8 + $0xd30] sm:$0xff]
    %v3736 = vld [vmem:[#allocation8 + $0xd38] sm:$0xff]
    %v3737 = vld [vmem:[#allocation8 + $0xd40] sm:$0xff]
    %v3738 = vld [vmem:[#allocation8 + $0xd48] sm:$0xff]
    %v3739 = vld [vmem:[#allocation8 + $0xd50] sm:$0xff]
    %v3740 = vld [vmem:[#allocation8 + $0xd58] sm:$0xff]
    %v3741 = vld [vmem:[#allocation8 + $0xd60] sm:$0xff]
    %v3742 = vld [vmem:[#allocation8 + $0xd68] sm:$0xff]
    %v3743 = vld [vmem:[#allocation8 + $0xd70] sm:$0xff]
    %v3744 = vld [vmem:[#allocation8 + $0xd78] sm:$0xff]
    %v3745 = vld [vmem:[#allocation8 + $0xd80] sm:$0xff]
    %v3746 = vld [vmem:[#allocation8 + $0xd88] sm:$0xff]
    %v3747 = vld [vmem:[#allocation8 + $0xd90] sm:$0xff]
    %v3748 = vld [vmem:[#allocation8 + $0xd98] sm:$0xff]
    %v3749 = vld [vmem:[#allocation8 + $0xda0] sm:$0xff]
    %v3750 = vld [vmem:[#allocation8 + $0xda8] sm:$0xff]
    %v3751 = vld [vmem:[#allocation8 + $0xdb0] sm:$0xff]
    %v3752 = vld [vmem:[#allocation8 + $0xdb8] sm:$0xff]
    %v3753 = vld [vmem:[#allocation8 + $0xdc0] sm:$0xff]
    %v3754 = vld [vmem:[#allocation8 + $0xdc8] sm:$0xff]
    %v3755 = vld [vmem:[#allocation8 + $0xdd0] sm:$0xff]
    %v3756 = vld [vmem:[#allocation8 + $0xdd8] sm:$0xff]
    %v3757 = vld [vmem:[#allocation8 + $0xde0] sm:$0xff]
    %v3758 = vld [vmem:[#allocation8 + $0xde8] sm:$0xff]
    %v3759 = vld [vmem:[#allocation8 + $0xdf0] sm:$0xff]
    %v3760 = vld [vmem:[#allocation8 + $0xdf8] sm:$0xff]
    %v3761 = vld [vmem:[#allocation8 + $0xe00] sm:$0xff]
    %v3762 = vld [vmem:[#allocation8 + $0xe08] sm:$0xff]
    %v3763 = vld [vmem:[#allocation8 + $0xe10] sm:$0xff]
    %v3764 = vld [vmem:[#allocation8 + $0xe18] sm:$0xff]
    %v3765 = vld [vmem:[#allocation8 + $0xe20] sm:$0xff]
    %v3766 = vld [vmem:[#allocation8 + $0xe28] sm:$0xff]
    %v3767 = vld [vmem:[#allocation8 + $0xe30] sm:$0xff]
    %v3768 = vld [vmem:[#allocation8 + $0xe38] sm:$0xff]
    %v3769 = vld [vmem:[#allocation8 + $0xe40] sm:$0xff]
    %v3770 = vld [vmem:[#allocation8 + $0xe48] sm:$0xff]
    %v3771 = vld [vmem:[#allocation8 + $0xe50] sm:$0xff]
    %v3772 = vld [vmem:[#allocation8 + $0xe58] sm:$0xff]
    %v3773 = vld [vmem:[#allocation8 + $0xe60] sm:$0xff]
    %v3774 = vld [vmem:[#allocation8 + $0xe68] sm:$0xff]
    %v3775 = vld [vmem:[#allocation8 + $0xe70] sm:$0xff]
    %v3776 = vld [vmem:[#allocation8 + $0xe78] sm:$0xff]
    %v3777 = vld [vmem:[#allocation8 + $0xe80] sm:$0xff]
    %v3778 = vld [vmem:[#allocation8 + $0xe88] sm:$0xff]
    %v3779 = vld [vmem:[#allocation8 + $0xe90] sm:$0xff]
    %v3780 = vld [vmem:[#allocation8 + $0xe98] sm:$0xff]
    %v3781 = vld [vmem:[#allocation8 + $0xea0] sm:$0xff]
    %v3782 = vld [vmem:[#allocation8 + $0xea8] sm:$0xff]
    %v3783 = vld [vmem:[#allocation8 + $0xeb0] sm:$0xff]
    %v3784 = vld [vmem:[#allocation8 + $0xeb8] sm:$0xff]
    %v3785 = vld [vmem:[#allocation8 + $0xec0] sm:$0xff]
    %v3786 = vld [vmem:[#allocation8 + $0xec8] sm:$0xff]
    %v3787 = vld [vmem:[#allocation8 + $0xed0] sm:$0xff]
    %v3788 = vld [vmem:[#allocation8 + $0xed8] sm:$0xff]
    %v3789 = vld [vmem:[#allocation8 + $0xee0] sm:$0xff]
    %v3790 = vld [vmem:[#allocation8 + $0xee8] sm:$0xff]
    %v3791 = vld [vmem:[#allocation8 + $0xef0] sm:$0xff]
    %v3792 = vld [vmem:[#allocation8 + $0xef8] sm:$0xff]
    %v3793 = vld [vmem:[#allocation8 + $0xf00] sm:$0xff]
    %v3794 = vld [vmem:[#allocation8 + $0xf08] sm:$0xff]
    %v3795 = vld [vmem:[#allocation8 + $0xf10] sm:$0xff]
    %v3796 = vld [vmem:[#allocation8 + $0xf18] sm:$0xff]
    %v3797 = vld [vmem:[#allocation8 + $0xf20] sm:$0xff]
    %v3798 = vld [vmem:[#allocation8 + $0xf28] sm:$0xff]
    %v3799 = vld [vmem:[#allocation8 + $0xf30] sm:$0xff]
    %v3800 = vld [vmem:[#allocation8 + $0xf38] sm:$0xff]
    %v3801 = vld [vmem:[#allocation8 + $0xf40] sm:$0xff]
    %v3802 = vld [vmem:[#allocation8 + $0xf48] sm:$0xff]
    %v3803 = vld [vmem:[#allocation8 + $0xf50] sm:$0xff]
    %v3804 = vld [vmem:[#allocation8 + $0xf58] sm:$0xff]
    %v3805 = vld [vmem:[#allocation8 + $0xf60] sm:$0xff]
    %v3806 = vld [vmem:[#allocation8 + $0xf68] sm:$0xff]
    %v3807 = vld [vmem:[#allocation8 + $0xf70] sm:$0xff]
    %v3808 = vld [vmem:[#allocation8 + $0xf78] sm:$0xff]
    %v3809 = vld [vmem:[#allocation8 + $0xf80] sm:$0xff]
    %v3810 = vld [vmem:[#allocation8 + $0xf88] sm:$0xff]
    %v3811 = vld [vmem:[#allocation8 + $0xf90] sm:$0xff]
    %v3812 = vld [vmem:[#allocation8 + $0xf98] sm:$0xff]
    %v3813 = vld [vmem:[#allocation8 + $0xfa0] sm:$0xff]
    %v3814 = vld [vmem:[#allocation8 + $0xfa8] sm:$0xff]
    %v3815 = vld [vmem:[#allocation8 + $0xfb0] sm:$0xff]
    %v3816 = vld [vmem:[#allocation8 + $0xfb8] sm:$0xff]
    %v3817 = vld [vmem:[#allocation8 + $0xfc0] sm:$0xff]
    %v3818 = vld [vmem:[#allocation8 + $0xfc8] sm:$0xff]
    %v3819 = vld [vmem:[#allocation8 + $0xfd0] sm:$0xff]
    %v3820 = vld [vmem:[#allocation8 + $0xfd8] sm:$0xff]
    %v3821 = vld [vmem:[#allocation8 + $0xfe0] sm:$0xff]
    %v3822 = vld [vmem:[#allocation8 + $0xfe8] sm:$0xff]
    %v3823 = vld [vmem:[#allocation8 + $0xff0] sm:$0xff]
    %v3824 = vld [vmem:[#allocation8 + $0xff8] sm:$0xff]
    %v3825 = vld [vmem:[#allocation10] sm:$0xff]
    %v3827 = vperm.slane %v3825, 0
    %v3828 = vperm.slane %v3825, 1
    %v3829 = vperm.slane %v3825, 2
    %v3830 = vperm.slane %v3825, 3
    %v3831 = vperm.slane %v3825, 4
    %v3832 = vperm.slane %v3825, 5
    %v3833 = vperm.slane %v3825, 6
    %v3834 = vperm.slane %v3825, 7
    %v4355 = vunpack.c.l.b16 %v3313
    %v4356 = vunpack.c.h.b16 %v3313
    %v4357 = vunpack.c.l.b16 %v3314
    %v4358 = vunpack.c.h.b16 %v3314
    %v4359 = vunpack.c.l.b16 %v3315
    %v4360 = vunpack.c.h.b16 %v3315
    %v4361 = vunpack.c.l.b16 %v3316
    %v4362 = vunpack.c.h.b16 %v3316
    %v4363 = vunpack.c.l.b16 %v3317
    %v4364 = vunpack.c.h.b16 %v3317
    %v4365 = vunpack.c.l.b16 %v3318
    %v4366 = vunpack.c.h.b16 %v3318
    %v4367 = vunpack.c.l.b16 %v3319
    %v4368 = vunpack.c.h.b16 %v3319
    %v4369 = vunpack.c.l.b16 %v3320
    %v4370 = vunpack.c.h.b16 %v3320
    %v4371 = vunpack.c.l.b16 %v3321
    %v4372 = vunpack.c.h.b16 %v3321
    %v4373 = vunpack.c.l.b16 %v3322
    %v4374 = vunpack.c.h.b16 %v3322
    %v4375 = vunpack.c.l.b16 %v3323
    %v4376 = vunpack.c.h.b16 %v3323
    %v4377 = vunpack.c.l.b16 %v3324
    %v4378 = vunpack.c.h.b16 %v3324
    %v4379 = vunpack.c.l.b16 %v3325
    %v4380 = vunpack.c.h.b16 %v3325
    %v4381 = vunpack.c.l.b16 %v3326
    %v4382 = vunpack.c.h.b16 %v3326
    %v4383 = vunpack.c.l.b16 %v3327
    %v4384 = vunpack.c.h.b16 %v3327
    %v4385 = vunpack.c.l.b16 %v3328
    %v4386 = vunpack.c.h.b16 %v3328
    %v4387 = vunpack.c.l.b16 %v3329
    %v4388 = vunpack.c.h.b16 %v3329
    %v4389 = vunpack.c.l.b16 %v3330
    %v4390 = vunpack.c.h.b16 %v3330
    %v4391 = vunpack.c.l.b16 %v3331
    %v4392 = vunpack.c.h.b16 %v3331
    %v4393 = vunpack.c.l.b16 %v3332
    %v4394 = vunpack.c.h.b16 %v3332
    %v4395 = vunpack.c.l.b16 %v3333
    %v4396 = vunpack.c.h.b16 %v3333
    %v4397 = vunpack.c.l.b16 %v3334
    %v4398 = vunpack.c.h.b16 %v3334
    %v4399 = vunpack.c.l.b16 %v3335
    %v4400 = vunpack.c.h.b16 %v3335
    %v4401 = vunpack.c.l.b16 %v3336
    %v4402 = vunpack.c.h.b16 %v3336
    %v4403 = vunpack.c.l.b16 %v3337
    %v4404 = vunpack.c.h.b16 %v3337
    %v4405 = vunpack.c.l.b16 %v3338
    %v4406 = vunpack.c.h.b16 %v3338
    %v4407 = vunpack.c.l.b16 %v3339
    %v4408 = vunpack.c.h.b16 %v3339
    %v4409 = vunpack.c.l.b16 %v3340
    %v4410 = vunpack.c.h.b16 %v3340
    %v4411 = vunpack.c.l.b16 %v3341
    %v4412 = vunpack.c.h.b16 %v3341
    %v4413 = vunpack.c.l.b16 %v3342
    %v4414 = vunpack.c.h.b16 %v3342
    %v4415 = vunpack.c.l.b16 %v3343
    %v4416 = vunpack.c.h.b16 %v3343
    %v4417 = vunpack.c.l.b16 %v3344
    %v4418 = vunpack.c.h.b16 %v3344
    %v4419 = vunpack.c.l.b16 %v3345
    %v4420 = vunpack.c.h.b16 %v3345
    %v4421 = vunpack.c.l.b16 %v3346
    %v4422 = vunpack.c.h.b16 %v3346
    %v4423 = vunpack.c.l.b16 %v3347
    %v4424 = vunpack.c.h.b16 %v3347
    %v4425 = vunpack.c.l.b16 %v3348
    %v4426 = vunpack.c.h.b16 %v3348
    %v4427 = vunpack.c.l.b16 %v3349
    %v4428 = vunpack.c.h.b16 %v3349
    %v4429 = vunpack.c.l.b16 %v3350
    %v4430 = vunpack.c.h.b16 %v3350
    %v4431 = vunpack.c.l.b16 %v3351
    %v4432 = vunpack.c.h.b16 %v3351
    %v4433 = vunpack.c.l.b16 %v3352
    %v4434 = vunpack.c.h.b16 %v3352
    %v4435 = vunpack.c.l.b16 %v3353
    %v4436 = vunpack.c.h.b16 %v3353
    %v4437 = vunpack.c.l.b16 %v3354
    %v4438 = vunpack.c.h.b16 %v3354
    %v4439 = vunpack.c.l.b16 %v3355
    %v4440 = vunpack.c.h.b16 %v3355
    %v4441 = vunpack.c.l.b16 %v3356
    %v4442 = vunpack.c.h.b16 %v3356
    %v4443 = vunpack.c.l.b16 %v3357
    %v4444 = vunpack.c.h.b16 %v3357
    %v4445 = vunpack.c.l.b16 %v3358
    %v4446 = vunpack.c.h.b16 %v3358
    %v4447 = vunpack.c.l.b16 %v3359
    %v4448 = vunpack.c.h.b16 %v3359
    %v4449 = vunpack.c.l.b16 %v3360
    %v4450 = vunpack.c.h.b16 %v3360
    %v4451 = vunpack.c.l.b16 %v3361
    %v4452 = vunpack.c.h.b16 %v3361
    %v4453 = vunpack.c.l.b16 %v3362
    %v4454 = vunpack.c.h.b16 %v3362
    %v4455 = vunpack.c.l.b16 %v3363
    %v4456 = vunpack.c.h.b16 %v3363
    %v4457 = vunpack.c.l.b16 %v3364
    %v4458 = vunpack.c.h.b16 %v3364
    %v4459 = vunpack.c.l.b16 %v3365
    %v4460 = vunpack.c.h.b16 %v3365
    %v4461 = vunpack.c.l.b16 %v3366
    %v4462 = vunpack.c.h.b16 %v3366
    %v4463 = vunpack.c.l.b16 %v3367
    %v4464 = vunpack.c.h.b16 %v3367
    %v4465 = vunpack.c.l.b16 %v3368
    %v4466 = vunpack.c.h.b16 %v3368
    %v4467 = vunpack.c.l.b16 %v3369
    %v4468 = vunpack.c.h.b16 %v3369
    %v4469 = vunpack.c.l.b16 %v3370
    %v4470 = vunpack.c.h.b16 %v3370
    %v4471 = vunpack.c.l.b16 %v3371
    %v4472 = vunpack.c.h.b16 %v3371
    %v4473 = vunpack.c.l.b16 %v3372
    %v4474 = vunpack.c.h.b16 %v3372
    %v4475 = vunpack.c.l.b16 %v3373
    %v4476 = vunpack.c.h.b16 %v3373
    %v4477 = vunpack.c.l.b16 %v3374
    %v4478 = vunpack.c.h.b16 %v3374
    %v4479 = vunpack.c.l.b16 %v3375
    %v4480 = vunpack.c.h.b16 %v3375
    %v4481 = vunpack.c.l.b16 %v3376
    %v4482 = vunpack.c.h.b16 %v3376
    %v4483 = vunpack.c.l.b16 %v3377
    %v4484 = vunpack.c.h.b16 %v3377
    %v4485 = vunpack.c.l.b16 %v3378
    %v4486 = vunpack.c.h.b16 %v3378
    %v4487 = vunpack.c.l.b16 %v3379
    %v4488 = vunpack.c.h.b16 %v3379
    %v4489 = vunpack.c.l.b16 %v3380
    %v4490 = vunpack.c.h.b16 %v3380
    %v4491 = vunpack.c.l.b16 %v3381
    %v4492 = vunpack.c.h.b16 %v3381
    %v4493 = vunpack.c.l.b16 %v3382
    %v4494 = vunpack.c.h.b16 %v3382
    %v4495 = vunpack.c.l.b16 %v3383
    %v4496 = vunpack.c.h.b16 %v3383
    %v4497 = vunpack.c.l.b16 %v3384
    %v4498 = vunpack.c.h.b16 %v3384
    %v4499 = vunpack.c.l.b16 %v3385
    %v4500 = vunpack.c.h.b16 %v3385
    %v4501 = vunpack.c.l.b16 %v3386
    %v4502 = vunpack.c.h.b16 %v3386
    %v4503 = vunpack.c.l.b16 %v3387
    %v4504 = vunpack.c.h.b16 %v3387
    %v4505 = vunpack.c.l.b16 %v3388
    %v4506 = vunpack.c.h.b16 %v3388
    %v4507 = vunpack.c.l.b16 %v3389
    %v4508 = vunpack.c.h.b16 %v3389
    %v4509 = vunpack.c.l.b16 %v3390
    %v4510 = vunpack.c.h.b16 %v3390
    %v4511 = vunpack.c.l.b16 %v3391
    %v4512 = vunpack.c.h.b16 %v3391
    %v4513 = vunpack.c.l.b16 %v3392
    %v4514 = vunpack.c.h.b16 %v3392
    %v4515 = vunpack.c.l.b16 %v3393
    %v4516 = vunpack.c.h.b16 %v3393
    %v4517 = vunpack.c.l.b16 %v3394
    %v4518 = vunpack.c.h.b16 %v3394
    %v4519 = vunpack.c.l.b16 %v3395
    %v4520 = vunpack.c.h.b16 %v3395
    %v4521 = vunpack.c.l.b16 %v3396
    %v4522 = vunpack.c.h.b16 %v3396
    %v4523 = vunpack.c.l.b16 %v3397
    %v4524 = vunpack.c.h.b16 %v3397
    %v4525 = vunpack.c.l.b16 %v3398
    %v4526 = vunpack.c.h.b16 %v3398
    %v4527 = vunpack.c.l.b16 %v3399
    %v4528 = vunpack.c.h.b16 %v3399
    %v4529 = vunpack.c.l.b16 %v3400
    %v4530 = vunpack.c.h.b16 %v3400
    %v4531 = vunpack.c.l.b16 %v3401
    %v4532 = vunpack.c.h.b16 %v3401
    %v4533 = vunpack.c.l.b16 %v3402
    %v4534 = vunpack.c.h.b16 %v3402
    %v4535 = vunpack.c.l.b16 %v3403
    %v4536 = vunpack.c.h.b16 %v3403
    %v4537 = vunpack.c.l.b16 %v3404
    %v4538 = vunpack.c.h.b16 %v3404
    %v4539 = vunpack.c.l.b16 %v3405
    %v4540 = vunpack.c.h.b16 %v3405
    %v4541 = vunpack.c.l.b16 %v3406
    %v4542 = vunpack.c.h.b16 %v3406
    %v4543 = vunpack.c.l.b16 %v3407
    %v4544 = vunpack.c.h.b16 %v3407
    %v4545 = vunpack.c.l.b16 %v3408
    %v4546 = vunpack.c.h.b16 %v3408
    %v4547 = vunpack.c.l.b16 %v3409
    %v4548 = vunpack.c.h.b16 %v3409
    %v4549 = vunpack.c.l.b16 %v3410
    %v4550 = vunpack.c.h.b16 %v3410
    %v4551 = vunpack.c.l.b16 %v3411
    %v4552 = vunpack.c.h.b16 %v3411
    %v4553 = vunpack.c.l.b16 %v3412
    %v4554 = vunpack.c.h.b16 %v3412
    %v4555 = vunpack.c.l.b16 %v3413
    %v4556 = vunpack.c.h.b16 %v3413
    %v4557 = vunpack.c.l.b16 %v3414
    %v4558 = vunpack.c.h.b16 %v3414
    %v4559 = vunpack.c.l.b16 %v3415
    %v4560 = vunpack.c.h.b16 %v3415
    %v4561 = vunpack.c.l.b16 %v3416
    %v4562 = vunpack.c.h.b16 %v3416
    %v4563 = vunpack.c.l.b16 %v3417
    %v4564 = vunpack.c.h.b16 %v3417
    %v4565 = vunpack.c.l.b16 %v3418
    %v4566 = vunpack.c.h.b16 %v3418
    %v4567 = vunpack.c.l.b16 %v3419
    %v4568 = vunpack.c.h.b16 %v3419
    %v4569 = vunpack.c.l.b16 %v3420
    %v4570 = vunpack.c.h.b16 %v3420
    %v4571 = vunpack.c.l.b16 %v3421
    %v4572 = vunpack.c.h.b16 %v3421
    %v4573 = vunpack.c.l.b16 %v3422
    %v4574 = vunpack.c.h.b16 %v3422
    %v4575 = vunpack.c.l.b16 %v3423
    %v4576 = vunpack.c.h.b16 %v3423
    %v4577 = vunpack.c.l.b16 %v3424
    %v4578 = vunpack.c.h.b16 %v3424
    %v4579 = vunpack.c.l.b16 %v3425
    %v4580 = vunpack.c.h.b16 %v3425
    %v4581 = vunpack.c.l.b16 %v3426
    %v4582 = vunpack.c.h.b16 %v3426
    %v4583 = vunpack.c.l.b16 %v3427
    %v4584 = vunpack.c.h.b16 %v3427
    %v4585 = vunpack.c.l.b16 %v3428
    %v4586 = vunpack.c.h.b16 %v3428
    %v4587 = vunpack.c.l.b16 %v3429
    %v4588 = vunpack.c.h.b16 %v3429
    %v4589 = vunpack.c.l.b16 %v3430
    %v4590 = vunpack.c.h.b16 %v3430
    %v4591 = vunpack.c.l.b16 %v3431
    %v4592 = vunpack.c.h.b16 %v3431
    %v4593 = vunpack.c.l.b16 %v3432
    %v4594 = vunpack.c.h.b16 %v3432
    %v4595 = vunpack.c.l.b16 %v3433
    %v4596 = vunpack.c.h.b16 %v3433
    %v4597 = vunpack.c.l.b16 %v3434
    %v4598 = vunpack.c.h.b16 %v3434
    %v4599 = vunpack.c.l.b16 %v3435
    %v4600 = vunpack.c.h.b16 %v3435
    %v4601 = vunpack.c.l.b16 %v3436
    %v4602 = vunpack.c.h.b16 %v3436
    %v4603 = vunpack.c.l.b16 %v3437
    %v4604 = vunpack.c.h.b16 %v3437
    %v4605 = vunpack.c.l.b16 %v3438
    %v4606 = vunpack.c.h.b16 %v3438
    %v4607 = vunpack.c.l.b16 %v3439
    %v4608 = vunpack.c.h.b16 %v3439
    %v4609 = vunpack.c.l.b16 %v3440
    %v4610 = vunpack.c.h.b16 %v3440
    %v4611 = vunpack.c.l.b16 %v3441
    %v4612 = vunpack.c.h.b16 %v3441
    %v4613 = vunpack.c.l.b16 %v3442
    %v4614 = vunpack.c.h.b16 %v3442
    %v4615 = vunpack.c.l.b16 %v3443
    %v4616 = vunpack.c.h.b16 %v3443
    %v4617 = vunpack.c.l.b16 %v3444
    %v4618 = vunpack.c.h.b16 %v3444
    %v4619 = vunpack.c.l.b16 %v3445
    %v4620 = vunpack.c.h.b16 %v3445
    %v4621 = vunpack.c.l.b16 %v3446
    %v4622 = vunpack.c.h.b16 %v3446
    %v4623 = vunpack.c.l.b16 %v3447
    %v4624 = vunpack.c.h.b16 %v3447
    %v4625 = vunpack.c.l.b16 %v3448
    %v4626 = vunpack.c.h.b16 %v3448
    %v4627 = vunpack.c.l.b16 %v3449
    %v4628 = vunpack.c.h.b16 %v3449
    %v4629 = vunpack.c.l.b16 %v3450
    %v4630 = vunpack.c.h.b16 %v3450
    %v4631 = vunpack.c.l.b16 %v3451
    %v4632 = vunpack.c.h.b16 %v3451
    %v4633 = vunpack.c.l.b16 %v3452
    %v4634 = vunpack.c.h.b16 %v3452
    %v4635 = vunpack.c.l.b16 %v3453
    %v4636 = vunpack.c.h.b16 %v3453
    %v4637 = vunpack.c.l.b16 %v3454
    %v4638 = vunpack.c.h.b16 %v3454
    %v4639 = vunpack.c.l.b16 %v3455
    %v4640 = vunpack.c.h.b16 %v3455
    %v4641 = vunpack.c.l.b16 %v3456
    %v4642 = vunpack.c.h.b16 %v3456
    %v4643 = vunpack.c.l.b16 %v3457
    %v4644 = vunpack.c.h.b16 %v3457
    %v4645 = vunpack.c.l.b16 %v3458
    %v4646 = vunpack.c.h.b16 %v3458
    %v4647 = vunpack.c.l.b16 %v3459
    %v4648 = vunpack.c.h.b16 %v3459
    %v4649 = vunpack.c.l.b16 %v3460
    %v4650 = vunpack.c.h.b16 %v3460
    %v4651 = vunpack.c.l.b16 %v3461
    %v4652 = vunpack.c.h.b16 %v3461
    %v4653 = vunpack.c.l.b16 %v3462
    %v4654 = vunpack.c.h.b16 %v3462
    %v4655 = vunpack.c.l.b16 %v3463
    %v4656 = vunpack.c.h.b16 %v3463
    %v4657 = vunpack.c.l.b16 %v3464
    %v4658 = vunpack.c.h.b16 %v3464
    %v4659 = vunpack.c.l.b16 %v3465
    %v4660 = vunpack.c.h.b16 %v3465
    %v4661 = vunpack.c.l.b16 %v3466
    %v4662 = vunpack.c.h.b16 %v3466
    %v4663 = vunpack.c.l.b16 %v3467
    %v4664 = vunpack.c.h.b16 %v3467
    %v4665 = vunpack.c.l.b16 %v3468
    %v4666 = vunpack.c.h.b16 %v3468
    %v4667 = vunpack.c.l.b16 %v3469
    %v4668 = vunpack.c.h.b16 %v3469
    %v4669 = vunpack.c.l.b16 %v3470
    %v4670 = vunpack.c.h.b16 %v3470
    %v4671 = vunpack.c.l.b16 %v3471
    %v4672 = vunpack.c.h.b16 %v3471
    %v4673 = vunpack.c.l.b16 %v3472
    %v4674 = vunpack.c.h.b16 %v3472
    %v4675 = vunpack.c.l.b16 %v3473
    %v4676 = vunpack.c.h.b16 %v3473
    %v4677 = vunpack.c.l.b16 %v3474
    %v4678 = vunpack.c.h.b16 %v3474
    %v4679 = vunpack.c.l.b16 %v3475
    %v4680 = vunpack.c.h.b16 %v3475
    %v4681 = vunpack.c.l.b16 %v3476
    %v4682 = vunpack.c.h.b16 %v3476
    %v4683 = vunpack.c.l.b16 %v3477
    %v4684 = vunpack.c.h.b16 %v3477
    %v4685 = vunpack.c.l.b16 %v3478
    %v4686 = vunpack.c.h.b16 %v3478
    %v4687 = vunpack.c.l.b16 %v3479
    %v4688 = vunpack.c.h.b16 %v3479
    %v4689 = vunpack.c.l.b16 %v3480
    %v4690 = vunpack.c.h.b16 %v3480
    %v4691 = vunpack.c.l.b16 %v3481
    %v4692 = vunpack.c.h.b16 %v3481
    %v4693 = vunpack.c.l.b16 %v3482
    %v4694 = vunpack.c.h.b16 %v3482
    %v4695 = vunpack.c.l.b16 %v3483
    %v4696 = vunpack.c.h.b16 %v3483
    %v4697 = vunpack.c.l.b16 %v3484
    %v4698 = vunpack.c.h.b16 %v3484
    %v4699 = vunpack.c.l.b16 %v3485
    %v4700 = vunpack.c.h.b16 %v3485
    %v4701 = vunpack.c.l.b16 %v3486
    %v4702 = vunpack.c.h.b16 %v3486
    %v4703 = vunpack.c.l.b16 %v3487
    %v4704 = vunpack.c.h.b16 %v3487
    %v4705 = vunpack.c.l.b16 %v3488
    %v4706 = vunpack.c.h.b16 %v3488
    %v4707 = vunpack.c.l.b16 %v3489
    %v4708 = vunpack.c.h.b16 %v3489
    %v4709 = vunpack.c.l.b16 %v3490
    %v4710 = vunpack.c.h.b16 %v3490
    %v4711 = vunpack.c.l.b16 %v3491
    %v4712 = vunpack.c.h.b16 %v3491
    %v4713 = vunpack.c.l.b16 %v3492
    %v4714 = vunpack.c.h.b16 %v3492
    %v4715 = vunpack.c.l.b16 %v3493
    %v4716 = vunpack.c.h.b16 %v3493
    %v4717 = vunpack.c.l.b16 %v3494
    %v4718 = vunpack.c.h.b16 %v3494
    %v4719 = vunpack.c.l.b16 %v3495
    %v4720 = vunpack.c.h.b16 %v3495
    %v4721 = vunpack.c.l.b16 %v3496
    %v4722 = vunpack.c.h.b16 %v3496
    %v4723 = vunpack.c.l.b16 %v3497
    %v4724 = vunpack.c.h.b16 %v3497
    %v4725 = vunpack.c.l.b16 %v3498
    %v4726 = vunpack.c.h.b16 %v3498
    %v4727 = vunpack.c.l.b16 %v3499
    %v4728 = vunpack.c.h.b16 %v3499
    %v4729 = vunpack.c.l.b16 %v3500
    %v4730 = vunpack.c.h.b16 %v3500
    %v4731 = vunpack.c.l.b16 %v3501
    %v4732 = vunpack.c.h.b16 %v3501
    %v4733 = vunpack.c.l.b16 %v3502
    %v4734 = vunpack.c.h.b16 %v3502
    %v4735 = vunpack.c.l.b16 %v3503
    %v4736 = vunpack.c.h.b16 %v3503
    %v4737 = vunpack.c.l.b16 %v3504
    %v4738 = vunpack.c.h.b16 %v3504
    %v4739 = vunpack.c.l.b16 %v3505
    %v4740 = vunpack.c.h.b16 %v3505
    %v4741 = vunpack.c.l.b16 %v3506
    %v4742 = vunpack.c.h.b16 %v3506
    %v4743 = vunpack.c.l.b16 %v3507
    %v4744 = vunpack.c.h.b16 %v3507
    %v4745 = vunpack.c.l.b16 %v3508
    %v4746 = vunpack.c.h.b16 %v3508
    %v4747 = vunpack.c.l.b16 %v3509
    %v4748 = vunpack.c.h.b16 %v3509
    %v4749 = vunpack.c.l.b16 %v3510
    %v4750 = vunpack.c.h.b16 %v3510
    %v4751 = vunpack.c.l.b16 %v3511
    %v4752 = vunpack.c.h.b16 %v3511
    %v4753 = vunpack.c.l.b16 %v3512
    %v4754 = vunpack.c.h.b16 %v3512
    %v4755 = vunpack.c.l.b16 %v3513
    %v4756 = vunpack.c.h.b16 %v3513
    %v4757 = vunpack.c.l.b16 %v3514
    %v4758 = vunpack.c.h.b16 %v3514
    %v4759 = vunpack.c.l.b16 %v3515
    %v4760 = vunpack.c.h.b16 %v3515
    %v4761 = vunpack.c.l.b16 %v3516
    %v4762 = vunpack.c.h.b16 %v3516
    %v4763 = vunpack.c.l.b16 %v3517
    %v4764 = vunpack.c.h.b16 %v3517
    %v4765 = vunpack.c.l.b16 %v3518
    %v4766 = vunpack.c.h.b16 %v3518
    %v4767 = vunpack.c.l.b16 %v3519
    %v4768 = vunpack.c.h.b16 %v3519
    %v4769 = vunpack.c.l.b16 %v3520
    %v4770 = vunpack.c.h.b16 %v3520
    %v4771 = vunpack.c.l.b16 %v3521
    %v4772 = vunpack.c.h.b16 %v3521
    %v4773 = vunpack.c.l.b16 %v3522
    %v4774 = vunpack.c.h.b16 %v3522
    %v4775 = vunpack.c.l.b16 %v3523
    %v4776 = vunpack.c.h.b16 %v3523
    %v4777 = vunpack.c.l.b16 %v3524
    %v4778 = vunpack.c.h.b16 %v3524
    %v4779 = vunpack.c.l.b16 %v3525
    %v4780 = vunpack.c.h.b16 %v3525
    %v4781 = vunpack.c.l.b16 %v3526
    %v4782 = vunpack.c.h.b16 %v3526
    %v4783 = vunpack.c.l.b16 %v3527
    %v4784 = vunpack.c.h.b16 %v3527
    %v4785 = vunpack.c.l.b16 %v3528
    %v4786 = vunpack.c.h.b16 %v3528
    %v4787 = vunpack.c.l.b16 %v3529
    %v4788 = vunpack.c.h.b16 %v3529
    %v4789 = vunpack.c.l.b16 %v3530
    %v4790 = vunpack.c.h.b16 %v3530
    %v4791 = vunpack.c.l.b16 %v3531
    %v4792 = vunpack.c.h.b16 %v3531
    %v4793 = vunpack.c.l.b16 %v3532
    %v4794 = vunpack.c.h.b16 %v3532
    %v4795 = vunpack.c.l.b16 %v3533
    %v4796 = vunpack.c.h.b16 %v3533
    %v4797 = vunpack.c.l.b16 %v3534
    %v4798 = vunpack.c.h.b16 %v3534
    %v4799 = vunpack.c.l.b16 %v3535
    %v4800 = vunpack.c.h.b16 %v3535
    %v4801 = vunpack.c.l.b16 %v3536
    %v4802 = vunpack.c.h.b16 %v3536
    %v4803 = vunpack.c.l.b16 %v3537
    %v4804 = vunpack.c.h.b16 %v3537
    %v4805 = vunpack.c.l.b16 %v3538
    %v4806 = vunpack.c.h.b16 %v3538
    %v4807 = vunpack.c.l.b16 %v3539
    %v4808 = vunpack.c.h.b16 %v3539
    %v4809 = vunpack.c.l.b16 %v3540
    %v4810 = vunpack.c.h.b16 %v3540
    %v4811 = vunpack.c.l.b16 %v3541
    %v4812 = vunpack.c.h.b16 %v3541
    %v4813 = vunpack.c.l.b16 %v3542
    %v4814 = vunpack.c.h.b16 %v3542
    %v4815 = vunpack.c.l.b16 %v3543
    %v4816 = vunpack.c.h.b16 %v3543
    %v4817 = vunpack.c.l.b16 %v3544
    %v4818 = vunpack.c.h.b16 %v3544
    %v4819 = vunpack.c.l.b16 %v3545
    %v4820 = vunpack.c.h.b16 %v3545
    %v4821 = vunpack.c.l.b16 %v3546
    %v4822 = vunpack.c.h.b16 %v3546
    %v4823 = vunpack.c.l.b16 %v3547
    %v4824 = vunpack.c.h.b16 %v3547
    %v4825 = vunpack.c.l.b16 %v3548
    %v4826 = vunpack.c.h.b16 %v3548
    %v4827 = vunpack.c.l.b16 %v3549
    %v4828 = vunpack.c.h.b16 %v3549
    %v4829 = vunpack.c.l.b16 %v3550
    %v4830 = vunpack.c.h.b16 %v3550
    %v4831 = vunpack.c.l.b16 %v3551
    %v4832 = vunpack.c.h.b16 %v3551
    %v4833 = vunpack.c.l.b16 %v3552
    %v4834 = vunpack.c.h.b16 %v3552
    %v4835 = vunpack.c.l.b16 %v3553
    %v4836 = vunpack.c.h.b16 %v3553
    %v4837 = vunpack.c.l.b16 %v3554
    %v4838 = vunpack.c.h.b16 %v3554
    %v4839 = vunpack.c.l.b16 %v3555
    %v4840 = vunpack.c.h.b16 %v3555
    %v4841 = vunpack.c.l.b16 %v3556
    %v4842 = vunpack.c.h.b16 %v3556
    %v4843 = vunpack.c.l.b16 %v3557
    %v4844 = vunpack.c.h.b16 %v3557
    %v4845 = vunpack.c.l.b16 %v3558
    %v4846 = vunpack.c.h.b16 %v3558
    %v4847 = vunpack.c.l.b16 %v3559
    %v4848 = vunpack.c.h.b16 %v3559
    %v4849 = vunpack.c.l.b16 %v3560
    %v4850 = vunpack.c.h.b16 %v3560
    %v4851 = vunpack.c.l.b16 %v3561
    %v4852 = vunpack.c.h.b16 %v3561
    %v4853 = vunpack.c.l.b16 %v3562
    %v4854 = vunpack.c.h.b16 %v3562
    %v4855 = vunpack.c.l.b16 %v3563
    %v4856 = vunpack.c.h.b16 %v3563
    %v4857 = vunpack.c.l.b16 %v3564
    %v4858 = vunpack.c.h.b16 %v3564
    %v4859 = vunpack.c.l.b16 %v3565
    %v4860 = vunpack.c.h.b16 %v3565
    %v4861 = vunpack.c.l.b16 %v3566
    %v4862 = vunpack.c.h.b16 %v3566
    %v4863 = vunpack.c.l.b16 %v3567
    %v4864 = vunpack.c.h.b16 %v3567
    %v4865 = vunpack.c.l.b16 %v3568
    %v4866 = vunpack.c.h.b16 %v3568
    %v4867 = vunpack.c.l.b16 %v3569
    %v4868 = vunpack.c.h.b16 %v3569
    %v4869 = vunpack.c.l.b16 %v3570
    %v4870 = vunpack.c.h.b16 %v3570
    %v4871 = vunpack.c.l.b16 %v3571
    %v4872 = vunpack.c.h.b16 %v3571
    %v4873 = vunpack.c.l.b16 %v3572
    %v4874 = vunpack.c.h.b16 %v3572
    %v4875 = vunpack.c.l.b16 %v3573
    %v4876 = vunpack.c.h.b16 %v3573
    %v4877 = vunpack.c.l.b16 %v3574
    %v4878 = vunpack.c.h.b16 %v3574
    %v4879 = vunpack.c.l.b16 %v3575
    %v4880 = vunpack.c.h.b16 %v3575
    %v4881 = vunpack.c.l.b16 %v3576
    %v4882 = vunpack.c.h.b16 %v3576
    %v4883 = vunpack.c.l.b16 %v3577
    %v4884 = vunpack.c.h.b16 %v3577
    %v4885 = vunpack.c.l.b16 %v3578
    %v4886 = vunpack.c.h.b16 %v3578
    %v4887 = vunpack.c.l.b16 %v3579
    %v4888 = vunpack.c.h.b16 %v3579
    %v4889 = vunpack.c.l.b16 %v3580
    %v4890 = vunpack.c.h.b16 %v3580
    %v4891 = vunpack.c.l.b16 %v3581
    %v4892 = vunpack.c.h.b16 %v3581
    %v4893 = vunpack.c.l.b16 %v3582
    %v4894 = vunpack.c.h.b16 %v3582
    %v4895 = vunpack.c.l.b16 %v3583
    %v4896 = vunpack.c.h.b16 %v3583
    %v4897 = vunpack.c.l.b16 %v3584
    %v4898 = vunpack.c.h.b16 %v3584
    %v4899 = vunpack.c.l.b16 %v3585
    %v4900 = vunpack.c.h.b16 %v3585
    %v4901 = vunpack.c.l.b16 %v3586
    %v4902 = vunpack.c.h.b16 %v3586
    %v4903 = vunpack.c.l.b16 %v3587
    %v4904 = vunpack.c.h.b16 %v3587
    %v4905 = vunpack.c.l.b16 %v3588
    %v4906 = vunpack.c.h.b16 %v3588
    %v4907 = vunpack.c.l.b16 %v3589
    %v4908 = vunpack.c.h.b16 %v3589
    %v4909 = vunpack.c.l.b16 %v3590
    %v4910 = vunpack.c.h.b16 %v3590
    %v4911 = vunpack.c.l.b16 %v3591
    %v4912 = vunpack.c.h.b16 %v3591
    %v4913 = vunpack.c.l.b16 %v3592
    %v4914 = vunpack.c.h.b16 %v3592
    %v4915 = vunpack.c.l.b16 %v3593
    %v4916 = vunpack.c.h.b16 %v3593
    %v4917 = vunpack.c.l.b16 %v3594
    %v4918 = vunpack.c.h.b16 %v3594
    %v4919 = vunpack.c.l.b16 %v3595
    %v4920 = vunpack.c.h.b16 %v3595
    %v4921 = vunpack.c.l.b16 %v3596
    %v4922 = vunpack.c.h.b16 %v3596
    %v4923 = vunpack.c.l.b16 %v3597
    %v4924 = vunpack.c.h.b16 %v3597
    %v4925 = vunpack.c.l.b16 %v3598
    %v4926 = vunpack.c.h.b16 %v3598
    %v4927 = vunpack.c.l.b16 %v3599
    %v4928 = vunpack.c.h.b16 %v3599
    %v4929 = vunpack.c.l.b16 %v3600
    %v4930 = vunpack.c.h.b16 %v3600
    %v4931 = vunpack.c.l.b16 %v3601
    %v4932 = vunpack.c.h.b16 %v3601
    %v4933 = vunpack.c.l.b16 %v3602
    %v4934 = vunpack.c.h.b16 %v3602
    %v4935 = vunpack.c.l.b16 %v3603
    %v4936 = vunpack.c.h.b16 %v3603
    %v4937 = vunpack.c.l.b16 %v3604
    %v4938 = vunpack.c.h.b16 %v3604
    %v4939 = vunpack.c.l.b16 %v3605
    %v4940 = vunpack.c.h.b16 %v3605
    %v4941 = vunpack.c.l.b16 %v3606
    %v4942 = vunpack.c.h.b16 %v3606
    %v4943 = vunpack.c.l.b16 %v3607
    %v4944 = vunpack.c.h.b16 %v3607
    %v4945 = vunpack.c.l.b16 %v3608
    %v4946 = vunpack.c.h.b16 %v3608
    %v4947 = vunpack.c.l.b16 %v3609
    %v4948 = vunpack.c.h.b16 %v3609
    %v4949 = vunpack.c.l.b16 %v3610
    %v4950 = vunpack.c.h.b16 %v3610
    %v4951 = vunpack.c.l.b16 %v3611
    %v4952 = vunpack.c.h.b16 %v3611
    %v4953 = vunpack.c.l.b16 %v3612
    %v4954 = vunpack.c.h.b16 %v3612
    %v4955 = vunpack.c.l.b16 %v3613
    %v4956 = vunpack.c.h.b16 %v3613
    %v4957 = vunpack.c.l.b16 %v3614
    %v4958 = vunpack.c.h.b16 %v3614
    %v4959 = vunpack.c.l.b16 %v3615
    %v4960 = vunpack.c.h.b16 %v3615
    %v4961 = vunpack.c.l.b16 %v3616
    %v4962 = vunpack.c.h.b16 %v3616
    %v4963 = vunpack.c.l.b16 %v3617
    %v4964 = vunpack.c.h.b16 %v3617
    %v4965 = vunpack.c.l.b16 %v3618
    %v4966 = vunpack.c.h.b16 %v3618
    %v4967 = vunpack.c.l.b16 %v3619
    %v4968 = vunpack.c.h.b16 %v3619
    %v4969 = vunpack.c.l.b16 %v3620
    %v4970 = vunpack.c.h.b16 %v3620
    %v4971 = vunpack.c.l.b16 %v3621
    %v4972 = vunpack.c.h.b16 %v3621
    %v4973 = vunpack.c.l.b16 %v3622
    %v4974 = vunpack.c.h.b16 %v3622
    %v4975 = vunpack.c.l.b16 %v3623
    %v4976 = vunpack.c.h.b16 %v3623
    %v4977 = vunpack.c.l.b16 %v3624
    %v4978 = vunpack.c.h.b16 %v3624
    %v4979 = vunpack.c.l.b16 %v3625
    %v4980 = vunpack.c.h.b16 %v3625
    %v4981 = vunpack.c.l.b16 %v3626
    %v4982 = vunpack.c.h.b16 %v3626
    %v4983 = vunpack.c.l.b16 %v3627
    %v4984 = vunpack.c.h.b16 %v3627
    %v4985 = vunpack.c.l.b16 %v3628
    %v4986 = vunpack.c.h.b16 %v3628
    %v4987 = vunpack.c.l.b16 %v3629
    %v4988 = vunpack.c.h.b16 %v3629
    %v4989 = vunpack.c.l.b16 %v3630
    %v4990 = vunpack.c.h.b16 %v3630
    %v4991 = vunpack.c.l.b16 %v3631
    %v4992 = vunpack.c.h.b16 %v3631
    %v4993 = vunpack.c.l.b16 %v3632
    %v4994 = vunpack.c.h.b16 %v3632
    %v4995 = vunpack.c.l.b16 %v3633
    %v4996 = vunpack.c.h.b16 %v3633
    %v4997 = vunpack.c.l.b16 %v3634
    %v4998 = vunpack.c.h.b16 %v3634
    %v4999 = vunpack.c.l.b16 %v3635
    %v5000 = vunpack.c.h.b16 %v3635
    %v5001 = vunpack.c.l.b16 %v3636
    %v5002 = vunpack.c.h.b16 %v3636
    %v5003 = vunpack.c.l.b16 %v3637
    %v5004 = vunpack.c.h.b16 %v3637
    %v5005 = vunpack.c.l.b16 %v3638
    %v5006 = vunpack.c.h.b16 %v3638
    %v5007 = vunpack.c.l.b16 %v3639
    %v5008 = vunpack.c.h.b16 %v3639
    %v5009 = vunpack.c.l.b16 %v3640
    %v5010 = vunpack.c.h.b16 %v3640
    %v5011 = vunpack.c.l.b16 %v3641
    %v5012 = vunpack.c.h.b16 %v3641
    %v5013 = vunpack.c.l.b16 %v3642
    %v5014 = vunpack.c.h.b16 %v3642
    %v5015 = vunpack.c.l.b16 %v3643
    %v5016 = vunpack.c.h.b16 %v3643
    %v5017 = vunpack.c.l.b16 %v3644
    %v5018 = vunpack.c.h.b16 %v3644
    %v5019 = vunpack.c.l.b16 %v3645
    %v5020 = vunpack.c.h.b16 %v3645
    %v5021 = vunpack.c.l.b16 %v3646
    %v5022 = vunpack.c.h.b16 %v3646
    %v5023 = vunpack.c.l.b16 %v3647
    %v5024 = vunpack.c.h.b16 %v3647
    %v5025 = vunpack.c.l.b16 %v3648
    %v5026 = vunpack.c.h.b16 %v3648
    %v5027 = vunpack.c.l.b16 %v3649
    %v5028 = vunpack.c.h.b16 %v3649
    %v5029 = vunpack.c.l.b16 %v3650
    %v5030 = vunpack.c.h.b16 %v3650
    %v5031 = vunpack.c.l.b16 %v3651
    %v5032 = vunpack.c.h.b16 %v3651
    %v5033 = vunpack.c.l.b16 %v3652
    %v5034 = vunpack.c.h.b16 %v3652
    %v5035 = vunpack.c.l.b16 %v3653
    %v5036 = vunpack.c.h.b16 %v3653
    %v5037 = vunpack.c.l.b16 %v3654
    %v5038 = vunpack.c.h.b16 %v3654
    %v5039 = vunpack.c.l.b16 %v3655
    %v5040 = vunpack.c.h.b16 %v3655
    %v5041 = vunpack.c.l.b16 %v3656
    %v5042 = vunpack.c.h.b16 %v3656
    %v5043 = vunpack.c.l.b16 %v3657
    %v5044 = vunpack.c.h.b16 %v3657
    %v5045 = vunpack.c.l.b16 %v3658
    %v5046 = vunpack.c.h.b16 %v3658
    %v5047 = vunpack.c.l.b16 %v3659
    %v5048 = vunpack.c.h.b16 %v3659
    %v5049 = vunpack.c.l.b16 %v3660
    %v5050 = vunpack.c.h.b16 %v3660
    %v5051 = vunpack.c.l.b16 %v3661
    %v5052 = vunpack.c.h.b16 %v3661
    %v5053 = vunpack.c.l.b16 %v3662
    %v5054 = vunpack.c.h.b16 %v3662
    %v5055 = vunpack.c.l.b16 %v3663
    %v5056 = vunpack.c.h.b16 %v3663
    %v5057 = vunpack.c.l.b16 %v3664
    %v5058 = vunpack.c.h.b16 %v3664
    %v5059 = vunpack.c.l.b16 %v3665
    %v5060 = vunpack.c.h.b16 %v3665
    %v5061 = vunpack.c.l.b16 %v3666
    %v5062 = vunpack.c.h.b16 %v3666
    %v5063 = vunpack.c.l.b16 %v3667
    %v5064 = vunpack.c.h.b16 %v3667
    %v5065 = vunpack.c.l.b16 %v3668
    %v5066 = vunpack.c.h.b16 %v3668
    %v5067 = vunpack.c.l.b16 %v3669
    %v5068 = vunpack.c.h.b16 %v3669
    %v5069 = vunpack.c.l.b16 %v3670
    %v5070 = vunpack.c.h.b16 %v3670
    %v5071 = vunpack.c.l.b16 %v3671
    %v5072 = vunpack.c.h.b16 %v3671
    %v5073 = vunpack.c.l.b16 %v3672
    %v5074 = vunpack.c.h.b16 %v3672
    %v5075 = vunpack.c.l.b16 %v3673
    %v5076 = vunpack.c.h.b16 %v3673
    %v5077 = vunpack.c.l.b16 %v3674
    %v5078 = vunpack.c.h.b16 %v3674
    %v5079 = vunpack.c.l.b16 %v3675
    %v5080 = vunpack.c.h.b16 %v3675
    %v5081 = vunpack.c.l.b16 %v3676
    %v5082 = vunpack.c.h.b16 %v3676
    %v5083 = vunpack.c.l.b16 %v3677
    %v5084 = vunpack.c.h.b16 %v3677
    %v5085 = vunpack.c.l.b16 %v3678
    %v5086 = vunpack.c.h.b16 %v3678
    %v5087 = vunpack.c.l.b16 %v3679
    %v5088 = vunpack.c.h.b16 %v3679
    %v5089 = vunpack.c.l.b16 %v3680
    %v5090 = vunpack.c.h.b16 %v3680
    %v5091 = vunpack.c.l.b16 %v3681
    %v5092 = vunpack.c.h.b16 %v3681
    %v5093 = vunpack.c.l.b16 %v3682
    %v5094 = vunpack.c.h.b16 %v3682
    %v5095 = vunpack.c.l.b16 %v3683
    %v5096 = vunpack.c.h.b16 %v3683
    %v5097 = vunpack.c.l.b16 %v3684
    %v5098 = vunpack.c.h.b16 %v3684
    %v5099 = vunpack.c.l.b16 %v3685
    %v5100 = vunpack.c.h.b16 %v3685
    %v5101 = vunpack.c.l.b16 %v3686
    %v5102 = vunpack.c.h.b16 %v3686
    %v5103 = vunpack.c.l.b16 %v3687
    %v5104 = vunpack.c.h.b16 %v3687
    %v5105 = vunpack.c.l.b16 %v3688
    %v5106 = vunpack.c.h.b16 %v3688
    %v5107 = vunpack.c.l.b16 %v3689
    %v5108 = vunpack.c.h.b16 %v3689
    %v5109 = vunpack.c.l.b16 %v3690
    %v5110 = vunpack.c.h.b16 %v3690
    %v5111 = vunpack.c.l.b16 %v3691
    %v5112 = vunpack.c.h.b16 %v3691
    %v5113 = vunpack.c.l.b16 %v3692
    %v5114 = vunpack.c.h.b16 %v3692
    %v5115 = vunpack.c.l.b16 %v3693
    %v5116 = vunpack.c.h.b16 %v3693
    %v5117 = vunpack.c.l.b16 %v3694
    %v5118 = vunpack.c.h.b16 %v3694
    %v5119 = vunpack.c.l.b16 %v3695
    %v5120 = vunpack.c.h.b16 %v3695
    %v5121 = vunpack.c.l.b16 %v3696
    %v5122 = vunpack.c.h.b16 %v3696
    %v5123 = vunpack.c.l.b16 %v3697
    %v5124 = vunpack.c.h.b16 %v3697
    %v5125 = vunpack.c.l.b16 %v3698
    %v5126 = vunpack.c.h.b16 %v3698
    %v5127 = vunpack.c.l.b16 %v3699
    %v5128 = vunpack.c.h.b16 %v3699
    %v5129 = vunpack.c.l.b16 %v3700
    %v5130 = vunpack.c.h.b16 %v3700
    %v5131 = vunpack.c.l.b16 %v3701
    %v5132 = vunpack.c.h.b16 %v3701
    %v5133 = vunpack.c.l.b16 %v3702
    %v5134 = vunpack.c.h.b16 %v3702
    %v5135 = vunpack.c.l.b16 %v3703
    %v5136 = vunpack.c.h.b16 %v3703
    %v5137 = vunpack.c.l.b16 %v3704
    %v5138 = vunpack.c.h.b16 %v3704
    %v5139 = vunpack.c.l.b16 %v3705
    %v5140 = vunpack.c.h.b16 %v3705
    %v5141 = vunpack.c.l.b16 %v3706
    %v5142 = vunpack.c.h.b16 %v3706
    %v5143 = vunpack.c.l.b16 %v3707
    %v5144 = vunpack.c.h.b16 %v3707
    %v5145 = vunpack.c.l.b16 %v3708
    %v5146 = vunpack.c.h.b16 %v3708
    %v5147 = vunpack.c.l.b16 %v3709
    %v5148 = vunpack.c.h.b16 %v3709
    %v5149 = vunpack.c.l.b16 %v3710
    %v5150 = vunpack.c.h.b16 %v3710
    %v5151 = vunpack.c.l.b16 %v3711
    %v5152 = vunpack.c.h.b16 %v3711
    %v5153 = vunpack.c.l.b16 %v3712
    %v5154 = vunpack.c.h.b16 %v3712
    %v5155 = vunpack.c.l.b16 %v3713
    %v5156 = vunpack.c.h.b16 %v3713
    %v5157 = vunpack.c.l.b16 %v3714
    %v5158 = vunpack.c.h.b16 %v3714
    %v5159 = vunpack.c.l.b16 %v3715
    %v5160 = vunpack.c.h.b16 %v3715
    %v5161 = vunpack.c.l.b16 %v3716
    %v5162 = vunpack.c.h.b16 %v3716
    %v5163 = vunpack.c.l.b16 %v3717
    %v5164 = vunpack.c.h.b16 %v3717
    %v5165 = vunpack.c.l.b16 %v3718
    %v5166 = vunpack.c.h.b16 %v3718
    %v5167 = vunpack.c.l.b16 %v3719
    %v5168 = vunpack.c.h.b16 %v3719
    %v5169 = vunpack.c.l.b16 %v3720
    %v5170 = vunpack.c.h.b16 %v3720
    %v5171 = vunpack.c.l.b16 %v3721
    %v5172 = vunpack.c.h.b16 %v3721
    %v5173 = vunpack.c.l.b16 %v3722
    %v5174 = vunpack.c.h.b16 %v3722
    %v5175 = vunpack.c.l.b16 %v3723
    %v5176 = vunpack.c.h.b16 %v3723
    %v5177 = vunpack.c.l.b16 %v3724
    %v5178 = vunpack.c.h.b16 %v3724
    %v5179 = vunpack.c.l.b16 %v3725
    %v5180 = vunpack.c.h.b16 %v3725
    %v5181 = vunpack.c.l.b16 %v3726
    %v5182 = vunpack.c.h.b16 %v3726
    %v5183 = vunpack.c.l.b16 %v3727
    %v5184 = vunpack.c.h.b16 %v3727
    %v5185 = vunpack.c.l.b16 %v3728
    %v5186 = vunpack.c.h.b16 %v3728
    %v5187 = vunpack.c.l.b16 %v3729
    %v5188 = vunpack.c.h.b16 %v3729
    %v5189 = vunpack.c.l.b16 %v3730
    %v5190 = vunpack.c.h.b16 %v3730
    %v5191 = vunpack.c.l.b16 %v3731
    %v5192 = vunpack.c.h.b16 %v3731
    %v5193 = vunpack.c.l.b16 %v3732
    %v5194 = vunpack.c.h.b16 %v3732
    %v5195 = vunpack.c.l.b16 %v3733
    %v5196 = vunpack.c.h.b16 %v3733
    %v5197 = vunpack.c.l.b16 %v3734
    %v5198 = vunpack.c.h.b16 %v3734
    %v5199 = vunpack.c.l.b16 %v3735
    %v5200 = vunpack.c.h.b16 %v3735
    %v5201 = vunpack.c.l.b16 %v3736
    %v5202 = vunpack.c.h.b16 %v3736
    %v5203 = vunpack.c.l.b16 %v3737
    %v5204 = vunpack.c.h.b16 %v3737
    %v5205 = vunpack.c.l.b16 %v3738
    %v5206 = vunpack.c.h.b16 %v3738
    %v5207 = vunpack.c.l.b16 %v3739
    %v5208 = vunpack.c.h.b16 %v3739
    %v5209 = vunpack.c.l.b16 %v3740
    %v5210 = vunpack.c.h.b16 %v3740
    %v5211 = vunpack.c.l.b16 %v3741
    %v5212 = vunpack.c.h.b16 %v3741
    %v5213 = vunpack.c.l.b16 %v3742
    %v5214 = vunpack.c.h.b16 %v3742
    %v5215 = vunpack.c.l.b16 %v3743
    %v5216 = vunpack.c.h.b16 %v3743
    %v5217 = vunpack.c.l.b16 %v3744
    %v5218 = vunpack.c.h.b16 %v3744
    %v5219 = vunpack.c.l.b16 %v3745
    %v5220 = vunpack.c.h.b16 %v3745
    %v5221 = vunpack.c.l.b16 %v3746
    %v5222 = vunpack.c.h.b16 %v3746
    %v5223 = vunpack.c.l.b16 %v3747
    %v5224 = vunpack.c.h.b16 %v3747
    %v5225 = vunpack.c.l.b16 %v3748
    %v5226 = vunpack.c.h.b16 %v3748
    %v5227 = vunpack.c.l.b16 %v3749
    %v5228 = vunpack.c.h.b16 %v3749
    %v5229 = vunpack.c.l.b16 %v3750
    %v5230 = vunpack.c.h.b16 %v3750
    %v5231 = vunpack.c.l.b16 %v3751
    %v5232 = vunpack.c.h.b16 %v3751
    %v5233 = vunpack.c.l.b16 %v3752
    %v5234 = vunpack.c.h.b16 %v3752
    %v5235 = vunpack.c.l.b16 %v3753
    %v5236 = vunpack.c.h.b16 %v3753
    %v5237 = vunpack.c.l.b16 %v3754
    %v5238 = vunpack.c.h.b16 %v3754
    %v5239 = vunpack.c.l.b16 %v3755
    %v5240 = vunpack.c.h.b16 %v3755
    %v5241 = vunpack.c.l.b16 %v3756
    %v5242 = vunpack.c.h.b16 %v3756
    %v5243 = vunpack.c.l.b16 %v3757
    %v5244 = vunpack.c.h.b16 %v3757
    %v5245 = vunpack.c.l.b16 %v3758
    %v5246 = vunpack.c.h.b16 %v3758
    %v5247 = vunpack.c.l.b16 %v3759
    %v5248 = vunpack.c.h.b16 %v3759
    %v5249 = vunpack.c.l.b16 %v3760
    %v5250 = vunpack.c.h.b16 %v3760
    %v5251 = vunpack.c.l.b16 %v3761
    %v5252 = vunpack.c.h.b16 %v3761
    %v5253 = vunpack.c.l.b16 %v3762
    %v5254 = vunpack.c.h.b16 %v3762
    %v5255 = vunpack.c.l.b16 %v3763
    %v5256 = vunpack.c.h.b16 %v3763
    %v5257 = vunpack.c.l.b16 %v3764
    %v5258 = vunpack.c.h.b16 %v3764
    %v5259 = vunpack.c.l.b16 %v3765
    %v5260 = vunpack.c.h.b16 %v3765
    %v5261 = vunpack.c.l.b16 %v3766
    %v5262 = vunpack.c.h.b16 %v3766
    %v5263 = vunpack.c.l.b16 %v3767
    %v5264 = vunpack.c.h.b16 %v3767
    %v5265 = vunpack.c.l.b16 %v3768
    %v5266 = vunpack.c.h.b16 %v3768
    %v5267 = vunpack.c.l.b16 %v3769
    %v5268 = vunpack.c.h.b16 %v3769
    %v5269 = vunpack.c.l.b16 %v3770
    %v5270 = vunpack.c.h.b16 %v3770
    %v5271 = vunpack.c.l.b16 %v3771
    %v5272 = vunpack.c.h.b16 %v3771
    %v5273 = vunpack.c.l.b16 %v3772
    %v5274 = vunpack.c.h.b16 %v3772
    %v5275 = vunpack.c.l.b16 %v3773
    %v5276 = vunpack.c.h.b16 %v3773
    %v5277 = vunpack.c.l.b16 %v3774
    %v5278 = vunpack.c.h.b16 %v3774
    %v5279 = vunpack.c.l.b16 %v3775
    %v5280 = vunpack.c.h.b16 %v3775
    %v5281 = vunpack.c.l.b16 %v3776
    %v5282 = vunpack.c.h.b16 %v3776
    %v5283 = vunpack.c.l.b16 %v3777
    %v5284 = vunpack.c.h.b16 %v3777
    %v5285 = vunpack.c.l.b16 %v3778
    %v5286 = vunpack.c.h.b16 %v3778
    %v5287 = vunpack.c.l.b16 %v3779
    %v5288 = vunpack.c.h.b16 %v3779
    %v5289 = vunpack.c.l.b16 %v3780
    %v5290 = vunpack.c.h.b16 %v3780
    %v5291 = vunpack.c.l.b16 %v3781
    %v5292 = vunpack.c.h.b16 %v3781
    %v5293 = vunpack.c.l.b16 %v3782
    %v5294 = vunpack.c.h.b16 %v3782
    %v5295 = vunpack.c.l.b16 %v3783
    %v5296 = vunpack.c.h.b16 %v3783
    %v5297 = vunpack.c.l.b16 %v3784
    %v5298 = vunpack.c.h.b16 %v3784
    %v5299 = vunpack.c.l.b16 %v3785
    %v5300 = vunpack.c.h.b16 %v3785
    %v5301 = vunpack.c.l.b16 %v3786
    %v5302 = vunpack.c.h.b16 %v3786
    %v5303 = vunpack.c.l.b16 %v3787
    %v5304 = vunpack.c.h.b16 %v3787
    %v5305 = vunpack.c.l.b16 %v3788
    %v5306 = vunpack.c.h.b16 %v3788
    %v5307 = vunpack.c.l.b16 %v3789
    %v5308 = vunpack.c.h.b16 %v3789
    %v5309 = vunpack.c.l.b16 %v3790
    %v5310 = vunpack.c.h.b16 %v3790
    %v5311 = vunpack.c.l.b16 %v3791
    %v5312 = vunpack.c.h.b16 %v3791
    %v5313 = vunpack.c.l.b16 %v3792
    %v5314 = vunpack.c.h.b16 %v3792
    %v5315 = vunpack.c.l.b16 %v3793
    %v5316 = vunpack.c.h.b16 %v3793
    %v5317 = vunpack.c.l.b16 %v3794
    %v5318 = vunpack.c.h.b16 %v3794
    %v5319 = vunpack.c.l.b16 %v3795
    %v5320 = vunpack.c.h.b16 %v3795
    %v5321 = vunpack.c.l.b16 %v3796
    %v5322 = vunpack.c.h.b16 %v3796
    %v5323 = vunpack.c.l.b16 %v3797
    %v5324 = vunpack.c.h.b16 %v3797
    %v5325 = vunpack.c.l.b16 %v3798
    %v5326 = vunpack.c.h.b16 %v3798
    %v5327 = vunpack.c.l.b16 %v3799
    %v5328 = vunpack.c.h.b16 %v3799
    %v5329 = vunpack.c.l.b16 %v3800
    %v5330 = vunpack.c.h.b16 %v3800
    %v5331 = vunpack.c.l.b16 %v3801
    %v5332 = vunpack.c.h.b16 %v3801
    %v5333 = vunpack.c.l.b16 %v3802
    %v5334 = vunpack.c.h.b16 %v3802
    %v5335 = vunpack.c.l.b16 %v3803
    %v5336 = vunpack.c.h.b16 %v3803
    %v5337 = vunpack.c.l.b16 %v3804
    %v5338 = vunpack.c.h.b16 %v3804
    %v5339 = vunpack.c.l.b16 %v3805
    %v5340 = vunpack.c.h.b16 %v3805
    %v5341 = vunpack.c.l.b16 %v3806
    %v5342 = vunpack.c.h.b16 %v3806
    %v5343 = vunpack.c.l.b16 %v3807
    %v5344 = vunpack.c.h.b16 %v3807
    %v5345 = vunpack.c.l.b16 %v3808
    %v5346 = vunpack.c.h.b16 %v3808
    %v5347 = vunpack.c.l.b16 %v3809
    %v5348 = vunpack.c.h.b16 %v3809
    %v5349 = vunpack.c.l.b16 %v3810
    %v5350 = vunpack.c.h.b16 %v3810
    %v5351 = vunpack.c.l.b16 %v3811
    %v5352 = vunpack.c.h.b16 %v3811
    %v5353 = vunpack.c.l.b16 %v3812
    %v5354 = vunpack.c.h.b16 %v3812
    %v5355 = vunpack.c.l.b16 %v3813
    %v5356 = vunpack.c.h.b16 %v3813
    %v5357 = vunpack.c.l.b16 %v3814
    %v5358 = vunpack.c.h.b16 %v3814
    %v5359 = vunpack.c.l.b16 %v3815
    %v5360 = vunpack.c.h.b16 %v3815
    %v5361 = vunpack.c.l.b16 %v3816
    %v5362 = vunpack.c.h.b16 %v3816
    %v5363 = vunpack.c.l.b16 %v3817
    %v5364 = vunpack.c.h.b16 %v3817
    %v5365 = vunpack.c.l.b16 %v3818
    %v5366 = vunpack.c.h.b16 %v3818
    %v5367 = vunpack.c.l.b16 %v3819
    %v5368 = vunpack.c.h.b16 %v3819
    %v5369 = vunpack.c.l.b16 %v3820
    %v5370 = vunpack.c.h.b16 %v3820
    %v5371 = vunpack.c.l.b16 %v3821
    %v5372 = vunpack.c.h.b16 %v3821
    %v5373 = vunpack.c.l.b16 %v3822
    %v5374 = vunpack.c.h.b16 %v3822
    %v5375 = vunpack.c.l.b16 %v3823
    %v5376 = vunpack.c.h.b16 %v3823
    %v5377 = vunpack.c.l.b16 %v3824
    %v5378 = vunpack.c.h.b16 %v3824
    %v5379 = vpack.c.b16 %v4363, %v4355
    %v5380 = vpack.c.b16 %v4364, %v4356
    %v5381 = vpack.c.b16 %v4365, %v4357
    %v5382 = vpack.c.b16 %v4366, %v4358
    %v5383 = vpack.c.b16 %v4367, %v4359
    %v5384 = vpack.c.b16 %v4368, %v4360
    %v5385 = vpack.c.b16 %v4369, %v4361
    %v5386 = vpack.c.b16 %v4370, %v4362
    %v5387 = vpack.c.b16 %v4379, %v4371
    %v5388 = vpack.c.b16 %v4380, %v4372
    %v5389 = vpack.c.b16 %v4381, %v4373
    %v5390 = vpack.c.b16 %v4382, %v4374
    %v5391 = vpack.c.b16 %v4383, %v4375
    %v5392 = vpack.c.b16 %v4384, %v4376
    %v5393 = vpack.c.b16 %v4385, %v4377
    %v5394 = vpack.c.b16 %v4386, %v4378
    %v5395 = vpack.c.b16 %v4395, %v4387
    %v5396 = vpack.c.b16 %v4396, %v4388
    %v5397 = vpack.c.b16 %v4397, %v4389
    %v5398 = vpack.c.b16 %v4398, %v4390
    %v5399 = vpack.c.b16 %v4399, %v4391
    %v5400 = vpack.c.b16 %v4400, %v4392
    %v5401 = vpack.c.b16 %v4401, %v4393
    %v5402 = vpack.c.b16 %v4402, %v4394
    %v5403 = vpack.c.b16 %v4411, %v4403
    %v5404 = vpack.c.b16 %v4412, %v4404
    %v5405 = vpack.c.b16 %v4413, %v4405
    %v5406 = vpack.c.b16 %v4414, %v4406
    %v5407 = vpack.c.b16 %v4415, %v4407
    %v5408 = vpack.c.b16 %v4416, %v4408
    %v5409 = vpack.c.b16 %v4417, %v4409
    %v5410 = vpack.c.b16 %v4418, %v4410
    %v5411 = vpack.c.b16 %v4427, %v4419
    %v5412 = vpack.c.b16 %v4428, %v4420
    %v5413 = vpack.c.b16 %v4429, %v4421
    %v5414 = vpack.c.b16 %v4430, %v4422
    %v5415 = vpack.c.b16 %v4431, %v4423
    %v5416 = vpack.c.b16 %v4432, %v4424
    %v5417 = vpack.c.b16 %v4433, %v4425
    %v5418 = vpack.c.b16 %v4434, %v4426
    %v5419 = vpack.c.b16 %v4443, %v4435
    %v5420 = vpack.c.b16 %v4444, %v4436
    %v5421 = vpack.c.b16 %v4445, %v4437
    %v5422 = vpack.c.b16 %v4446, %v4438
    %v5423 = vpack.c.b16 %v4447, %v4439
    %v5424 = vpack.c.b16 %v4448, %v4440
    %v5425 = vpack.c.b16 %v4449, %v4441
    %v5426 = vpack.c.b16 %v4450, %v4442
    %v5427 = vpack.c.b16 %v4459, %v4451
    %v5428 = vpack.c.b16 %v4460, %v4452
    %v5429 = vpack.c.b16 %v4461, %v4453
    %v5430 = vpack.c.b16 %v4462, %v4454
    %v5431 = vpack.c.b16 %v4463, %v4455
    %v5432 = vpack.c.b16 %v4464, %v4456
    %v5433 = vpack.c.b16 %v4465, %v4457
    %v5434 = vpack.c.b16 %v4466, %v4458
    %v5435 = vpack.c.b16 %v4475, %v4467
    %v5436 = vpack.c.b16 %v4476, %v4468
    %v5437 = vpack.c.b16 %v4477, %v4469
    %v5438 = vpack.c.b16 %v4478, %v4470
    %v5439 = vpack.c.b16 %v4479, %v4471
    %v5440 = vpack.c.b16 %v4480, %v4472
    %v5441 = vpack.c.b16 %v4481, %v4473
    %v5442 = vpack.c.b16 %v4482, %v4474
    %v5443 = vpack.c.b16 %v4491, %v4483
    %v5444 = vpack.c.b16 %v4492, %v4484
    %v5445 = vpack.c.b16 %v4493, %v4485
    %v5446 = vpack.c.b16 %v4494, %v4486
    %v5447 = vpack.c.b16 %v4495, %v4487
    %v5448 = vpack.c.b16 %v4496, %v4488
    %v5449 = vpack.c.b16 %v4497, %v4489
    %v5450 = vpack.c.b16 %v4498, %v4490
    %v5451 = vpack.c.b16 %v4507, %v4499
    %v5452 = vpack.c.b16 %v4508, %v4500
    %v5453 = vpack.c.b16 %v4509, %v4501
    %v5454 = vpack.c.b16 %v4510, %v4502
    %v5455 = vpack.c.b16 %v4511, %v4503
    %v5456 = vpack.c.b16 %v4512, %v4504
    %v5457 = vpack.c.b16 %v4513, %v4505
    %v5458 = vpack.c.b16 %v4514, %v4506
    %v5459 = vpack.c.b16 %v4523, %v4515
    %v5460 = vpack.c.b16 %v4524, %v4516
    %v5461 = vpack.c.b16 %v4525, %v4517
    %v5462 = vpack.c.b16 %v4526, %v4518
    %v5463 = vpack.c.b16 %v4527, %v4519
    %v5464 = vpack.c.b16 %v4528, %v4520
    %v5465 = vpack.c.b16 %v4529, %v4521
    %v5466 = vpack.c.b16 %v4530, %v4522
    %v5467 = vpack.c.b16 %v4539, %v4531
    %v5468 = vpack.c.b16 %v4540, %v4532
    %v5469 = vpack.c.b16 %v4541, %v4533
    %v5470 = vpack.c.b16 %v4542, %v4534
    %v5471 = vpack.c.b16 %v4543, %v4535
    %v5472 = vpack.c.b16 %v4544, %v4536
    %v5473 = vpack.c.b16 %v4545, %v4537
    %v5474 = vpack.c.b16 %v4546, %v4538
    %v5475 = vpack.c.b16 %v4555, %v4547
    %v5476 = vpack.c.b16 %v4556, %v4548
    %v5477 = vpack.c.b16 %v4557, %v4549
    %v5478 = vpack.c.b16 %v4558, %v4550
    %v5479 = vpack.c.b16 %v4559, %v4551
    %v5480 = vpack.c.b16 %v4560, %v4552
    %v5481 = vpack.c.b16 %v4561, %v4553
    %v5482 = vpack.c.b16 %v4562, %v4554
    %v5483 = vpack.c.b16 %v4571, %v4563
    %v5484 = vpack.c.b16 %v4572, %v4564
    %v5485 = vpack.c.b16 %v4573, %v4565
    %v5486 = vpack.c.b16 %v4574, %v4566
    %v5487 = vpack.c.b16 %v4575, %v4567
    %v5488 = vpack.c.b16 %v4576, %v4568
    %v5489 = vpack.c.b16 %v4577, %v4569
    %v5490 = vpack.c.b16 %v4578, %v4570
    %v5491 = vpack.c.b16 %v4587, %v4579
    %v5492 = vpack.c.b16 %v4588, %v4580
    %v5493 = vpack.c.b16 %v4589, %v4581
    %v5494 = vpack.c.b16 %v4590, %v4582
    %v5495 = vpack.c.b16 %v4591, %v4583
    %v5496 = vpack.c.b16 %v4592, %v4584
    %v5497 = vpack.c.b16 %v4593, %v4585
    %v5498 = vpack.c.b16 %v4594, %v4586
    %v5499 = vpack.c.b16 %v4603, %v4595
    %v5500 = vpack.c.b16 %v4604, %v4596
    %v5501 = vpack.c.b16 %v4605, %v4597
    %v5502 = vpack.c.b16 %v4606, %v4598
    %v5503 = vpack.c.b16 %v4607, %v4599
    %v5504 = vpack.c.b16 %v4608, %v4600
    %v5505 = vpack.c.b16 %v4609, %v4601
    %v5506 = vpack.c.b16 %v4610, %v4602
    %v5507 = vpack.c.b16 %v4619, %v4611
    %v5508 = vpack.c.b16 %v4620, %v4612
    %v5509 = vpack.c.b16 %v4621, %v4613
    %v5510 = vpack.c.b16 %v4622, %v4614
    %v5511 = vpack.c.b16 %v4623, %v4615
    %v5512 = vpack.c.b16 %v4624, %v4616
    %v5513 = vpack.c.b16 %v4625, %v4617
    %v5514 = vpack.c.b16 %v4626, %v4618
    %v5515 = vpack.c.b16 %v4635, %v4627
    %v5516 = vpack.c.b16 %v4636, %v4628
    %v5517 = vpack.c.b16 %v4637, %v4629
    %v5518 = vpack.c.b16 %v4638, %v4630
    %v5519 = vpack.c.b16 %v4639, %v4631
    %v5520 = vpack.c.b16 %v4640, %v4632
    %v5521 = vpack.c.b16 %v4641, %v4633
    %v5522 = vpack.c.b16 %v4642, %v4634
    %v5523 = vpack.c.b16 %v4651, %v4643
    %v5524 = vpack.c.b16 %v4652, %v4644
    %v5525 = vpack.c.b16 %v4653, %v4645
    %v5526 = vpack.c.b16 %v4654, %v4646
    %v5527 = vpack.c.b16 %v4655, %v4647
    %v5528 = vpack.c.b16 %v4656, %v4648
    %v5529 = vpack.c.b16 %v4657, %v4649
    %v5530 = vpack.c.b16 %v4658, %v4650
    %v5531 = vpack.c.b16 %v4667, %v4659
    %v5532 = vpack.c.b16 %v4668, %v4660
    %v5533 = vpack.c.b16 %v4669, %v4661
    %v5534 = vpack.c.b16 %v4670, %v4662
    %v5535 = vpack.c.b16 %v4671, %v4663
    %v5536 = vpack.c.b16 %v4672, %v4664
    %v5537 = vpack.c.b16 %v4673, %v4665
    %v5538 = vpack.c.b16 %v4674, %v4666
    %v5539 = vpack.c.b16 %v4683, %v4675
    %v5540 = vpack.c.b16 %v4684, %v4676
    %v5541 = vpack.c.b16 %v4685, %v4677
    %v5542 = vpack.c.b16 %v4686, %v4678
    %v5543 = vpack.c.b16 %v4687, %v4679
    %v5544 = vpack.c.b16 %v4688, %v4680
    %v5545 = vpack.c.b16 %v4689, %v4681
    %v5546 = vpack.c.b16 %v4690, %v4682
    %v5547 = vpack.c.b16 %v4699, %v4691
    %v5548 = vpack.c.b16 %v4700, %v4692
    %v5549 = vpack.c.b16 %v4701, %v4693
    %v5550 = vpack.c.b16 %v4702, %v4694
    %v5551 = vpack.c.b16 %v4703, %v4695
    %v5552 = vpack.c.b16 %v4704, %v4696
    %v5553 = vpack.c.b16 %v4705, %v4697
    %v5554 = vpack.c.b16 %v4706, %v4698
    %v5555 = vpack.c.b16 %v4715, %v4707
    %v5556 = vpack.c.b16 %v4716, %v4708
    %v5557 = vpack.c.b16 %v4717, %v4709
    %v5558 = vpack.c.b16 %v4718, %v4710
    %v5559 = vpack.c.b16 %v4719, %v4711
    %v5560 = vpack.c.b16 %v4720, %v4712
    %v5561 = vpack.c.b16 %v4721, %v4713
    %v5562 = vpack.c.b16 %v4722, %v4714
    %v5563 = vpack.c.b16 %v4731, %v4723
    %v5564 = vpack.c.b16 %v4732, %v4724
    %v5565 = vpack.c.b16 %v4733, %v4725
    %v5566 = vpack.c.b16 %v4734, %v4726
    %v5567 = vpack.c.b16 %v4735, %v4727
    %v5568 = vpack.c.b16 %v4736, %v4728
    %v5569 = vpack.c.b16 %v4737, %v4729
    %v5570 = vpack.c.b16 %v4738, %v4730
    %v5571 = vpack.c.b16 %v4747, %v4739
    %v5572 = vpack.c.b16 %v4748, %v4740
    %v5573 = vpack.c.b16 %v4749, %v4741
    %v5574 = vpack.c.b16 %v4750, %v4742
    %v5575 = vpack.c.b16 %v4751, %v4743
    %v5576 = vpack.c.b16 %v4752, %v4744
    %v5577 = vpack.c.b16 %v4753, %v4745
    %v5578 = vpack.c.b16 %v4754, %v4746
    %v5579 = vpack.c.b16 %v4763, %v4755
    %v5580 = vpack.c.b16 %v4764, %v4756
    %v5581 = vpack.c.b16 %v4765, %v4757
    %v5582 = vpack.c.b16 %v4766, %v4758
    %v5583 = vpack.c.b16 %v4767, %v4759
    %v5584 = vpack.c.b16 %v4768, %v4760
    %v5585 = vpack.c.b16 %v4769, %v4761
    %v5586 = vpack.c.b16 %v4770, %v4762
    %v5587 = vpack.c.b16 %v4779, %v4771
    %v5588 = vpack.c.b16 %v4780, %v4772
    %v5589 = vpack.c.b16 %v4781, %v4773
    %v5590 = vpack.c.b16 %v4782, %v4774
    %v5591 = vpack.c.b16 %v4783, %v4775
    %v5592 = vpack.c.b16 %v4784, %v4776
    %v5593 = vpack.c.b16 %v4785, %v4777
    %v5594 = vpack.c.b16 %v4786, %v4778
    %v5595 = vpack.c.b16 %v4795, %v4787
    %v5596 = vpack.c.b16 %v4796, %v4788
    %v5597 = vpack.c.b16 %v4797, %v4789
    %v5598 = vpack.c.b16 %v4798, %v4790
    %v5599 = vpack.c.b16 %v4799, %v4791
    %v5600 = vpack.c.b16 %v4800, %v4792
    %v5601 = vpack.c.b16 %v4801, %v4793
    %v5602 = vpack.c.b16 %v4802, %v4794
    %v5603 = vpack.c.b16 %v4811, %v4803
    %v5604 = vpack.c.b16 %v4812, %v4804
    %v5605 = vpack.c.b16 %v4813, %v4805
    %v5606 = vpack.c.b16 %v4814, %v4806
    %v5607 = vpack.c.b16 %v4815, %v4807
    %v5608 = vpack.c.b16 %v4816, %v4808
    %v5609 = vpack.c.b16 %v4817, %v4809
    %v5610 = vpack.c.b16 %v4818, %v4810
    %v5611 = vpack.c.b16 %v4827, %v4819
    %v5612 = vpack.c.b16 %v4828, %v4820
    %v5613 = vpack.c.b16 %v4829, %v4821
    %v5614 = vpack.c.b16 %v4830, %v4822
    %v5615 = vpack.c.b16 %v4831, %v4823
    %v5616 = vpack.c.b16 %v4832, %v4824
    %v5617 = vpack.c.b16 %v4833, %v4825
    %v5618 = vpack.c.b16 %v4834, %v4826
    %v5619 = vpack.c.b16 %v4843, %v4835
    %v5620 = vpack.c.b16 %v4844, %v4836
    %v5621 = vpack.c.b16 %v4845, %v4837
    %v5622 = vpack.c.b16 %v4846, %v4838
    %v5623 = vpack.c.b16 %v4847, %v4839
    %v5624 = vpack.c.b16 %v4848, %v4840
    %v5625 = vpack.c.b16 %v4849, %v4841
    %v5626 = vpack.c.b16 %v4850, %v4842
    %v5627 = vpack.c.b16 %v4859, %v4851
    %v5628 = vpack.c.b16 %v4860, %v4852
    %v5629 = vpack.c.b16 %v4861, %v4853
    %v5630 = vpack.c.b16 %v4862, %v4854
    %v5631 = vpack.c.b16 %v4863, %v4855
    %v5632 = vpack.c.b16 %v4864, %v4856
    %v5633 = vpack.c.b16 %v4865, %v4857
    %v5634 = vpack.c.b16 %v4866, %v4858
    %v5635 = vpack.c.b16 %v4875, %v4867
    %v5636 = vpack.c.b16 %v4876, %v4868
    %v5637 = vpack.c.b16 %v4877, %v4869
    %v5638 = vpack.c.b16 %v4878, %v4870
    %v5639 = vpack.c.b16 %v4879, %v4871
    %v5640 = vpack.c.b16 %v4880, %v4872
    %v5641 = vpack.c.b16 %v4881, %v4873
    %v5642 = vpack.c.b16 %v4882, %v4874
    %v5643 = vpack.c.b16 %v4891, %v4883
    %v5644 = vpack.c.b16 %v4892, %v4884
    %v5645 = vpack.c.b16 %v4893, %v4885
    %v5646 = vpack.c.b16 %v4894, %v4886
    %v5647 = vpack.c.b16 %v4895, %v4887
    %v5648 = vpack.c.b16 %v4896, %v4888
    %v5649 = vpack.c.b16 %v4897, %v4889
    %v5650 = vpack.c.b16 %v4898, %v4890
    %v5651 = vpack.c.b16 %v4907, %v4899
    %v5652 = vpack.c.b16 %v4908, %v4900
    %v5653 = vpack.c.b16 %v4909, %v4901
    %v5654 = vpack.c.b16 %v4910, %v4902
    %v5655 = vpack.c.b16 %v4911, %v4903
    %v5656 = vpack.c.b16 %v4912, %v4904
    %v5657 = vpack.c.b16 %v4913, %v4905
    %v5658 = vpack.c.b16 %v4914, %v4906
    %v5659 = vpack.c.b16 %v4923, %v4915
    %v5660 = vpack.c.b16 %v4924, %v4916
    %v5661 = vpack.c.b16 %v4925, %v4917
    %v5662 = vpack.c.b16 %v4926, %v4918
    %v5663 = vpack.c.b16 %v4927, %v4919
    %v5664 = vpack.c.b16 %v4928, %v4920
    %v5665 = vpack.c.b16 %v4929, %v4921
    %v5666 = vpack.c.b16 %v4930, %v4922
    %v5667 = vpack.c.b16 %v4939, %v4931
    %v5668 = vpack.c.b16 %v4940, %v4932
    %v5669 = vpack.c.b16 %v4941, %v4933
    %v5670 = vpack.c.b16 %v4942, %v4934
    %v5671 = vpack.c.b16 %v4943, %v4935
    %v5672 = vpack.c.b16 %v4944, %v4936
    %v5673 = vpack.c.b16 %v4945, %v4937
    %v5674 = vpack.c.b16 %v4946, %v4938
    %v5675 = vpack.c.b16 %v4955, %v4947
    %v5676 = vpack.c.b16 %v4956, %v4948
    %v5677 = vpack.c.b16 %v4957, %v4949
    %v5678 = vpack.c.b16 %v4958, %v4950
    %v5679 = vpack.c.b16 %v4959, %v4951
    %v5680 = vpack.c.b16 %v4960, %v4952
    %v5681 = vpack.c.b16 %v4961, %v4953
    %v5682 = vpack.c.b16 %v4962, %v4954
    %v5683 = vpack.c.b16 %v4971, %v4963
    %v5684 = vpack.c.b16 %v4972, %v4964
    %v5685 = vpack.c.b16 %v4973, %v4965
    %v5686 = vpack.c.b16 %v4974, %v4966
    %v5687 = vpack.c.b16 %v4975, %v4967
    %v5688 = vpack.c.b16 %v4976, %v4968
    %v5689 = vpack.c.b16 %v4977, %v4969
    %v5690 = vpack.c.b16 %v4978, %v4970
    %v5691 = vpack.c.b16 %v4987, %v4979
    %v5692 = vpack.c.b16 %v4988, %v4980
    %v5693 = vpack.c.b16 %v4989, %v4981
    %v5694 = vpack.c.b16 %v4990, %v4982
    %v5695 = vpack.c.b16 %v4991, %v4983
    %v5696 = vpack.c.b16 %v4992, %v4984
    %v5697 = vpack.c.b16 %v4993, %v4985
    %v5698 = vpack.c.b16 %v4994, %v4986
    %v5699 = vpack.c.b16 %v5003, %v4995
    %v5700 = vpack.c.b16 %v5004, %v4996
    %v5701 = vpack.c.b16 %v5005, %v4997
    %v5702 = vpack.c.b16 %v5006, %v4998
    %v5703 = vpack.c.b16 %v5007, %v4999
    %v5704 = vpack.c.b16 %v5008, %v5000
    %v5705 = vpack.c.b16 %v5009, %v5001
    %v5706 = vpack.c.b16 %v5010, %v5002
    %v5707 = vpack.c.b16 %v5019, %v5011
    %v5708 = vpack.c.b16 %v5020, %v5012
    %v5709 = vpack.c.b16 %v5021, %v5013
    %v5710 = vpack.c.b16 %v5022, %v5014
    %v5711 = vpack.c.b16 %v5023, %v5015
    %v5712 = vpack.c.b16 %v5024, %v5016
    %v5713 = vpack.c.b16 %v5025, %v5017
    %v5714 = vpack.c.b16 %v5026, %v5018
    %v5715 = vpack.c.b16 %v5035, %v5027
    %v5716 = vpack.c.b16 %v5036, %v5028
    %v5717 = vpack.c.b16 %v5037, %v5029
    %v5718 = vpack.c.b16 %v5038, %v5030
    %v5719 = vpack.c.b16 %v5039, %v5031
    %v5720 = vpack.c.b16 %v5040, %v5032
    %v5721 = vpack.c.b16 %v5041, %v5033
    %v5722 = vpack.c.b16 %v5042, %v5034
    %v5723 = vpack.c.b16 %v5051, %v5043
    %v5724 = vpack.c.b16 %v5052, %v5044
    %v5725 = vpack.c.b16 %v5053, %v5045
    %v5726 = vpack.c.b16 %v5054, %v5046
    %v5727 = vpack.c.b16 %v5055, %v5047
    %v5728 = vpack.c.b16 %v5056, %v5048
    %v5729 = vpack.c.b16 %v5057, %v5049
    %v5730 = vpack.c.b16 %v5058, %v5050
    %v5731 = vpack.c.b16 %v5067, %v5059
    %v5732 = vpack.c.b16 %v5068, %v5060
    %v5733 = vpack.c.b16 %v5069, %v5061
    %v5734 = vpack.c.b16 %v5070, %v5062
    %v5735 = vpack.c.b16 %v5071, %v5063
    %v5736 = vpack.c.b16 %v5072, %v5064
    %v5737 = vpack.c.b16 %v5073, %v5065
    %v5738 = vpack.c.b16 %v5074, %v5066
    %v5739 = vpack.c.b16 %v5083, %v5075
    %v5740 = vpack.c.b16 %v5084, %v5076
    %v5741 = vpack.c.b16 %v5085, %v5077
    %v5742 = vpack.c.b16 %v5086, %v5078
    %v5743 = vpack.c.b16 %v5087, %v5079
    %v5744 = vpack.c.b16 %v5088, %v5080
    %v5745 = vpack.c.b16 %v5089, %v5081
    %v5746 = vpack.c.b16 %v5090, %v5082
    %v5747 = vpack.c.b16 %v5099, %v5091
    %v5748 = vpack.c.b16 %v5100, %v5092
    %v5749 = vpack.c.b16 %v5101, %v5093
    %v5750 = vpack.c.b16 %v5102, %v5094
    %v5751 = vpack.c.b16 %v5103, %v5095
    %v5752 = vpack.c.b16 %v5104, %v5096
    %v5753 = vpack.c.b16 %v5105, %v5097
    %v5754 = vpack.c.b16 %v5106, %v5098
    %v5755 = vpack.c.b16 %v5115, %v5107
    %v5756 = vpack.c.b16 %v5116, %v5108
    %v5757 = vpack.c.b16 %v5117, %v5109
    %v5758 = vpack.c.b16 %v5118, %v5110
    %v5759 = vpack.c.b16 %v5119, %v5111
    %v5760 = vpack.c.b16 %v5120, %v5112
    %v5761 = vpack.c.b16 %v5121, %v5113
    %v5762 = vpack.c.b16 %v5122, %v5114
    %v5763 = vpack.c.b16 %v5131, %v5123
    %v5764 = vpack.c.b16 %v5132, %v5124
    %v5765 = vpack.c.b16 %v5133, %v5125
    %v5766 = vpack.c.b16 %v5134, %v5126
    %v5767 = vpack.c.b16 %v5135, %v5127
    %v5768 = vpack.c.b16 %v5136, %v5128
    %v5769 = vpack.c.b16 %v5137, %v5129
    %v5770 = vpack.c.b16 %v5138, %v5130
    %v5771 = vpack.c.b16 %v5147, %v5139
    %v5772 = vpack.c.b16 %v5148, %v5140
    %v5773 = vpack.c.b16 %v5149, %v5141
    %v5774 = vpack.c.b16 %v5150, %v5142
    %v5775 = vpack.c.b16 %v5151, %v5143
    %v5776 = vpack.c.b16 %v5152, %v5144
    %v5777 = vpack.c.b16 %v5153, %v5145
    %v5778 = vpack.c.b16 %v5154, %v5146
    %v5779 = vpack.c.b16 %v5163, %v5155
    %v5780 = vpack.c.b16 %v5164, %v5156
    %v5781 = vpack.c.b16 %v5165, %v5157
    %v5782 = vpack.c.b16 %v5166, %v5158
    %v5783 = vpack.c.b16 %v5167, %v5159
    %v5784 = vpack.c.b16 %v5168, %v5160
    %v5785 = vpack.c.b16 %v5169, %v5161
    %v5786 = vpack.c.b16 %v5170, %v5162
    %v5787 = vpack.c.b16 %v5179, %v5171
    %v5788 = vpack.c.b16 %v5180, %v5172
    %v5789 = vpack.c.b16 %v5181, %v5173
    %v5790 = vpack.c.b16 %v5182, %v5174
    %v5791 = vpack.c.b16 %v5183, %v5175
    %v5792 = vpack.c.b16 %v5184, %v5176
    %v5793 = vpack.c.b16 %v5185, %v5177
    %v5794 = vpack.c.b16 %v5186, %v5178
    %v5795 = vpack.c.b16 %v5195, %v5187
    %v5796 = vpack.c.b16 %v5196, %v5188
    %v5797 = vpack.c.b16 %v5197, %v5189
    %v5798 = vpack.c.b16 %v5198, %v5190
    %v5799 = vpack.c.b16 %v5199, %v5191
    %v5800 = vpack.c.b16 %v5200, %v5192
    %v5801 = vpack.c.b16 %v5201, %v5193
    %v5802 = vpack.c.b16 %v5202, %v5194
    %v5803 = vpack.c.b16 %v5211, %v5203
    %v5804 = vpack.c.b16 %v5212, %v5204
    %v5805 = vpack.c.b16 %v5213, %v5205
    %v5806 = vpack.c.b16 %v5214, %v5206
    %v5807 = vpack.c.b16 %v5215, %v5207
    %v5808 = vpack.c.b16 %v5216, %v5208
    %v5809 = vpack.c.b16 %v5217, %v5209
    %v5810 = vpack.c.b16 %v5218, %v5210
    %v5811 = vpack.c.b16 %v5227, %v5219
    %v5812 = vpack.c.b16 %v5228, %v5220
    %v5813 = vpack.c.b16 %v5229, %v5221
    %v5814 = vpack.c.b16 %v5230, %v5222
    %v5815 = vpack.c.b16 %v5231, %v5223
    %v5816 = vpack.c.b16 %v5232, %v5224
    %v5817 = vpack.c.b16 %v5233, %v5225
    %v5818 = vpack.c.b16 %v5234, %v5226
    %v5819 = vpack.c.b16 %v5243, %v5235
    %v5820 = vpack.c.b16 %v5244, %v5236
    %v5821 = vpack.c.b16 %v5245, %v5237
    %v5822 = vpack.c.b16 %v5246, %v5238
    %v5823 = vpack.c.b16 %v5247, %v5239
    %v5824 = vpack.c.b16 %v5248, %v5240
    %v5825 = vpack.c.b16 %v5249, %v5241
    %v5826 = vpack.c.b16 %v5250, %v5242
    %v5827 = vpack.c.b16 %v5259, %v5251
    %v5828 = vpack.c.b16 %v5260, %v5252
    %v5829 = vpack.c.b16 %v5261, %v5253
    %v5830 = vpack.c.b16 %v5262, %v5254
    %v5831 = vpack.c.b16 %v5263, %v5255
    %v5832 = vpack.c.b16 %v5264, %v5256
    %v5833 = vpack.c.b16 %v5265, %v5257
    %v5834 = vpack.c.b16 %v5266, %v5258
    %v5835 = vpack.c.b16 %v5275, %v5267
    %v5836 = vpack.c.b16 %v5276, %v5268
    %v5837 = vpack.c.b16 %v5277, %v5269
    %v5838 = vpack.c.b16 %v5278, %v5270
    %v5839 = vpack.c.b16 %v5279, %v5271
    %v5840 = vpack.c.b16 %v5280, %v5272
    %v5841 = vpack.c.b16 %v5281, %v5273
    %v5842 = vpack.c.b16 %v5282, %v5274
    %v5843 = vpack.c.b16 %v5291, %v5283
    %v5844 = vpack.c.b16 %v5292, %v5284
    %v5845 = vpack.c.b16 %v5293, %v5285
    %v5846 = vpack.c.b16 %v5294, %v5286
    %v5847 = vpack.c.b16 %v5295, %v5287
    %v5848 = vpack.c.b16 %v5296, %v5288
    %v5849 = vpack.c.b16 %v5297, %v5289
    %v5850 = vpack.c.b16 %v5298, %v5290
    %v5851 = vpack.c.b16 %v5307, %v5299
    %v5852 = vpack.c.b16 %v5308, %v5300
    %v5853 = vpack.c.b16 %v5309, %v5301
    %v5854 = vpack.c.b16 %v5310, %v5302
    %v5855 = vpack.c.b16 %v5311, %v5303
    %v5856 = vpack.c.b16 %v5312, %v5304
    %v5857 = vpack.c.b16 %v5313, %v5305
    %v5858 = vpack.c.b16 %v5314, %v5306
    %v5859 = vpack.c.b16 %v5323, %v5315
    %v5860 = vpack.c.b16 %v5324, %v5316
    %v5861 = vpack.c.b16 %v5325, %v5317
    %v5862 = vpack.c.b16 %v5326, %v5318
    %v5863 = vpack.c.b16 %v5327, %v5319
    %v5864 = vpack.c.b16 %v5328, %v5320
    %v5865 = vpack.c.b16 %v5329, %v5321
    %v5866 = vpack.c.b16 %v5330, %v5322
    %v5867 = vpack.c.b16 %v5339, %v5331
    %v5868 = vpack.c.b16 %v5340, %v5332
    %v5869 = vpack.c.b16 %v5341, %v5333
    %v5870 = vpack.c.b16 %v5342, %v5334
    %v5871 = vpack.c.b16 %v5343, %v5335
    %v5872 = vpack.c.b16 %v5344, %v5336
    %v5873 = vpack.c.b16 %v5345, %v5337
    %v5874 = vpack.c.b16 %v5346, %v5338
    %v5875 = vpack.c.b16 %v5355, %v5347
    %v5876 = vpack.c.b16 %v5356, %v5348
    %v5877 = vpack.c.b16 %v5357, %v5349
    %v5878 = vpack.c.b16 %v5358, %v5350
    %v5879 = vpack.c.b16 %v5359, %v5351
    %v5880 = vpack.c.b16 %v5360, %v5352
    %v5881 = vpack.c.b16 %v5361, %v5353
    %v5882 = vpack.c.b16 %v5362, %v5354
    %v5883 = vpack.c.b16 %v5371, %v5363
    %v5884 = vpack.c.b16 %v5372, %v5364
    %v5885 = vpack.c.b16 %v5373, %v5365
    %v5886 = vpack.c.b16 %v5374, %v5366
    %v5887 = vpack.c.b16 %v5375, %v5367
    %v5888 = vpack.c.b16 %v5376, %v5368
    %v5889 = vpack.c.b16 %v5377, %v5369
    %v5890 = vpack.c.b16 %v5378, %v5370
    %6403 = vmatpush.bf16.msra.mxu0 %v5435
    %6404 = vmatpush.bf16.msra.mxu0 %v5427
    %6405 = vmatpush.bf16.msra.mxu0 %v5419
    %6406 = vmatpush.bf16.msra.mxu0 %v5411
    %6407 = vmatpush.bf16.msra.mxu0 %v5403
    %6408 = vmatpush.bf16.msra.mxu0 %v5395
    %6409 = vmatpush.bf16.msra.mxu0 %v5387
    %6410 = vmatpush.bf16.msra.mxu0 %v5379
    %6411 = vmatmul.bf16.gmra.mxu0 %v3305
    %v6412 = vpop.f32.mrf.mxu0
    %v6413 = vadd.f32 %v3827, %v6412
    %v6414 = vpop.f32.mrf.mxu0
    %6415 = vdwg.mxu0
    %6416 = vmatpush.bf16.msra.mxu0 %v5499
    %6417 = vmatpush.bf16.msra.mxu0 %v5491
    %6418 = vmatpush.bf16.msra.mxu0 %v5483
    %6419 = vmatpush.bf16.msra.mxu0 %v5475
    %6420 = vmatpush.bf16.msra.mxu0 %v5467
    %6421 = vmatpush.bf16.msra.mxu0 %v5459
    %6422 = vmatpush.bf16.msra.mxu0 %v5451
    %6423 = vmatpush.bf16.msra.mxu0 %v5443
    %6424 = vmatmul.bf16.gmra.mxu0 %v3306
    %v6425 = vpop.f32.mrf.mxu0
    %v6426 = vadd.f32 %v6413, %v6425
    %v6427 = vpop.f32.mrf.mxu0
    %6428 = vdwg.mxu0
    %6429 = vmatpush.bf16.msra.mxu0 %v5563
    %6430 = vmatpush.bf16.msra.mxu0 %v5555
    %6431 = vmatpush.bf16.msra.mxu0 %v5547
    %6432 = vmatpush.bf16.msra.mxu0 %v5539
    %6433 = vmatpush.bf16.msra.mxu0 %v5531
    %6434 = vmatpush.bf16.msra.mxu0 %v5523
    %6435 = vmatpush.bf16.msra.mxu0 %v5515
    %6436 = vmatpush.bf16.msra.mxu0 %v5507
    %6437 = vmatmul.bf16.gmra.mxu0 %v3307
    %v6438 = vpop.f32.mrf.mxu0
    %v6439 = vadd.f32 %v6426, %v6438
    %v6440 = vpop.f32.mrf.mxu0
    %6441 = vdwg.mxu0
    %6442 = vmatpush.bf16.msra.mxu0 %v5627
    %6443 = vmatpush.bf16.msra.mxu0 %v5619
    %6444 = vmatpush.bf16.msra.mxu0 %v5611
    %6445 = vmatpush.bf16.msra.mxu0 %v5603
    %6446 = vmatpush.bf16.msra.mxu0 %v5595
    %6447 = vmatpush.bf16.msra.mxu0 %v5587
    %6448 = vmatpush.bf16.msra.mxu0 %v5579
    %6449 = vmatpush.bf16.msra.mxu0 %v5571
    %6450 = vmatmul.bf16.gmra.mxu0 %v3308
    %v6451 = vpop.f32.mrf.mxu0
    %v6452 = vadd.f32 %v6439, %v6451
    %v6453 = vpop.f32.mrf.mxu0
    %6454 = vdwg.mxu0
    %6455 = vmatpush.bf16.msra.mxu0 %v5691
    %6456 = vmatpush.bf16.msra.mxu0 %v5683
    %6457 = vmatpush.bf16.msra.mxu0 %v5675
    %6458 = vmatpush.bf16.msra.mxu0 %v5667
    %6459 = vmatpush.bf16.msra.mxu0 %v5659
    %6460 = vmatpush.bf16.msra.mxu0 %v5651
    %6461 = vmatpush.bf16.msra.mxu0 %v5643
    %6462 = vmatpush.bf16.msra.mxu0 %v5635
    %6463 = vmatmul.bf16.gmra.mxu0 %v3309
    %v6464 = vpop.f32.mrf.mxu0
    %v6465 = vadd.f32 %v6452, %v6464
    %v6466 = vpop.f32.mrf.mxu0
    %6467 = vdwg.mxu0
    %6468 = vmatpush.bf16.msra.mxu0 %v5755
    %6469 = vmatpush.bf16.msra.mxu0 %v5747
    %6470 = vmatpush.bf16.msra.mxu0 %v5739
    %6471 = vmatpush.bf16.msra.mxu0 %v5731
    %6472 = vmatpush.bf16.msra.mxu0 %v5723
    %6473 = vmatpush.bf16.msra.mxu0 %v5715
    %6474 = vmatpush.bf16.msra.mxu0 %v5707
    %6475 = vmatpush.bf16.msra.mxu0 %v5699
    %6476 = vmatmul.bf16.gmra.mxu0 %v3310
    %v6477 = vpop.f32.mrf.mxu0
    %v6478 = vadd.f32 %v6465, %v6477
    %v6479 = vpop.f32.mrf.mxu0
    %6480 = vdwg.mxu0
    %6481 = vmatpush.bf16.msra.mxu0 %v5819
    %6482 = vmatpush.bf16.msra.mxu0 %v5811
    %6483 = vmatpush.bf16.msra.mxu0 %v5803
    %6484 = vmatpush.bf16.msra.mxu0 %v5795
    %6485 = vmatpush.bf16.msra.mxu0 %v5787
    %6486 = vmatpush.bf16.msra.mxu0 %v5779
    %6487 = vmatpush.bf16.msra.mxu0 %v5771
    %6488 = vmatpush.bf16.msra.mxu0 %v5763
    %6489 = vmatmul.bf16.gmra.mxu0 %v3311
    %v6490 = vpop.f32.mrf.mxu0
    %v6491 = vadd.f32 %v6478, %v6490
    %v6492 = vpop.f32.mrf.mxu0
    %6493 = vdwg.mxu0
    %6494 = vmatpush.bf16.msra.mxu0 %v5883
    %6495 = vmatpush.bf16.msra.mxu0 %v5875
    %6496 = vmatpush.bf16.msra.mxu0 %v5867
    %6497 = vmatpush.bf16.msra.mxu0 %v5859
    %6498 = vmatpush.bf16.msra.mxu0 %v5851
    %6499 = vmatpush.bf16.msra.mxu0 %v5843
    %6500 = vmatpush.bf16.msra.mxu0 %v5835
    %6501 = vmatpush.bf16.msra.mxu0 %v5827
    %6502 = vmatmul.bf16.gmra.mxu0 %v3312
    %v6503 = vpop.f32.mrf.mxu0
    %v6504 = vadd.f32 %v6491, %v6503
    %v6505 = vpop.f32.mrf.mxu0
    %6506 = vdwg.mxu0
    %6507 = vmatpush.bf16.msra.mxu0 %v5436
    %6508 = vmatpush.bf16.msra.mxu0 %v5428
    %6509 = vmatpush.bf16.msra.mxu0 %v5420
    %6510 = vmatpush.bf16.msra.mxu0 %v5412
    %6511 = vmatpush.bf16.msra.mxu0 %v5404
    %6512 = vmatpush.bf16.msra.mxu0 %v5396
    %6513 = vmatpush.bf16.msra.mxu0 %v5388
    %6514 = vmatpush.bf16.msra.mxu0 %v5380
    %6515 = vmatmul.bf16.gmra.mxu0 %v3305
    %v6516 = vpop.f32.mrf.mxu0
    %v6517 = vadd.f32 %v3828, %v6516
    %v6518 = vpop.f32.mrf.mxu0
    %6519 = vdwg.mxu0
    %6520 = vmatpush.bf16.msra.mxu0 %v5500
    %6521 = vmatpush.bf16.msra.mxu0 %v5492
    %6522 = vmatpush.bf16.msra.mxu0 %v5484
    %6523 = vmatpush.bf16.msra.mxu0 %v5476
    %6524 = vmatpush.bf16.msra.mxu0 %v5468
    %6525 = vmatpush.bf16.msra.mxu0 %v5460
    %6526 = vmatpush.bf16.msra.mxu0 %v5452
    %6527 = vmatpush.bf16.msra.mxu0 %v5444
    %6528 = vmatmul.bf16.gmra.mxu0 %v3306
    %v6529 = vpop.f32.mrf.mxu0
    %v6530 = vadd.f32 %v6517, %v6529
    %v6531 = vpop.f32.mrf.mxu0
    %6532 = vdwg.mxu0
    %6533 = vmatpush.bf16.msra.mxu0 %v5564
    %6534 = vmatpush.bf16.msra.mxu0 %v5556
    %6535 = vmatpush.bf16.msra.mxu0 %v5548
    %6536 = vmatpush.bf16.msra.mxu0 %v5540
    %6537 = vmatpush.bf16.msra.mxu0 %v5532
    %6538 = vmatpush.bf16.msra.mxu0 %v5524
    %6539 = vmatpush.bf16.msra.mxu0 %v5516
    %6540 = vmatpush.bf16.msra.mxu0 %v5508
    %6541 = vmatmul.bf16.gmra.mxu0 %v3307
    %v6542 = vpop.f32.mrf.mxu0
    %v6543 = vadd.f32 %v6530, %v6542
    %v6544 = vpop.f32.mrf.mxu0
    %6545 = vdwg.mxu0
    %6546 = vmatpush.bf16.msra.mxu0 %v5628
    %6547 = vmatpush.bf16.msra.mxu0 %v5620
    %6548 = vmatpush.bf16.msra.mxu0 %v5612
    %6549 = vmatpush.bf16.msra.mxu0 %v5604
    %6550 = vmatpush.bf16.msra.mxu0 %v5596
    %6551 = vmatpush.bf16.msra.mxu0 %v5588
    %6552 = vmatpush.bf16.msra.mxu0 %v5580
    %6553 = vmatpush.bf16.msra.mxu0 %v5572
    %6554 = vmatmul.bf16.gmra.mxu0 %v3308
    %v6555 = vpop.f32.mrf.mxu0
    %v6556 = vadd.f32 %v6543, %v6555
    %v6557 = vpop.f32.mrf.mxu0
    %6558 = vdwg.mxu0
    %6559 = vmatpush.bf16.msra.mxu0 %v5692
    %6560 = vmatpush.bf16.msra.mxu0 %v5684
    %6561 = vmatpush.bf16.msra.mxu0 %v5676
    %6562 = vmatpush.bf16.msra.mxu0 %v5668
    %6563 = vmatpush.bf16.msra.mxu0 %v5660
    %6564 = vmatpush.bf16.msra.mxu0 %v5652
    %6565 = vmatpush.bf16.msra.mxu0 %v5644
    %6566 = vmatpush.bf16.msra.mxu0 %v5636
    %6567 = vmatmul.bf16.gmra.mxu0 %v3309
    %v6568 = vpop.f32.mrf.mxu0
    %v6569 = vadd.f32 %v6556, %v6568
    %v6570 = vpop.f32.mrf.mxu0
    %6571 = vdwg.mxu0
    %6572 = vmatpush.bf16.msra.mxu0 %v5756
    %6573 = vmatpush.bf16.msra.mxu0 %v5748
    %6574 = vmatpush.bf16.msra.mxu0 %v5740
    %6575 = vmatpush.bf16.msra.mxu0 %v5732
    %6576 = vmatpush.bf16.msra.mxu0 %v5724
    %6577 = vmatpush.bf16.msra.mxu0 %v5716
    %6578 = vmatpush.bf16.msra.mxu0 %v5708
    %6579 = vmatpush.bf16.msra.mxu0 %v5700
    %6580 = vmatmul.bf16.gmra.mxu0 %v3310
    %v6581 = vpop.f32.mrf.mxu0
    %v6582 = vadd.f32 %v6569, %v6581
    %v6583 = vpop.f32.mrf.mxu0
    %6584 = vdwg.mxu0
    %6585 = vmatpush.bf16.msra.mxu0 %v5820
    %6586 = vmatpush.bf16.msra.mxu0 %v5812
    %6587 = vmatpush.bf16.msra.mxu0 %v5804
    %6588 = vmatpush.bf16.msra.mxu0 %v5796
    %6589 = vmatpush.bf16.msra.mxu0 %v5788
    %6590 = vmatpush.bf16.msra.mxu0 %v5780
    %6591 = vmatpush.bf16.msra.mxu0 %v5772
    %6592 = vmatpush.bf16.msra.mxu0 %v5764
    %6593 = vmatmul.bf16.gmra.mxu0 %v3311
    %v6594 = vpop.f32.mrf.mxu0
    %v6595 = vadd.f32 %v6582, %v6594
    %v6596 = vpop.f32.mrf.mxu0
    %6597 = vdwg.mxu0
    %6598 = vmatpush.bf16.msra.mxu0 %v5884
    %6599 = vmatpush.bf16.msra.mxu0 %v5876
    %6600 = vmatpush.bf16.msra.mxu0 %v5868
    %6601 = vmatpush.bf16.msra.mxu0 %v5860
    %6602 = vmatpush.bf16.msra.mxu0 %v5852
    %6603 = vmatpush.bf16.msra.mxu0 %v5844
    %6604 = vmatpush.bf16.msra.mxu0 %v5836
    %6605 = vmatpush.bf16.msra.mxu0 %v5828
    %6606 = vmatmul.bf16.gmra.mxu0 %v3312
    %v6607 = vpop.f32.mrf.mxu0
    %v6608 = vadd.f32 %v6595, %v6607
    %v6609 = vpop.f32.mrf.mxu0
    %6610 = vdwg.mxu0
    %6611 = vmatpush.bf16.msra.mxu0 %v5437
    %6612 = vmatpush.bf16.msra.mxu0 %v5429
    %6613 = vmatpush.bf16.msra.mxu0 %v5421
    %6614 = vmatpush.bf16.msra.mxu0 %v5413
    %6615 = vmatpush.bf16.msra.mxu0 %v5405
    %6616 = vmatpush.bf16.msra.mxu0 %v5397
    %6617 = vmatpush.bf16.msra.mxu0 %v5389
    %6618 = vmatpush.bf16.msra.mxu0 %v5381
    %6619 = vmatmul.bf16.gmra.mxu0 %v3305
    %v6620 = vpop.f32.mrf.mxu0
    %v6621 = vadd.f32 %v3829, %v6620
    %v6622 = vpop.f32.mrf.mxu0
    %6623 = vdwg.mxu0
    %6624 = vmatpush.bf16.msra.mxu0 %v5501
    %6625 = vmatpush.bf16.msra.mxu0 %v5493
    %6626 = vmatpush.bf16.msra.mxu0 %v5485
    %6627 = vmatpush.bf16.msra.mxu0 %v5477
    %6628 = vmatpush.bf16.msra.mxu0 %v5469
    %6629 = vmatpush.bf16.msra.mxu0 %v5461
    %6630 = vmatpush.bf16.msra.mxu0 %v5453
    %6631 = vmatpush.bf16.msra.mxu0 %v5445
    %6632 = vmatmul.bf16.gmra.mxu0 %v3306
    %v6633 = vpop.f32.mrf.mxu0
    %v6634 = vadd.f32 %v6621, %v6633
    %v6635 = vpop.f32.mrf.mxu0
    %6636 = vdwg.mxu0
    %6637 = vmatpush.bf16.msra.mxu0 %v5565
    %6638 = vmatpush.bf16.msra.mxu0 %v5557
    %6639 = vmatpush.bf16.msra.mxu0 %v5549
    %6640 = vmatpush.bf16.msra.mxu0 %v5541
    %6641 = vmatpush.bf16.msra.mxu0 %v5533
    %6642 = vmatpush.bf16.msra.mxu0 %v5525
    %6643 = vmatpush.bf16.msra.mxu0 %v5517
    %6644 = vmatpush.bf16.msra.mxu0 %v5509
    %6645 = vmatmul.bf16.gmra.mxu0 %v3307
    %v6646 = vpop.f32.mrf.mxu0
    %v6647 = vadd.f32 %v6634, %v6646
    %v6648 = vpop.f32.mrf.mxu0
    %6649 = vdwg.mxu0
    %6650 = vmatpush.bf16.msra.mxu0 %v5629
    %6651 = vmatpush.bf16.msra.mxu0 %v5621
    %6652 = vmatpush.bf16.msra.mxu0 %v5613
    %6653 = vmatpush.bf16.msra.mxu0 %v5605
    %6654 = vmatpush.bf16.msra.mxu0 %v5597
    %6655 = vmatpush.bf16.msra.mxu0 %v5589
    %6656 = vmatpush.bf16.msra.mxu0 %v5581
    %6657 = vmatpush.bf16.msra.mxu0 %v5573
    %6658 = vmatmul.bf16.gmra.mxu0 %v3308
    %v6659 = vpop.f32.mrf.mxu0
    %v6660 = vadd.f32 %v6647, %v6659
    %v6661 = vpop.f32.mrf.mxu0
    %6662 = vdwg.mxu0
    %6663 = vmatpush.bf16.msra.mxu0 %v5693
    %6664 = vmatpush.bf16.msra.mxu0 %v5685
    %6665 = vmatpush.bf16.msra.mxu0 %v5677
    %6666 = vmatpush.bf16.msra.mxu0 %v5669
    %6667 = vmatpush.bf16.msra.mxu0 %v5661
    %6668 = vmatpush.bf16.msra.mxu0 %v5653
    %6669 = vmatpush.bf16.msra.mxu0 %v5645
    %6670 = vmatpush.bf16.msra.mxu0 %v5637
    %6671 = vmatmul.bf16.gmra.mxu0 %v3309
    %v6672 = vpop.f32.mrf.mxu0
    %v6673 = vadd.f32 %v6660, %v6672
    %v6674 = vpop.f32.mrf.mxu0
    %6675 = vdwg.mxu0
    %6676 = vmatpush.bf16.msra.mxu0 %v5757
    %6677 = vmatpush.bf16.msra.mxu0 %v5749
    %6678 = vmatpush.bf16.msra.mxu0 %v5741
    %6679 = vmatpush.bf16.msra.mxu0 %v5733
    %6680 = vmatpush.bf16.msra.mxu0 %v5725
    %6681 = vmatpush.bf16.msra.mxu0 %v5717
    %6682 = vmatpush.bf16.msra.mxu0 %v5709
    %6683 = vmatpush.bf16.msra.mxu0 %v5701
    %6684 = vmatmul.bf16.gmra.mxu0 %v3310
    %v6685 = vpop.f32.mrf.mxu0
    %v6686 = vadd.f32 %v6673, %v6685
    %v6687 = vpop.f32.mrf.mxu0
    %6688 = vdwg.mxu0
    %6689 = vmatpush.bf16.msra.mxu0 %v5821
    %6690 = vmatpush.bf16.msra.mxu0 %v5813
    %6691 = vmatpush.bf16.msra.mxu0 %v5805
    %6692 = vmatpush.bf16.msra.mxu0 %v5797
    %6693 = vmatpush.bf16.msra.mxu0 %v5789
    %6694 = vmatpush.bf16.msra.mxu0 %v5781
    %6695 = vmatpush.bf16.msra.mxu0 %v5773
    %6696 = vmatpush.bf16.msra.mxu0 %v5765
    %6697 = vmatmul.bf16.gmra.mxu0 %v3311
    %v6698 = vpop.f32.mrf.mxu0
    %v6699 = vadd.f32 %v6686, %v6698
    %v6700 = vpop.f32.mrf.mxu0
    %6701 = vdwg.mxu0
    %6702 = vmatpush.bf16.msra.mxu0 %v5885
    %6703 = vmatpush.bf16.msra.mxu0 %v5877
    %6704 = vmatpush.bf16.msra.mxu0 %v5869
    %6705 = vmatpush.bf16.msra.mxu0 %v5861
    %6706 = vmatpush.bf16.msra.mxu0 %v5853
    %6707 = vmatpush.bf16.msra.mxu0 %v5845
    %6708 = vmatpush.bf16.msra.mxu0 %v5837
    %6709 = vmatpush.bf16.msra.mxu0 %v5829
    %6710 = vmatmul.bf16.gmra.mxu0 %v3312
    %v6711 = vpop.f32.mrf.mxu0
    %v6712 = vadd.f32 %v6699, %v6711
    %v6713 = vpop.f32.mrf.mxu0
    %6714 = vdwg.mxu0
    %6715 = vmatpush.bf16.msra.mxu0 %v5438
    %6716 = vmatpush.bf16.msra.mxu0 %v5430
    %6717 = vmatpush.bf16.msra.mxu0 %v5422
    %6718 = vmatpush.bf16.msra.mxu0 %v5414
    %6719 = vmatpush.bf16.msra.mxu0 %v5406
    %6720 = vmatpush.bf16.msra.mxu0 %v5398
    %6721 = vmatpush.bf16.msra.mxu0 %v5390
    %6722 = vmatpush.bf16.msra.mxu0 %v5382
    %6723 = vmatmul.bf16.gmra.mxu0 %v3305
    %v6724 = vpop.f32.mrf.mxu0
    %v6725 = vadd.f32 %v3830, %v6724
    %v6726 = vpop.f32.mrf.mxu0
    %6727 = vdwg.mxu0
    %6728 = vmatpush.bf16.msra.mxu0 %v5502
    %6729 = vmatpush.bf16.msra.mxu0 %v5494
    %6730 = vmatpush.bf16.msra.mxu0 %v5486
    %6731 = vmatpush.bf16.msra.mxu0 %v5478
    %6732 = vmatpush.bf16.msra.mxu0 %v5470
    %6733 = vmatpush.bf16.msra.mxu0 %v5462
    %6734 = vmatpush.bf16.msra.mxu0 %v5454
    %6735 = vmatpush.bf16.msra.mxu0 %v5446
    %6736 = vmatmul.bf16.gmra.mxu0 %v3306
    %v6737 = vpop.f32.mrf.mxu0
    %v6738 = vadd.f32 %v6725, %v6737
    %v6739 = vpop.f32.mrf.mxu0
    %6740 = vdwg.mxu0
    %6741 = vmatpush.bf16.msra.mxu0 %v5566
    %6742 = vmatpush.bf16.msra.mxu0 %v5558
    %6743 = vmatpush.bf16.msra.mxu0 %v5550
    %6744 = vmatpush.bf16.msra.mxu0 %v5542
    %6745 = vmatpush.bf16.msra.mxu0 %v5534
    %6746 = vmatpush.bf16.msra.mxu0 %v5526
    %6747 = vmatpush.bf16.msra.mxu0 %v5518
    %6748 = vmatpush.bf16.msra.mxu0 %v5510
    %6749 = vmatmul.bf16.gmra.mxu0 %v3307
    %v6750 = vpop.f32.mrf.mxu0
    %v6751 = vadd.f32 %v6738, %v6750
    %v6752 = vpop.f32.mrf.mxu0
    %6753 = vdwg.mxu0
    %6754 = vmatpush.bf16.msra.mxu0 %v5630
    %6755 = vmatpush.bf16.msra.mxu0 %v5622
    %6756 = vmatpush.bf16.msra.mxu0 %v5614
    %6757 = vmatpush.bf16.msra.mxu0 %v5606
    %6758 = vmatpush.bf16.msra.mxu0 %v5598
    %6759 = vmatpush.bf16.msra.mxu0 %v5590
    %6760 = vmatpush.bf16.msra.mxu0 %v5582
    %6761 = vmatpush.bf16.msra.mxu0 %v5574
    %6762 = vmatmul.bf16.gmra.mxu0 %v3308
    %v6763 = vpop.f32.mrf.mxu0
    %v6764 = vadd.f32 %v6751, %v6763
    %v6765 = vpop.f32.mrf.mxu0
    %6766 = vdwg.mxu0
    %6767 = vmatpush.bf16.msra.mxu0 %v5694
    %6768 = vmatpush.bf16.msra.mxu0 %v5686
    %6769 = vmatpush.bf16.msra.mxu0 %v5678
    %6770 = vmatpush.bf16.msra.mxu0 %v5670
    %6771 = vmatpush.bf16.msra.mxu0 %v5662
    %6772 = vmatpush.bf16.msra.mxu0 %v5654
    %6773 = vmatpush.bf16.msra.mxu0 %v5646
    %6774 = vmatpush.bf16.msra.mxu0 %v5638
    %6775 = vmatmul.bf16.gmra.mxu0 %v3309
    %v6776 = vpop.f32.mrf.mxu0
    %v6777 = vadd.f32 %v6764, %v6776
    %v6778 = vpop.f32.mrf.mxu0
    %6779 = vdwg.mxu0
    %6780 = vmatpush.bf16.msra.mxu0 %v5758
    %6781 = vmatpush.bf16.msra.mxu0 %v5750
    %6782 = vmatpush.bf16.msra.mxu0 %v5742
    %6783 = vmatpush.bf16.msra.mxu0 %v5734
    %6784 = vmatpush.bf16.msra.mxu0 %v5726
    %6785 = vmatpush.bf16.msra.mxu0 %v5718
    %6786 = vmatpush.bf16.msra.mxu0 %v5710
    %6787 = vmatpush.bf16.msra.mxu0 %v5702
    %6788 = vmatmul.bf16.gmra.mxu0 %v3310
    %v6789 = vpop.f32.mrf.mxu0
    %v6790 = vadd.f32 %v6777, %v6789
    %v6791 = vpop.f32.mrf.mxu0
    %6792 = vdwg.mxu0
    %6793 = vmatpush.bf16.msra.mxu0 %v5822
    %6794 = vmatpush.bf16.msra.mxu0 %v5814
    %6795 = vmatpush.bf16.msra.mxu0 %v5806
    %6796 = vmatpush.bf16.msra.mxu0 %v5798
    %6797 = vmatpush.bf16.msra.mxu0 %v5790
    %6798 = vmatpush.bf16.msra.mxu0 %v5782
    %6799 = vmatpush.bf16.msra.mxu0 %v5774
    %6800 = vmatpush.bf16.msra.mxu0 %v5766
    %6801 = vmatmul.bf16.gmra.mxu0 %v3311
    %v6802 = vpop.f32.mrf.mxu0
    %v6803 = vadd.f32 %v6790, %v6802
    %v6804 = vpop.f32.mrf.mxu0
    %6805 = vdwg.mxu0
    %6806 = vmatpush.bf16.msra.mxu0 %v5886
    %6807 = vmatpush.bf16.msra.mxu0 %v5878
    %6808 = vmatpush.bf16.msra.mxu0 %v5870
    %6809 = vmatpush.bf16.msra.mxu0 %v5862
    %6810 = vmatpush.bf16.msra.mxu0 %v5854
    %6811 = vmatpush.bf16.msra.mxu0 %v5846
    %6812 = vmatpush.bf16.msra.mxu0 %v5838
    %6813 = vmatpush.bf16.msra.mxu0 %v5830
    %6814 = vmatmul.bf16.gmra.mxu0 %v3312
    %v6815 = vpop.f32.mrf.mxu0
    %v6816 = vadd.f32 %v6803, %v6815
    %v6817 = vpop.f32.mrf.mxu0
    %6818 = vdwg.mxu0
    %6819 = vmatpush.bf16.msra.mxu0 %v5439
    %6820 = vmatpush.bf16.msra.mxu0 %v5431
    %6821 = vmatpush.bf16.msra.mxu0 %v5423
    %6822 = vmatpush.bf16.msra.mxu0 %v5415
    %6823 = vmatpush.bf16.msra.mxu0 %v5407
    %6824 = vmatpush.bf16.msra.mxu0 %v5399
    %6825 = vmatpush.bf16.msra.mxu0 %v5391
    %6826 = vmatpush.bf16.msra.mxu0 %v5383
    %6827 = vmatmul.bf16.gmra.mxu0 %v3305
    %v6828 = vpop.f32.mrf.mxu0
    %v6829 = vadd.f32 %v3831, %v6828
    %v6830 = vpop.f32.mrf.mxu0
    %6831 = vdwg.mxu0
    %6832 = vmatpush.bf16.msra.mxu0 %v5503
    %6833 = vmatpush.bf16.msra.mxu0 %v5495
    %6834 = vmatpush.bf16.msra.mxu0 %v5487
    %6835 = vmatpush.bf16.msra.mxu0 %v5479
    %6836 = vmatpush.bf16.msra.mxu0 %v5471
    %6837 = vmatpush.bf16.msra.mxu0 %v5463
    %6838 = vmatpush.bf16.msra.mxu0 %v5455
    %6839 = vmatpush.bf16.msra.mxu0 %v5447
    %6840 = vmatmul.bf16.gmra.mxu0 %v3306
    %v6841 = vpop.f32.mrf.mxu0
    %v6842 = vadd.f32 %v6829, %v6841
    %v6843 = vpop.f32.mrf.mxu0
    %6844 = vdwg.mxu0
    %6845 = vmatpush.bf16.msra.mxu0 %v5567
    %6846 = vmatpush.bf16.msra.mxu0 %v5559
    %6847 = vmatpush.bf16.msra.mxu0 %v5551
    %6848 = vmatpush.bf16.msra.mxu0 %v5543
    %6849 = vmatpush.bf16.msra.mxu0 %v5535
    %6850 = vmatpush.bf16.msra.mxu0 %v5527
    %6851 = vmatpush.bf16.msra.mxu0 %v5519
    %6852 = vmatpush.bf16.msra.mxu0 %v5511
    %6853 = vmatmul.bf16.gmra.mxu0 %v3307
    %v6854 = vpop.f32.mrf.mxu0
    %v6855 = vadd.f32 %v6842, %v6854
    %v6856 = vpop.f32.mrf.mxu0
    %6857 = vdwg.mxu0
    %6858 = vmatpush.bf16.msra.mxu0 %v5631
    %6859 = vmatpush.bf16.msra.mxu0 %v5623
    %6860 = vmatpush.bf16.msra.mxu0 %v5615
    %6861 = vmatpush.bf16.msra.mxu0 %v5607
    %6862 = vmatpush.bf16.msra.mxu0 %v5599
    %6863 = vmatpush.bf16.msra.mxu0 %v5591
    %6864 = vmatpush.bf16.msra.mxu0 %v5583
    %6865 = vmatpush.bf16.msra.mxu0 %v5575
    %6866 = vmatmul.bf16.gmra.mxu0 %v3308
    %v6867 = vpop.f32.mrf.mxu0
    %v6868 = vadd.f32 %v6855, %v6867
    %v6869 = vpop.f32.mrf.mxu0
    %6870 = vdwg.mxu0
    %6871 = vmatpush.bf16.msra.mxu0 %v5695
    %6872 = vmatpush.bf16.msra.mxu0 %v5687
    %6873 = vmatpush.bf16.msra.mxu0 %v5679
    %6874 = vmatpush.bf16.msra.mxu0 %v5671
    %6875 = vmatpush.bf16.msra.mxu0 %v5663
    %6876 = vmatpush.bf16.msra.mxu0 %v5655
    %6877 = vmatpush.bf16.msra.mxu0 %v5647
    %6878 = vmatpush.bf16.msra.mxu0 %v5639
    %6879 = vmatmul.bf16.gmra.mxu0 %v3309
    %v6880 = vpop.f32.mrf.mxu0
    %v6881 = vadd.f32 %v6868, %v6880
    %v6882 = vpop.f32.mrf.mxu0
    %6883 = vdwg.mxu0
    %6884 = vmatpush.bf16.msra.mxu0 %v5759
    %6885 = vmatpush.bf16.msra.mxu0 %v5751
    %6886 = vmatpush.bf16.msra.mxu0 %v5743
    %6887 = vmatpush.bf16.msra.mxu0 %v5735
    %6888 = vmatpush.bf16.msra.mxu0 %v5727
    %6889 = vmatpush.bf16.msra.mxu0 %v5719
    %6890 = vmatpush.bf16.msra.mxu0 %v5711
    %6891 = vmatpush.bf16.msra.mxu0 %v5703
    %6892 = vmatmul.bf16.gmra.mxu0 %v3310
    %v6893 = vpop.f32.mrf.mxu0
    %v6894 = vadd.f32 %v6881, %v6893
    %v6895 = vpop.f32.mrf.mxu0
    %6896 = vdwg.mxu0
    %6897 = vmatpush.bf16.msra.mxu0 %v5823
    %6898 = vmatpush.bf16.msra.mxu0 %v5815
    %6899 = vmatpush.bf16.msra.mxu0 %v5807
    %6900 = vmatpush.bf16.msra.mxu0 %v5799
    %6901 = vmatpush.bf16.msra.mxu0 %v5791
    %6902 = vmatpush.bf16.msra.mxu0 %v5783
    %6903 = vmatpush.bf16.msra.mxu0 %v5775
    %6904 = vmatpush.bf16.msra.mxu0 %v5767
    %6905 = vmatmul.bf16.gmra.mxu0 %v3311
    %v6906 = vpop.f32.mrf.mxu0
    %v6907 = vadd.f32 %v6894, %v6906
    %v6908 = vpop.f32.mrf.mxu0
    %6909 = vdwg.mxu0
    %6910 = vmatpush.bf16.msra.mxu0 %v5887
    %6911 = vmatpush.bf16.msra.mxu0 %v5879
    %6912 = vmatpush.bf16.msra.mxu0 %v5871
    %6913 = vmatpush.bf16.msra.mxu0 %v5863
    %6914 = vmatpush.bf16.msra.mxu0 %v5855
    %6915 = vmatpush.bf16.msra.mxu0 %v5847
    %6916 = vmatpush.bf16.msra.mxu0 %v5839
    %6917 = vmatpush.bf16.msra.mxu0 %v5831
    %6918 = vmatmul.bf16.gmra.mxu0 %v3312
    %v6919 = vpop.f32.mrf.mxu0
    %v6920 = vadd.f32 %v6907, %v6919
    %v6921 = vpop.f32.mrf.mxu0
    %6922 = vdwg.mxu0
    %6923 = vmatpush.bf16.msra.mxu0 %v5440
    %6924 = vmatpush.bf16.msra.mxu0 %v5432
    %6925 = vmatpush.bf16.msra.mxu0 %v5424
    %6926 = vmatpush.bf16.msra.mxu0 %v5416
    %6927 = vmatpush.bf16.msra.mxu0 %v5408
    %6928 = vmatpush.bf16.msra.mxu0 %v5400
    %6929 = vmatpush.bf16.msra.mxu0 %v5392
    %6930 = vmatpush.bf16.msra.mxu0 %v5384
    %6931 = vmatmul.bf16.gmra.mxu0 %v3305
    %v6932 = vpop.f32.mrf.mxu0
    %v6933 = vadd.f32 %v3832, %v6932
    %v6934 = vpop.f32.mrf.mxu0
    %6935 = vdwg.mxu0
    %6936 = vmatpush.bf16.msra.mxu0 %v5504
    %6937 = vmatpush.bf16.msra.mxu0 %v5496
    %6938 = vmatpush.bf16.msra.mxu0 %v5488
    %6939 = vmatpush.bf16.msra.mxu0 %v5480
    %6940 = vmatpush.bf16.msra.mxu0 %v5472
    %6941 = vmatpush.bf16.msra.mxu0 %v5464
    %6942 = vmatpush.bf16.msra.mxu0 %v5456
    %6943 = vmatpush.bf16.msra.mxu0 %v5448
    %6944 = vmatmul.bf16.gmra.mxu0 %v3306
    %v6945 = vpop.f32.mrf.mxu0
    %v6946 = vadd.f32 %v6933, %v6945
    %v6947 = vpop.f32.mrf.mxu0
    %6948 = vdwg.mxu0
    %6949 = vmatpush.bf16.msra.mxu0 %v5568
    %6950 = vmatpush.bf16.msra.mxu0 %v5560
    %6951 = vmatpush.bf16.msra.mxu0 %v5552
    %6952 = vmatpush.bf16.msra.mxu0 %v5544
    %6953 = vmatpush.bf16.msra.mxu0 %v5536
    %6954 = vmatpush.bf16.msra.mxu0 %v5528
    %6955 = vmatpush.bf16.msra.mxu0 %v5520
    %6956 = vmatpush.bf16.msra.mxu0 %v5512
    %6957 = vmatmul.bf16.gmra.mxu0 %v3307
    %v6958 = vpop.f32.mrf.mxu0
    %v6959 = vadd.f32 %v6946, %v6958
    %v6960 = vpop.f32.mrf.mxu0
    %6961 = vdwg.mxu0
    %6962 = vmatpush.bf16.msra.mxu0 %v5632
    %6963 = vmatpush.bf16.msra.mxu0 %v5624
    %6964 = vmatpush.bf16.msra.mxu0 %v5616
    %6965 = vmatpush.bf16.msra.mxu0 %v5608
    %6966 = vmatpush.bf16.msra.mxu0 %v5600
    %6967 = vmatpush.bf16.msra.mxu0 %v5592
    %6968 = vmatpush.bf16.msra.mxu0 %v5584
    %6969 = vmatpush.bf16.msra.mxu0 %v5576
    %6970 = vmatmul.bf16.gmra.mxu0 %v3308
    %v6971 = vpop.f32.mrf.mxu0
    %v6972 = vadd.f32 %v6959, %v6971
    %v6973 = vpop.f32.mrf.mxu0
    %6974 = vdwg.mxu0
    %6975 = vmatpush.bf16.msra.mxu0 %v5696
    %6976 = vmatpush.bf16.msra.mxu0 %v5688
    %6977 = vmatpush.bf16.msra.mxu0 %v5680
    %6978 = vmatpush.bf16.msra.mxu0 %v5672
    %6979 = vmatpush.bf16.msra.mxu0 %v5664
    %6980 = vmatpush.bf16.msra.mxu0 %v5656
    %6981 = vmatpush.bf16.msra.mxu0 %v5648
    %6982 = vmatpush.bf16.msra.mxu0 %v5640
    %6983 = vmatmul.bf16.gmra.mxu0 %v3309
    %v6984 = vpop.f32.mrf.mxu0
    %v6985 = vadd.f32 %v6972, %v6984
    %v6986 = vpop.f32.mrf.mxu0
    %6987 = vdwg.mxu0
    %6988 = vmatpush.bf16.msra.mxu0 %v5760
    %6989 = vmatpush.bf16.msra.mxu0 %v5752
    %6990 = vmatpush.bf16.msra.mxu0 %v5744
    %6991 = vmatpush.bf16.msra.mxu0 %v5736
    %6992 = vmatpush.bf16.msra.mxu0 %v5728
    %6993 = vmatpush.bf16.msra.mxu0 %v5720
    %6994 = vmatpush.bf16.msra.mxu0 %v5712
    %6995 = vmatpush.bf16.msra.mxu0 %v5704
    %6996 = vmatmul.bf16.gmra.mxu0 %v3310
    %v6997 = vpop.f32.mrf.mxu0
    %v6998 = vadd.f32 %v6985, %v6997
    %v6999 = vpop.f32.mrf.mxu0
    %7000 = vdwg.mxu0
    %7001 = vmatpush.bf16.msra.mxu0 %v5824
    %7002 = vmatpush.bf16.msra.mxu0 %v5816
    %7003 = vmatpush.bf16.msra.mxu0 %v5808
    %7004 = vmatpush.bf16.msra.mxu0 %v5800
    %7005 = vmatpush.bf16.msra.mxu0 %v5792
    %7006 = vmatpush.bf16.msra.mxu0 %v5784
    %7007 = vmatpush.bf16.msra.mxu0 %v5776
    %7008 = vmatpush.bf16.msra.mxu0 %v5768
    %7009 = vmatmul.bf16.gmra.mxu0 %v3311
    %v7010 = vpop.f32.mrf.mxu0
    %v7011 = vadd.f32 %v6998, %v7010
    %v7012 = vpop.f32.mrf.mxu0
    %7013 = vdwg.mxu0
    %7014 = vmatpush.bf16.msra.mxu0 %v5888
    %7015 = vmatpush.bf16.msra.mxu0 %v5880
    %7016 = vmatpush.bf16.msra.mxu0 %v5872
    %7017 = vmatpush.bf16.msra.mxu0 %v5864
    %7018 = vmatpush.bf16.msra.mxu0 %v5856
    %7019 = vmatpush.bf16.msra.mxu0 %v5848
    %7020 = vmatpush.bf16.msra.mxu0 %v5840
    %7021 = vmatpush.bf16.msra.mxu0 %v5832
    %7022 = vmatmul.bf16.gmra.mxu0 %v3312
    %v7023 = vpop.f32.mrf.mxu0
    %v7024 = vadd.f32 %v7011, %v7023
    %v7025 = vpop.f32.mrf.mxu0
    %7026 = vdwg.mxu0
    %7027 = vmatpush.bf16.msra.mxu0 %v5441
    %7028 = vmatpush.bf16.msra.mxu0 %v5433
    %7029 = vmatpush.bf16.msra.mxu0 %v5425
    %7030 = vmatpush.bf16.msra.mxu0 %v5417
    %7031 = vmatpush.bf16.msra.mxu0 %v5409
    %7032 = vmatpush.bf16.msra.mxu0 %v5401
    %7033 = vmatpush.bf16.msra.mxu0 %v5393
    %7034 = vmatpush.bf16.msra.mxu0 %v5385
    %7035 = vmatmul.bf16.gmra.mxu0 %v3305
    %v7036 = vpop.f32.mrf.mxu0
    %v7037 = vadd.f32 %v3833, %v7036
    %v7038 = vpop.f32.mrf.mxu0
    %7039 = vdwg.mxu0
    %7040 = vmatpush.bf16.msra.mxu0 %v5505
    %7041 = vmatpush.bf16.msra.mxu0 %v5497
    %7042 = vmatpush.bf16.msra.mxu0 %v5489
    %7043 = vmatpush.bf16.msra.mxu0 %v5481
    %7044 = vmatpush.bf16.msra.mxu0 %v5473
    %7045 = vmatpush.bf16.msra.mxu0 %v5465
    %7046 = vmatpush.bf16.msra.mxu0 %v5457
    %7047 = vmatpush.bf16.msra.mxu0 %v5449
    %7048 = vmatmul.bf16.gmra.mxu0 %v3306
    %v7049 = vpop.f32.mrf.mxu0
    %v7050 = vadd.f32 %v7037, %v7049
    %v7051 = vpop.f32.mrf.mxu0
    %7052 = vdwg.mxu0
    %7053 = vmatpush.bf16.msra.mxu0 %v5569
    %7054 = vmatpush.bf16.msra.mxu0 %v5561
    %7055 = vmatpush.bf16.msra.mxu0 %v5553
    %7056 = vmatpush.bf16.msra.mxu0 %v5545
    %7057 = vmatpush.bf16.msra.mxu0 %v5537
    %7058 = vmatpush.bf16.msra.mxu0 %v5529
    %7059 = vmatpush.bf16.msra.mxu0 %v5521
    %7060 = vmatpush.bf16.msra.mxu0 %v5513
    %7061 = vmatmul.bf16.gmra.mxu0 %v3307
    %v7062 = vpop.f32.mrf.mxu0
    %v7063 = vadd.f32 %v7050, %v7062
    %v7064 = vpop.f32.mrf.mxu0
    %7065 = vdwg.mxu0
    %7066 = vmatpush.bf16.msra.mxu0 %v5633
    %7067 = vmatpush.bf16.msra.mxu0 %v5625
    %7068 = vmatpush.bf16.msra.mxu0 %v5617
    %7069 = vmatpush.bf16.msra.mxu0 %v5609
    %7070 = vmatpush.bf16.msra.mxu0 %v5601
    %7071 = vmatpush.bf16.msra.mxu0 %v5593
    %7072 = vmatpush.bf16.msra.mxu0 %v5585
    %7073 = vmatpush.bf16.msra.mxu0 %v5577
    %7074 = vmatmul.bf16.gmra.mxu0 %v3308
    %v7075 = vpop.f32.mrf.mxu0
    %v7076 = vadd.f32 %v7063, %v7075
    %v7077 = vpop.f32.mrf.mxu0
    %7078 = vdwg.mxu0
    %7079 = vmatpush.bf16.msra.mxu0 %v5697
    %7080 = vmatpush.bf16.msra.mxu0 %v5689
    %7081 = vmatpush.bf16.msra.mxu0 %v5681
    %7082 = vmatpush.bf16.msra.mxu0 %v5673
    %7083 = vmatpush.bf16.msra.mxu0 %v5665
    %7084 = vmatpush.bf16.msra.mxu0 %v5657
    %7085 = vmatpush.bf16.msra.mxu0 %v5649
    %7086 = vmatpush.bf16.msra.mxu0 %v5641
    %7087 = vmatmul.bf16.gmra.mxu0 %v3309
    %v7088 = vpop.f32.mrf.mxu0
    %v7089 = vadd.f32 %v7076, %v7088
    %v7090 = vpop.f32.mrf.mxu0
    %7091 = vdwg.mxu0
    %7092 = vmatpush.bf16.msra.mxu0 %v5761
    %7093 = vmatpush.bf16.msra.mxu0 %v5753
    %7094 = vmatpush.bf16.msra.mxu0 %v5745
    %7095 = vmatpush.bf16.msra.mxu0 %v5737
    %7096 = vmatpush.bf16.msra.mxu0 %v5729
    %7097 = vmatpush.bf16.msra.mxu0 %v5721
    %7098 = vmatpush.bf16.msra.mxu0 %v5713
    %7099 = vmatpush.bf16.msra.mxu0 %v5705
    %7100 = vmatmul.bf16.gmra.mxu0 %v3310
    %v7101 = vpop.f32.mrf.mxu0
    %v7102 = vadd.f32 %v7089, %v7101
    %v7103 = vpop.f32.mrf.mxu0
    %7104 = vdwg.mxu0
    %7105 = vmatpush.bf16.msra.mxu0 %v5825
    %7106 = vmatpush.bf16.msra.mxu0 %v5817
    %7107 = vmatpush.bf16.msra.mxu0 %v5809
    %7108 = vmatpush.bf16.msra.mxu0 %v5801
    %7109 = vmatpush.bf16.msra.mxu0 %v5793
    %7110 = vmatpush.bf16.msra.mxu0 %v5785
    %7111 = vmatpush.bf16.msra.mxu0 %v5777
    %7112 = vmatpush.bf16.msra.mxu0 %v5769
    %7113 = vmatmul.bf16.gmra.mxu0 %v3311
    %v7114 = vpop.f32.mrf.mxu0
    %v7115 = vadd.f32 %v7102, %v7114
    %v7116 = vpop.f32.mrf.mxu0
    %7117 = vdwg.mxu0
    %7118 = vmatpush.bf16.msra.mxu0 %v5889
    %7119 = vmatpush.bf16.msra.mxu0 %v5881
    %7120 = vmatpush.bf16.msra.mxu0 %v5873
    %7121 = vmatpush.bf16.msra.mxu0 %v5865
    %7122 = vmatpush.bf16.msra.mxu0 %v5857
    %7123 = vmatpush.bf16.msra.mxu0 %v5849
    %7124 = vmatpush.bf16.msra.mxu0 %v5841
    %7125 = vmatpush.bf16.msra.mxu0 %v5833
    %7126 = vmatmul.bf16.gmra.mxu0 %v3312
    %v7127 = vpop.f32.mrf.mxu0
    %v7128 = vadd.f32 %v7115, %v7127
    %v7129 = vpop.f32.mrf.mxu0
    %7130 = vdwg.mxu0
    %7131 = vmatpush.bf16.msra.mxu0 %v5442
    %7132 = vmatpush.bf16.msra.mxu0 %v5434
    %7133 = vmatpush.bf16.msra.mxu0 %v5426
    %7134 = vmatpush.bf16.msra.mxu0 %v5418
    %7135 = vmatpush.bf16.msra.mxu0 %v5410
    %7136 = vmatpush.bf16.msra.mxu0 %v5402
    %7137 = vmatpush.bf16.msra.mxu0 %v5394
    %7138 = vmatpush.bf16.msra.mxu0 %v5386
    %7139 = vmatmul.bf16.gmra.mxu0 %v3305
    %v7140 = vpop.f32.mrf.mxu0
    %v7141 = vadd.f32 %v3834, %v7140
    %v7142 = vpop.f32.mrf.mxu0
    %7143 = vdwg.mxu0
    %7144 = vmatpush.bf16.msra.mxu0 %v5506
    %7145 = vmatpush.bf16.msra.mxu0 %v5498
    %7146 = vmatpush.bf16.msra.mxu0 %v5490
    %7147 = vmatpush.bf16.msra.mxu0 %v5482
    %7148 = vmatpush.bf16.msra.mxu0 %v5474
    %7149 = vmatpush.bf16.msra.mxu0 %v5466
    %7150 = vmatpush.bf16.msra.mxu0 %v5458
    %7151 = vmatpush.bf16.msra.mxu0 %v5450
    %7152 = vmatmul.bf16.gmra.mxu0 %v3306
    %v7153 = vpop.f32.mrf.mxu0
    %v7154 = vadd.f32 %v7141, %v7153
    %v7155 = vpop.f32.mrf.mxu0
    %7156 = vdwg.mxu0
    %7157 = vmatpush.bf16.msra.mxu0 %v5570
    %7158 = vmatpush.bf16.msra.mxu0 %v5562
    %7159 = vmatpush.bf16.msra.mxu0 %v5554
    %7160 = vmatpush.bf16.msra.mxu0 %v5546
    %7161 = vmatpush.bf16.msra.mxu0 %v5538
    %7162 = vmatpush.bf16.msra.mxu0 %v5530
    %7163 = vmatpush.bf16.msra.mxu0 %v5522
    %7164 = vmatpush.bf16.msra.mxu0 %v5514
    %7165 = vmatmul.bf16.gmra.mxu0 %v3307
    %v7166 = vpop.f32.mrf.mxu0
    %v7167 = vadd.f32 %v7154, %v7166
    %v7168 = vpop.f32.mrf.mxu0
    %7169 = vdwg.mxu0
    %7170 = vmatpush.bf16.msra.mxu0 %v5634
    %7171 = vmatpush.bf16.msra.mxu0 %v5626
    %7172 = vmatpush.bf16.msra.mxu0 %v5618
    %7173 = vmatpush.bf16.msra.mxu0 %v5610
    %7174 = vmatpush.bf16.msra.mxu0 %v5602
    %7175 = vmatpush.bf16.msra.mxu0 %v5594
    %7176 = vmatpush.bf16.msra.mxu0 %v5586
    %7177 = vmatpush.bf16.msra.mxu0 %v5578
    %7178 = vmatmul.bf16.gmra.mxu0 %v3308
    %v7179 = vpop.f32.mrf.mxu0
    %v7180 = vadd.f32 %v7167, %v7179
    %v7181 = vpop.f32.mrf.mxu0
    %7182 = vdwg.mxu0
    %7183 = vmatpush.bf16.msra.mxu0 %v5698
    %7184 = vmatpush.bf16.msra.mxu0 %v5690
    %7185 = vmatpush.bf16.msra.mxu0 %v5682
    %7186 = vmatpush.bf16.msra.mxu0 %v5674
    %7187 = vmatpush.bf16.msra.mxu0 %v5666
    %7188 = vmatpush.bf16.msra.mxu0 %v5658
    %7189 = vmatpush.bf16.msra.mxu0 %v5650
    %7190 = vmatpush.bf16.msra.mxu0 %v5642
    %7191 = vmatmul.bf16.gmra.mxu0 %v3309
    %v7192 = vpop.f32.mrf.mxu0
    %v7193 = vadd.f32 %v7180, %v7192
    %v7194 = vpop.f32.mrf.mxu0
    %7195 = vdwg.mxu0
    %7196 = vmatpush.bf16.msra.mxu0 %v5762
    %7197 = vmatpush.bf16.msra.mxu0 %v5754
    %7198 = vmatpush.bf16.msra.mxu0 %v5746
    %7199 = vmatpush.bf16.msra.mxu0 %v5738
    %7200 = vmatpush.bf16.msra.mxu0 %v5730
    %7201 = vmatpush.bf16.msra.mxu0 %v5722
    %7202 = vmatpush.bf16.msra.mxu0 %v5714
    %7203 = vmatpush.bf16.msra.mxu0 %v5706
    %7204 = vmatmul.bf16.gmra.mxu0 %v3310
    %v7205 = vpop.f32.mrf.mxu0
    %v7206 = vadd.f32 %v7193, %v7205
    %v7207 = vpop.f32.mrf.mxu0
    %7208 = vdwg.mxu0
    %7209 = vmatpush.bf16.msra.mxu0 %v5826
    %7210 = vmatpush.bf16.msra.mxu0 %v5818
    %7211 = vmatpush.bf16.msra.mxu0 %v5810
    %7212 = vmatpush.bf16.msra.mxu0 %v5802
    %7213 = vmatpush.bf16.msra.mxu0 %v5794
    %7214 = vmatpush.bf16.msra.mxu0 %v5786
    %7215 = vmatpush.bf16.msra.mxu0 %v5778
    %7216 = vmatpush.bf16.msra.mxu0 %v5770
    %7217 = vmatmul.bf16.gmra.mxu0 %v3311
    %v7218 = vpop.f32.mrf.mxu0
    %v7219 = vadd.f32 %v7206, %v7218
    %v7220 = vpop.f32.mrf.mxu0
    %7221 = vdwg.mxu0
    %7222 = vmatpush.bf16.msra.mxu0 %v5890
    %7223 = vmatpush.bf16.msra.mxu0 %v5882
    %7224 = vmatpush.bf16.msra.mxu0 %v5874
    %7225 = vmatpush.bf16.msra.mxu0 %v5866
    %7226 = vmatpush.bf16.msra.mxu0 %v5858
    %7227 = vmatpush.bf16.msra.mxu0 %v5850
    %7228 = vmatpush.bf16.msra.mxu0 %v5842
    %7229 = vmatpush.bf16.msra.mxu0 %v5834
    %7230 = vmatmul.bf16.gmra.mxu0 %v3312
    %v7231 = vpop.f32.mrf.mxu0
    %v7232 = vadd.f32 %v7219, %v7231
    %v7233 = vpop.f32.mrf.mxu0
    %7234 = vdwg.mxu0
    %v7235 = vmax.f32 %v6504, 0.0
    %v7236 = vmax.f32 %v6608, 0.0
    %v7237 = vmax.f32 %v6712, 0.0
    %v7238 = vmax.f32 %v6816, 0.0
    %v7239 = vmax.f32 %v6920, 0.0
    %v7240 = vmax.f32 %v7024, 0.0
    %v7241 = vmax.f32 %v7128, 0.0
    %v7242 = vmax.f32 %v7232, 0.0
    %v7243 = vld [vmem:[#allocation3] sm:$0xff]
    %v7244 = vld [vmem:[#allocation3 + $0x8] sm:$0xff]
    %v7245 = vld [vmem:[#allocation3 + $0x10] sm:$0xff]
    %v7246 = vld [vmem:[#allocation3 + $0x18] sm:$0xff]
    %v7247 = vld [vmem:[#allocation13] sm:$0xf]
    %v7249 = vperm.slane %v7247, 0
    %v7250 = vperm.slane %v7247, 1
    %v7251 = vperm.slane %v7247, 2
    %v7252 = vperm.slane %v7247, 3
    %v7257 = vmul.f32 %v7243, %v7249
    %v7258 = vmul.f32 %v7244, %v7250
    %v7259 = vmul.f32 %v7245, %v7251
    %v7260 = vmul.f32 %v7246, %v7252
    %v7261 = vadd.f32 %v7257, %v7258
    %v7262 = vadd.f32 %v7261, %v7259
    %vm7263 = vcmask 130048
    %v7264 = vsel %vm7263, %v7260, 0.0
    %v7265 = vadd.f32 %v7262, %v7264
    %7266 = vadd.xlane.f32.xlu0 %v7265
    %v7267 = vpop.xlane.xlu0 %7266
    %v7268 = vld [vmem:[#allocation11] sm:$0xff]
    %v7270 = vperm.slane %v7268, 0
    %v7271 = vperm.slane %v7268, 1
    %v7272 = vperm.slane %v7268, 2
    %v7273 = vperm.slane %v7268, 3
    %v7274 = vperm.slane %v7268, 4
    %v7275 = vperm.slane %v7268, 5
    %v7276 = vperm.slane %v7268, 6
    %v7277 = vperm.slane %v7268, 7
    %v7286 = vmul.f32 %v7235, %v7270
    %v7287 = vmul.f32 %v7236, %v7271
    %v7288 = vmul.f32 %v7237, %v7272
    %v7289 = vmul.f32 %v7238, %v7273
    %v7290 = vmul.f32 %v7239, %v7274
    %v7291 = vmul.f32 %v7240, %v7275
    %v7292 = vmul.f32 %v7241, %v7276
    %v7293 = vmul.f32 %v7242, %v7277
    %v7294 = vadd.f32 %v7286, %v7287
    %v7295 = vadd.f32 %v7294, %v7288
    %v7296 = vadd.f32 %v7295, %v7289
    %v7297 = vadd.f32 %v7296, %v7290
    %v7298 = vadd.f32 %v7297, %v7291
    %v7299 = vadd.f32 %v7298, %v7292
    %v7300 = vadd.f32 %v7299, %v7293
    %7301 = vadd.xlane.f32.xlu0 %v7300
    %v7302 = vpop.xlane.xlu0 %7301
    %v7303 = vadd.f32 %v7267, %v7302
    %s7304 = sld [smem:[#allocation2]]
    %v7305 = vstv %s7304
    %v7306 = vadd.f32 %v7303, %v7305
    %v7307 = vmax.f32 %v7306, 0.0
    %vm7308 = vcmask 7168
    %7309 = vst.msk [vmem:[%s9] sm:$0xff] %vm7308, %v7307
    // Predicated region
    $region66: #{all_neumf_input_forward.1} parent=1 // pred_check
      _
    $region67: #{all_neumf_input_forward.1} parent=1 // pred_check_branch
      %7311 = sbr.rel (0) target = $region69
    $region68: #{all_neumf_input_forward.1} parent=1 // pred_region
      _
    $region69: #{all_neumf_input_forward.1} parent=1 // pred_fallthru
      _
    // Predicated region
    $region70: #{all_neumf_input_forward.1} parent=1 // pred_check
      _
    $region71: #{all_neumf_input_forward.1} parent=1 // pred_check_branch
      %7313 = sbr.rel (0) target = $region73
    $region72: #{all_neumf_input_forward.1} parent=1 // pred_region
      _
    $region73: #{all_neumf_input_forward.1} parent=1 // pred_fallthru
      _
    %7314 = vsyncpa [#allocation4], 1
    %7315 = vsyncpa [#allocation6], 1
    %7316 = vsyncpa [#allocation9], 1
    %7317 = vsyncpa [#allocation12], 1

</llo_original>
